<compile_context>
chip_gen: v7x
topology: tpu7x:2x2x1
jax: 0.10.0
libtpu: 0.0.40
codegen_flags: <defaults>
</compile_context>

<pallas_src>
import functools

import jax
import jax.numpy as jnp
from jax.experimental import pallas as pl
from jax.experimental.pallas import tpu as pltpu


def _round_up(x, m):
    return ((x + m - 1) // m) * m


def _postnet_fused_kernel(x_ref, *refs, num_layers, ksize, pad, seq_len,
                          t_tile, widths, c_outs, acts, compute_dtype):
    """Fused PostNet stack for one (batch, time-tile) grid point.

    x_ref : (widths[0], C0_pad)  bf16, halo-extended time window
    refs  : [w_0, scale_0, bias_0, ..., w_{L-1}, scale_{L-1}, bias_{L-1}, o_ref]
            w_l     : (K, Cin_pad[l], Cout_pad[l])  bf16
            scale_l : (1, Cout_pad[l])              f32 (folded BN scale)
            bias_l  : (1, Cout_pad[l])              f32 (conv bias + BN bias)
    o_ref : (t_tile, Cout_pad[-1])
    """
    o_ref = refs[3 * num_layers]
    t0 = pl.program_id(1) * t_tile            # global start of this tile's output

    cur = x_ref[...]                          # (widths[0], C0) bf16
    for l in range(num_layers):               # L is small & static -> unrolled
        w_ref = refs[3 * l]
        s_ref = refs[3 * l + 1]
        b_ref = refs[3 * l + 2]
        w_out = widths[l + 1]
        c_out = c_outs[l]

        # K-tap "same" conv as K shifted (W, C_in) @ (C_in, C_out) MXU matmuls,
        # accumulated in f32.  (im2col single-matmul form is a v5e-only micro-opt.)
        acc = jnp.zeros((w_out, c_out), jnp.float32)
        for k in range(ksize):
            xk = jax.lax.slice_in_dim(cur, k, k + w_out, axis=0)
            acc = acc + jnp.dot(xk, w_ref[k],
                                preferred_element_type=jnp.float32)

        # Folded BatchNorm + activation epilogue (f32).
        y = acc * s_ref[0, :] + b_ref[0, :]
        if acts[l] == "tanh":
            y = jnp.tanh(y)
        elif acts[l] == "relu":
            y = jnp.maximum(y, 0.0)

        if l == num_layers - 1:
            o_ref[...] = y.astype(o_ref.dtype)
        else:
            # Zero rows whose global time index is outside [0, seq_len):
            # reproduces each Conv1d's fresh zero ("same") padding exactly.
            g = (t0 - (num_layers - 1 - l) * pad
                 + jax.lax.broadcasted_iota(jnp.int32, (w_out, c_out), 0))
            y = jnp.where((g >= 0) & (g < seq_len), y, 0.0)
            cur = y.astype(compute_dtype)     # bf16 intermediate, stays on-chip


def postnet_forward(x, params, *, t_tile=256, compute_dtype=jnp.bfloat16):
    """x: (B, T, n_mel) -> (B, T, n_mel); whole PostNet in one pallas_call."""
    B, T, _ = x.shape
    L = len(params)
    K = params[0]["w"].shape[0]
    pad = (K - 1) // 2
    total_pad = L * pad

    # --- time tiling ---
    t_tile = min(t_tile, _round_up(T, 8))
    t_tile = _round_up(t_tile, 8)
    n_t = (T + t_tile - 1) // t_tile
    t_eff = n_t * t_tile
    win = t_tile + 2 * total_pad              # halo-extended input window

    # --- channel padding to 128 lanes ---
    c_dims = [params[0]["w"].shape[1]] + [p["w"].shape[2] for p in params]
    c_pad = [_round_up(c, 128) for c in c_dims]

    # --- pad input: zeros outside [0, T) in time, zero channels, bf16 ---
    x_p = jnp.pad(
        x.astype(compute_dtype),
        ((0, 0), (total_pad, total_pad + (t_eff - T)), (0, c_pad[0] - c_dims[0])))

    # Overlapping halo windows built in JAX glue so the kernel's BlockSpecs
    # stay plain, non-overlapping blocks: (B, n_t, win, C0_pad).
    windows = jnp.stack(
        [jax.lax.slice_in_dim(x_p, i * t_tile, i * t_tile + win, axis=1)
         for i in range(n_t)], axis=1)

    # --- pad & collect per-layer params (weights bf16, scale/bias f32) ---
    flat_inputs = [windows]
    in_specs = [pl.BlockSpec((None, None, win, c_pad[0]),
                             lambda b, t: (b, t, 0, 0))]
    acts = []
    for l, p in enumerate(params):
        c_in, c_out = p["w"].shape[1], p["w"].shape[2]
        ci_p, co_p = c_pad[l], c_pad[l + 1]
        w_p = jnp.pad(p["w"].astype(compute_dtype),
                      ((0, 0), (0, ci_p - c_in), (0, co_p - c_out)))
        s_p = jnp.pad(p["scale"].astype(jnp.float32),
                      (0, co_p - c_out)).reshape(1, co_p)
        b_p = jnp.pad(p["bias"].astype(jnp.float32),
                      (0, co_p - c_out)).reshape(1, co_p)
        flat_inputs += [w_p, s_p, b_p]
        in_specs += [
            pl.BlockSpec((K, ci_p, co_p), lambda b, t: (0, 0, 0)),
            pl.BlockSpec((1, co_p), lambda b, t: (0, 0)),
            pl.BlockSpec((1, co_p), lambda b, t: (0, 0)),
        ]
        acts.append(p["act"])

    widths = tuple(t_tile + 2 * (L - l) * pad for l in range(L + 1))

    kernel = functools.partial(
        _postnet_fused_kernel,
        num_layers=L, ksize=K, pad=pad, seq_len=T, t_tile=t_tile,
        widths=widths, c_outs=tuple(c_pad[1:]), acts=tuple(acts),
        compute_dtype=compute_dtype)

    # --- advisory cost estimate ---
    flops = 2 * B * n_t * sum(
        widths[l + 1] * K * c_pad[l] * c_pad[l + 1] for l in range(L))
    transcendentals = B * n_t * sum(
        widths[l + 1] * c_pad[l + 1] for l in range(L) if acts[l] == "tanh")
    bytes_accessed = (
        sum(int(a.size) * a.dtype.itemsize for a in flat_inputs)
        + B * n_t * t_tile * c_pad[-1] * x.dtype.itemsize)

    # --- VMEM budget: bf16 weights + double-buffered I/O blocks + live
    #     intermediates; clamped to [32 MiB default, 64 MiB v7x physical]. ---
    weight_bytes = sum(int(a.size) * a.dtype.itemsize for a in flat_inputs[1:])
    io_bytes = (win * c_pad[0] * jnp.dtype(compute_dtype).itemsize
                + t_tile * c_pad[-1] * x.dtype.itemsize)
    inter_bytes = sum(widths[l + 1] * c_pad[l + 1] * 4 for l in range(L))
    vmem_est = 2 * (weight_bytes + io_bytes) + 2 * inter_bytes
    vmem_limit = int(min(64 * 1024 * 1024, max(32 * 1024 * 1024, vmem_est)))

    out = pl.pallas_call(
        kernel,
        out_shape=jax.ShapeDtypeStruct((B, n_t, t_tile, c_pad[-1]), x.dtype),
        grid_spec=pltpu.PrefetchScalarGridSpec(
            num_scalar_prefetch=0,
            grid=(B, n_t),
            in_specs=in_specs,
            out_specs=pl.BlockSpec((None, None, t_tile, c_pad[-1]),
                                   lambda b, t: (b, t, 0, 0)),
        ),
        compiler_params=pltpu.CompilerParams(
            dimension_semantics=("parallel", "parallel"),
            vmem_limit_bytes=vmem_limit),
        cost_estimate=pl.CostEstimate(
            flops=flops, transcendentals=transcendentals,
            bytes_accessed=bytes_accessed),
    )(*flat_inputs)

    # (B, n_t, t_tile, C_pad) -> (B, T, n_mel)
    return out.reshape(B, t_eff, c_pad[-1])[:, :T, :c_dims[-1]]


def init_postnet_params(key, n_mel, postnet_dim, num_layers, kernel_size):
    """Deterministic synthetic parameters; BN folded into (scale, bias)."""
    eps = 1e-5
    dims = [n_mel] + [postnet_dim] * (num_layers - 1) + [n_mel]
    acts = ["tanh"] * (num_layers - 1) + ["none"]
    params = []
    for i in range(num_layers):
        c_in, c_out = dims[i], dims[i + 1]
        key, k_w, k_b, k_g, k_bt, k_m, k_v = jax.random.split(key, 7)
        w = jax.random.normal(k_w, (kernel_size, c_in, c_out), jnp.float32) * 0.1
        conv_b = jax.random.normal(k_b, (c_out,), jnp.float32) * 0.1
        gamma = 1.0 + 0.1 * jax.random.normal(k_g, (c_out,), jnp.float32)
        beta = 0.1 * jax.random.normal(k_bt, (c_out,), jnp.float32)
        run_mean = 0.1 * jax.random.normal(k_m, (c_out,), jnp.float32)
        run_var = jnp.abs(jax.random.normal(k_v, (c_out,), jnp.float32)) + 0.5
        bn_scale = gamma / jnp.sqrt(run_var + eps)
        scale = bn_scale
        bias = (conv_b - run_mean) * bn_scale + beta
        params.append(dict(w=w, scale=scale, bias=bias, act=acts[i]))
    return params


def postnet_reference(x, params, *, compute_dtype=jnp.bfloat16):
    """Pure-JAX per-layer reference with matching bf16-in / f32-accum math."""
    y = x
    for p in params:
        K = p["w"].shape[0]
        c_out = p["w"].shape[2]
        pad = (K - 1) // 2
        T = y.shape[1]
        y_c = y.astype(compute_dtype)
        w_c = p["w"].astype(compute_dtype)
        y_pad = jnp.pad(y_c, ((0, 0), (pad, pad), (0, 0)))
        acc = jnp.zeros((y.shape[0], T, c_out), jnp.float32)
        for k in range(K):
            acc = acc + jnp.einsum("btc,cd->btd", y_pad[:, k:k + T, :], w_c[k],
                                   preferred_element_type=jnp.float32)
        acc = acc * p["scale"] + p["bias"]
        if p["act"] == "tanh":
            acc = jnp.tanh(acc)
        elif p["act"] == "relu":
            acc = jnp.maximum(acc, 0.0)
        y = acc
    return y


if __name__ == "__main__":
    # Small synthetic shapes consistent with PostNet's (B, T, n_mel) interface.
    B, T = 2, 16
    n_mel, postnet_dim, num_layers, kernel_size = 16, 32, 5, 5

    key = jax.random.PRNGKey(0)
    key, k_x = jax.random.split(key)
    x = jax.random.normal(k_x, (B, T, n_mel), jnp.float32)

    params = init_postnet_params(key, n_mel, postnet_dim, num_layers, kernel_size)

    out = postnet_forward(x, params)
    out = jax.block_until_ready(out)

    ref = postnet_reference(x, params)
    assert out.shape == (B, T, n_mel)
    assert jnp.allclose(out, ref, atol=5e-3, rtol=5e-3), (
        float(jnp.max(jnp.abs(out - ref))))

    print("KERNEL_OK")
</pallas_src>

<mosaic_0001>
module attributes {stable_mosaic.version = 11 : i64} {
  func.func @_postnet_fused_kernel(%arg0: i32, %arg1: i32, %arg2: memref<1x1x36x128xbf16, #tpu.memory_space<vmem>>, %arg3: memref<5x128x128xbf16, #tpu.memory_space<vmem>>, %arg4: memref<1x128xf32, #tpu.memory_space<vmem>>, %arg5: memref<1x128xf32, #tpu.memory_space<vmem>>, %arg6: memref<5x128x128xbf16, #tpu.memory_space<vmem>>, %arg7: memref<1x128xf32, #tpu.memory_space<vmem>>, %arg8: memref<1x128xf32, #tpu.memory_space<vmem>>, %arg9: memref<5x128x128xbf16, #tpu.memory_space<vmem>>, %arg10: memref<1x128xf32, #tpu.memory_space<vmem>>, %arg11: memref<1x128xf32, #tpu.memory_space<vmem>>, %arg12: memref<5x128x128xbf16, #tpu.memory_space<vmem>>, %arg13: memref<1x128xf32, #tpu.memory_space<vmem>>, %arg14: memref<1x128xf32, #tpu.memory_space<vmem>>, %arg15: memref<5x128x128xbf16, #tpu.memory_space<vmem>>, %arg16: memref<1x128xf32, #tpu.memory_space<vmem>>, %arg17: memref<1x128xf32, #tpu.memory_space<vmem>>, %arg18: memref<1x1x16x128xf32, #tpu.memory_space<vmem>>) attributes {dimension_semantics = [#tpu.dimension_semantics<parallel>, #tpu.dimension_semantics<parallel>], iteration_bounds = array<i64: 2, 1>, scalar_prefetch = 0 : i64, scratch_operands = 0 : i64, tpu.core_type = #tpu.core_type<tc>, window_params = [{transform_indices = @transform_0, window_bounds = array<i64: 1, 1, 36, 128>}, {pipeline_mode = #tpu.pipeline_mode<synchronous>, transform_indices = @transform_1, window_bounds = array<i64: 5, 128, 128>}, {pipeline_mode = #tpu.pipeline_mode<synchronous>, transform_indices = @transform_2, window_bounds = array<i64: 1, 128>}, {pipeline_mode = #tpu.pipeline_mode<synchronous>, transform_indices = @transform_3, window_bounds = array<i64: 1, 128>}, {pipeline_mode = #tpu.pipeline_mode<synchronous>, transform_indices = @transform_4, window_bounds = array<i64: 5, 128, 128>}, {pipeline_mode = #tpu.pipeline_mode<synchronous>, transform_indices = @transform_5, window_bounds = array<i64: 1, 128>}, {pipeline_mode = #tpu.pipeline_mode<synchronous>, transform_indices = @transform_6, window_bounds = array<i64: 1, 128>}, {pipeline_mode = #tpu.pipeline_mode<synchronous>, transform_indices = @transform_7, window_bounds = array<i64: 5, 128, 128>}, {pipeline_mode = #tpu.pipeline_mode<synchronous>, transform_indices = @transform_8, window_bounds = array<i64: 1, 128>}, {pipeline_mode = #tpu.pipeline_mode<synchronous>, transform_indices = @transform_9, window_bounds = array<i64: 1, 128>}, {pipeline_mode = #tpu.pipeline_mode<synchronous>, transform_indices = @transform_10, window_bounds = array<i64: 5, 128, 128>}, {pipeline_mode = #tpu.pipeline_mode<synchronous>, transform_indices = @transform_11, window_bounds = array<i64: 1, 128>}, {pipeline_mode = #tpu.pipeline_mode<synchronous>, transform_indices = @transform_12, window_bounds = array<i64: 1, 128>}, {pipeline_mode = #tpu.pipeline_mode<synchronous>, transform_indices = @transform_13, window_bounds = array<i64: 5, 128, 128>}, {pipeline_mode = #tpu.pipeline_mode<synchronous>, transform_indices = @transform_14, window_bounds = array<i64: 1, 128>}, {pipeline_mode = #tpu.pipeline_mode<synchronous>, transform_indices = @transform_15, window_bounds = array<i64: 1, 128>}, {transform_indices = @transform_16, window_bounds = array<i64: 1, 1, 16, 128>}]} {
    %c16_i32 = arith.constant 16 : i32
    %0 = arith.muli %arg1, %c16_i32 : i32
    %c0 = arith.constant 0 : index
    %c0_0 = arith.constant 0 : index
    %c0_1 = arith.constant 0 : index
    %c0_2 = arith.constant 0 : index
    %1 = vector.load %arg2[%c0, %c0_0, %c0_1, %c0_2] : memref<1x1x36x128xbf16, #tpu.memory_space<vmem>>, vector<1x1x36x128xbf16>
    %2 = vector.shape_cast %1 : vector<1x1x36x128xbf16> to vector<36x128xbf16>
    %cst = arith.constant 0.000000e+00 : f32
    %3 = vector.broadcast %cst : f32 to vector<32x128xf32>
    %4 = vector.extract_strided_slice %2 {offsets = [0, 0], sizes = [32, 128], strides = [1, 1]} : vector<36x128xbf16> to vector<32x128xbf16>
    %c0_3 = arith.constant 0 : index
    %c0_4 = arith.constant 0 : index
    %c0_5 = arith.constant 0 : index
    %5 = vector.load %arg3[%c0_3, %c0_4, %c0_5] : memref<5x128x128xbf16, #tpu.memory_space<vmem>>, vector<1x128x128xbf16>
    %6 = vector.shape_cast %5 : vector<1x128x128xbf16> to vector<128x128xbf16>
    %cst_6 = arith.constant dense<0.000000e+00> : vector<32x128xf32>
    %7 = tpu.matmul %4, %6, %cst_6 {dimension_numbers = #tpu.dot_dimension_numbers<[1], [0], [0], [1], [0, 0, 1, 1], [], []>} : vector<32x128xbf16>, vector<128x128xbf16>, vector<32x128xf32> -> vector<32x128xf32>
    %8 = arith.addf %3, %7 : vector<32x128xf32>
    %9 = vector.extract_strided_slice %2 {offsets = [1, 0], sizes = [32, 128], strides = [1, 1]} : vector<36x128xbf16> to vector<32x128xbf16>
    %c1 = arith.constant 1 : index
    %c0_7 = arith.constant 0 : index
    %c0_8 = arith.constant 0 : index
    %10 = vector.load %arg3[%c1, %c0_7, %c0_8] : memref<5x128x128xbf16, #tpu.memory_space<vmem>>, vector<1x128x128xbf16>
    %11 = vector.shape_cast %10 : vector<1x128x128xbf16> to vector<128x128xbf16>
    %cst_9 = arith.constant dense<0.000000e+00> : vector<32x128xf32>
    %12 = tpu.matmul %9, %11, %cst_9 {dimension_numbers = #tpu.dot_dimension_numbers<[1], [0], [0], [1], [0, 0, 1, 1], [], []>} : vector<32x128xbf16>, vector<128x128xbf16>, vector<32x128xf32> -> vector<32x128xf32>
    %13 = arith.addf %8, %12 : vector<32x128xf32>
    %14 = vector.extract_strided_slice %2 {offsets = [2, 0], sizes = [32, 128], strides = [1, 1]} : vector<36x128xbf16> to vector<32x128xbf16>
    %c2 = arith.constant 2 : index
    %c0_10 = arith.constant 0 : index
    %c0_11 = arith.constant 0 : index
    %15 = vector.load %arg3[%c2, %c0_10, %c0_11] : memref<5x128x128xbf16, #tpu.memory_space<vmem>>, vector<1x128x128xbf16>
    %16 = vector.shape_cast %15 : vector<1x128x128xbf16> to vector<128x128xbf16>
    %cst_12 = arith.constant dense<0.000000e+00> : vector<32x128xf32>
    %17 = tpu.matmul %14, %16, %cst_12 {dimension_numbers = #tpu.dot_dimension_numbers<[1], [0], [0], [1], [0, 0, 1, 1], [], []>} : vector<32x128xbf16>, vector<128x128xbf16>, vector<32x128xf32> -> vector<32x128xf32>
    %18 = arith.addf %13, %17 : vector<32x128xf32>
    %19 = vector.extract_strided_slice %2 {offsets = [3, 0], sizes = [32, 128], strides = [1, 1]} : vector<36x128xbf16> to vector<32x128xbf16>
    %c3 = arith.constant 3 : index
    %c0_13 = arith.constant 0 : index
    %c0_14 = arith.constant 0 : index
    %20 = vector.load %arg3[%c3, %c0_13, %c0_14] : memref<5x128x128xbf16, #tpu.memory_space<vmem>>, vector<1x128x128xbf16>
    %21 = vector.shape_cast %20 : vector<1x128x128xbf16> to vector<128x128xbf16>
    %cst_15 = arith.constant dense<0.000000e+00> : vector<32x128xf32>
    %22 = tpu.matmul %19, %21, %cst_15 {dimension_numbers = #tpu.dot_dimension_numbers<[1], [0], [0], [1], [0, 0, 1, 1], [], []>} : vector<32x128xbf16>, vector<128x128xbf16>, vector<32x128xf32> -> vector<32x128xf32>
    %23 = arith.addf %18, %22 : vector<32x128xf32>
    %24 = vector.extract_strided_slice %2 {offsets = [4, 0], sizes = [32, 128], strides = [1, 1]} : vector<36x128xbf16> to vector<32x128xbf16>
    %c4 = arith.constant 4 : index
    %c0_16 = arith.constant 0 : index
    %c0_17 = arith.constant 0 : index
    %25 = vector.load %arg3[%c4, %c0_16, %c0_17] : memref<5x128x128xbf16, #tpu.memory_space<vmem>>, vector<1x128x128xbf16>
    %26 = vector.shape_cast %25 : vector<1x128x128xbf16> to vector<128x128xbf16>
    %cst_18 = arith.constant dense<0.000000e+00> : vector<32x128xf32>
    %27 = tpu.matmul %24, %26, %cst_18 {dimension_numbers = #tpu.dot_dimension_numbers<[1], [0], [0], [1], [0, 0, 1, 1], [], []>} : vector<32x128xbf16>, vector<128x128xbf16>, vector<32x128xf32> -> vector<32x128xf32>
    %28 = arith.addf %23, %27 : vector<32x128xf32>
    %c0_19 = arith.constant 0 : index
    %c0_20 = arith.constant 0 : index
    %29 = vector.load %arg4[%c0_19, %c0_20] : memref<1x128xf32, #tpu.memory_space<vmem>>, vector<1x128xf32>
    %30 = vector.shape_cast %29 : vector<1x128xf32> to vector<128xf32>
    %31 = vector.shape_cast %30 : vector<128xf32> to vector<1x128xf32>
    %32 = vector.broadcast %31 : vector<1x128xf32> to vector<32x128xf32>
    %33 = arith.mulf %28, %32 : vector<32x128xf32>
    %c0_21 = arith.constant 0 : index
    %c0_22 = arith.constant 0 : index
    %34 = vector.load %arg5[%c0_21, %c0_22] : memref<1x128xf32, #tpu.memory_space<vmem>>, vector<1x128xf32>
    %35 = vector.shape_cast %34 : vector<1x128xf32> to vector<128xf32>
    %36 = vector.shape_cast %35 : vector<128xf32> to vector<1x128xf32>
    %37 = vector.broadcast %36 : vector<1x128xf32> to vector<32x128xf32>
    %38 = arith.addf %33, %37 : vector<32x128xf32>
    %39 = math.tanh %38 : vector<32x128xf32>
    %c8_i32 = arith.constant 8 : i32
    %40 = arith.subi %0, %c8_i32 : i32
    %41 = tpu.iota {dimensions = array<i32: 0>} : vector<32x128xi32>
    %42 = vector.broadcast %40 : i32 to vector<32x128xi32>
    %43 = arith.addi %42, %41 : vector<32x128xi32>
    %c0_i32 = arith.constant 0 : i32
    %44 = vector.broadcast %c0_i32 : i32 to vector<32x128xi32>
    %45 = arith.cmpi sge, %43, %44 : vector<32x128xi32>
    %c16_i32_23 = arith.constant 16 : i32
    %46 = vector.broadcast %c16_i32_23 : i32 to vector<32x128xi32>
    %47 = arith.cmpi slt, %43, %46 : vector<32x128xi32>
    %48 = arith.andi %45, %47 : vector<32x128xi1>
    %cst_24 = arith.constant 0.000000e+00 : f32
    %49 = vector.broadcast %cst_24 : f32 to vector<32x128xf32>
    %50 = arith.select %48, %39, %49 : vector<32x128xi1>, vector<32x128xf32>
    %51 = arith.truncf %50 : vector<32x128xf32> to vector<32x128xbf16>
    %cst_25 = arith.constant 0.000000e+00 : f32
    %52 = vector.broadcast %cst_25 : f32 to vector<28x128xf32>
    %53 = vector.extract_strided_slice %51 {offsets = [0, 0], sizes = [28, 128], strides = [1, 1]} : vector<32x128xbf16> to vector<28x128xbf16>
    %c0_26 = arith.constant 0 : index
    %c0_27 = arith.constant 0 : index
    %c0_28 = arith.constant 0 : index
    %54 = vector.load %arg6[%c0_26, %c0_27, %c0_28] : memref<5x128x128xbf16, #tpu.memory_space<vmem>>, vector<1x128x128xbf16>
    %55 = vector.shape_cast %54 : vector<1x128x128xbf16> to vector<128x128xbf16>
    %cst_29 = arith.constant dense<0.000000e+00> : vector<28x128xf32>
    %56 = tpu.matmul %53, %55, %cst_29 {dimension_numbers = #tpu.dot_dimension_numbers<[1], [0], [0], [1], [0, 0, 1, 1], [], []>} : vector<28x128xbf16>, vector<128x128xbf16>, vector<28x128xf32> -> vector<28x128xf32>
    %57 = arith.addf %52, %56 : vector<28x128xf32>
    %58 = vector.extract_strided_slice %51 {offsets = [1, 0], sizes = [28, 128], strides = [1, 1]} : vector<32x128xbf16> to vector<28x128xbf16>
    %c1_30 = arith.constant 1 : index
    %c0_31 = arith.constant 0 : index
    %c0_32 = arith.constant 0 : index
    %59 = vector.load %arg6[%c1_30, %c0_31, %c0_32] : memref<5x128x128xbf16, #tpu.memory_space<vmem>>, vector<1x128x128xbf16>
    %60 = vector.shape_cast %59 : vector<1x128x128xbf16> to vector<128x128xbf16>
    %cst_33 = arith.constant dense<0.000000e+00> : vector<28x128xf32>
    %61 = tpu.matmul %58, %60, %cst_33 {dimension_numbers = #tpu.dot_dimension_numbers<[1], [0], [0], [1], [0, 0, 1, 1], [], []>} : vector<28x128xbf16>, vector<128x128xbf16>, vector<28x128xf32> -> vector<28x128xf32>
    %62 = arith.addf %57, %61 : vector<28x128xf32>
    %63 = vector.extract_strided_slice %51 {offsets = [2, 0], sizes = [28, 128], strides = [1, 1]} : vector<32x128xbf16> to vector<28x128xbf16>
    %c2_34 = arith.constant 2 : index
    %c0_35 = arith.constant 0 : index
    %c0_36 = arith.constant 0 : index
    %64 = vector.load %arg6[%c2_34, %c0_35, %c0_36] : memref<5x128x128xbf16, #tpu.memory_space<vmem>>, vector<1x128x128xbf16>
    %65 = vector.shape_cast %64 : vector<1x128x128xbf16> to vector<128x128xbf16>
    %cst_37 = arith.constant dense<0.000000e+00> : vector<28x128xf32>
    %66 = tpu.matmul %63, %65, %cst_37 {dimension_numbers = #tpu.dot_dimension_numbers<[1], [0], [0], [1], [0, 0, 1, 1], [], []>} : vector<28x128xbf16>, vector<128x128xbf16>, vector<28x128xf32> -> vector<28x128xf32>
    %67 = arith.addf %62, %66 : vector<28x128xf32>
    %68 = vector.extract_strided_slice %51 {offsets = [3, 0], sizes = [28, 128], strides = [1, 1]} : vector<32x128xbf16> to vector<28x128xbf16>
    %c3_38 = arith.constant 3 : index
    %c0_39 = arith.constant 0 : index
    %c0_40 = arith.constant 0 : index
    %69 = vector.load %arg6[%c3_38, %c0_39, %c0_40] : memref<5x128x128xbf16, #tpu.memory_space<vmem>>, vector<1x128x128xbf16>
    %70 = vector.shape_cast %69 : vector<1x128x128xbf16> to vector<128x128xbf16>
    %cst_41 = arith.constant dense<0.000000e+00> : vector<28x128xf32>
    %71 = tpu.matmul %68, %70, %cst_41 {dimension_numbers = #tpu.dot_dimension_numbers<[1], [0], [0], [1], [0, 0, 1, 1], [], []>} : vector<28x128xbf16>, vector<128x128xbf16>, vector<28x128xf32> -> vector<28x128xf32>
    %72 = arith.addf %67, %71 : vector<28x128xf32>
    %73 = vector.extract_strided_slice %51 {offsets = [4, 0], sizes = [28, 128], strides = [1, 1]} : vector<32x128xbf16> to vector<28x128xbf16>
    %c4_42 = arith.constant 4 : index
    %c0_43 = arith.constant 0 : index
    %c0_44 = arith.constant 0 : index
    %74 = vector.load %arg6[%c4_42, %c0_43, %c0_44] : memref<5x128x128xbf16, #tpu.memory_space<vmem>>, vector<1x128x128xbf16>
    %75 = vector.shape_cast %74 : vector<1x128x128xbf16> to vector<128x128xbf16>
    %cst_45 = arith.constant dense<0.000000e+00> : vector<28x128xf32>
    %76 = tpu.matmul %73, %75, %cst_45 {dimension_numbers = #tpu.dot_dimension_numbers<[1], [0], [0], [1], [0, 0, 1, 1], [], []>} : vector<28x128xbf16>, vector<128x128xbf16>, vector<28x128xf32> -> vector<28x128xf32>
    %77 = arith.addf %72, %76 : vector<28x128xf32>
    %c0_46 = arith.constant 0 : index
    %c0_47 = arith.constant 0 : index
    %78 = vector.load %arg7[%c0_46, %c0_47] : memref<1x128xf32, #tpu.memory_space<vmem>>, vector<1x128xf32>
    %79 = vector.shape_cast %78 : vector<1x128xf32> to vector<128xf32>
    %80 = vector.shape_cast %79 : vector<128xf32> to vector<1x128xf32>
    %81 = vector.broadcast %80 : vector<1x128xf32> to vector<28x128xf32>
    %82 = arith.mulf %77, %81 : vector<28x128xf32>
    %c0_48 = arith.constant 0 : index
    %c0_49 = arith.constant 0 : index
    %83 = vector.load %arg8[%c0_48, %c0_49] : memref<1x128xf32, #tpu.memory_space<vmem>>, vector<1x128xf32>
    %84 = vector.shape_cast %83 : vector<1x128xf32> to vector<128xf32>
    %85 = vector.shape_cast %84 : vector<128xf32> to vector<1x128xf32>
    %86 = vector.broadcast %85 : vector<1x128xf32> to vector<28x128xf32>
    %87 = arith.addf %82, %86 : vector<28x128xf32>
    %88 = math.tanh %87 : vector<28x128xf32>
    %c6_i32 = arith.constant 6 : i32
    %89 = arith.subi %0, %c6_i32 : i32
    %90 = tpu.iota {dimensions = array<i32: 0>} : vector<28x128xi32>
    %91 = vector.broadcast %89 : i32 to vector<28x128xi32>
    %92 = arith.addi %91, %90 : vector<28x128xi32>
    %c0_i32_50 = arith.constant 0 : i32
    %93 = vector.broadcast %c0_i32_50 : i32 to vector<28x128xi32>
    %94 = arith.cmpi sge, %92, %93 : vector<28x128xi32>
    %c16_i32_51 = arith.constant 16 : i32
    %95 = vector.broadcast %c16_i32_51 : i32 to vector<28x128xi32>
    %96 = arith.cmpi slt, %92, %95 : vector<28x128xi32>
    %97 = arith.andi %94, %96 : vector<28x128xi1>
    %cst_52 = arith.constant 0.000000e+00 : f32
    %98 = vector.broadcast %cst_52 : f32 to vector<28x128xf32>
    %99 = arith.select %97, %88, %98 : vector<28x128xi1>, vector<28x128xf32>
    %100 = arith.truncf %99 : vector<28x128xf32> to vector<28x128xbf16>
    %cst_53 = arith.constant 0.000000e+00 : f32
    %101 = vector.broadcast %cst_53 : f32 to vector<24x128xf32>
    %102 = vector.extract_strided_slice %100 {offsets = [0, 0], sizes = [24, 128], strides = [1, 1]} : vector<28x128xbf16> to vector<24x128xbf16>
    %c0_54 = arith.constant 0 : index
    %c0_55 = arith.constant 0 : index
    %c0_56 = arith.constant 0 : index
    %103 = vector.load %arg9[%c0_54, %c0_55, %c0_56] : memref<5x128x128xbf16, #tpu.memory_space<vmem>>, vector<1x128x128xbf16>
    %104 = vector.shape_cast %103 : vector<1x128x128xbf16> to vector<128x128xbf16>
    %cst_57 = arith.constant dense<0.000000e+00> : vector<24x128xf32>
    %105 = tpu.matmul %102, %104, %cst_57 {dimension_numbers = #tpu.dot_dimension_numbers<[1], [0], [0], [1], [0, 0, 1, 1], [], []>} : vector<24x128xbf16>, vector<128x128xbf16>, vector<24x128xf32> -> vector<24x128xf32>
    %106 = arith.addf %101, %105 : vector<24x128xf32>
    %107 = vector.extract_strided_slice %100 {offsets = [1, 0], sizes = [24, 128], strides = [1, 1]} : vector<28x128xbf16> to vector<24x128xbf16>
    %c1_58 = arith.constant 1 : index
    %c0_59 = arith.constant 0 : index
    %c0_60 = arith.constant 0 : index
    %108 = vector.load %arg9[%c1_58, %c0_59, %c0_60] : memref<5x128x128xbf16, #tpu.memory_space<vmem>>, vector<1x128x128xbf16>
    %109 = vector.shape_cast %108 : vector<1x128x128xbf16> to vector<128x128xbf16>
    %cst_61 = arith.constant dense<0.000000e+00> : vector<24x128xf32>
    %110 = tpu.matmul %107, %109, %cst_61 {dimension_numbers = #tpu.dot_dimension_numbers<[1], [0], [0], [1], [0, 0, 1, 1], [], []>} : vector<24x128xbf16>, vector<128x128xbf16>, vector<24x128xf32> -> vector<24x128xf32>
    %111 = arith.addf %106, %110 : vector<24x128xf32>
    %112 = vector.extract_strided_slice %100 {offsets = [2, 0], sizes = [24, 128], strides = [1, 1]} : vector<28x128xbf16> to vector<24x128xbf16>
    %c2_62 = arith.constant 2 : index
    %c0_63 = arith.constant 0 : index
    %c0_64 = arith.constant 0 : index
    %113 = vector.load %arg9[%c2_62, %c0_63, %c0_64] : memref<5x128x128xbf16, #tpu.memory_space<vmem>>, vector<1x128x128xbf16>
    %114 = vector.shape_cast %113 : vector<1x128x128xbf16> to vector<128x128xbf16>
    %cst_65 = arith.constant dense<0.000000e+00> : vector<24x128xf32>
    %115 = tpu.matmul %112, %114, %cst_65 {dimension_numbers = #tpu.dot_dimension_numbers<[1], [0], [0], [1], [0, 0, 1, 1], [], []>} : vector<24x128xbf16>, vector<128x128xbf16>, vector<24x128xf32> -> vector<24x128xf32>
    %116 = arith.addf %111, %115 : vector<24x128xf32>
    %117 = vector.extract_strided_slice %100 {offsets = [3, 0], sizes = [24, 128], strides = [1, 1]} : vector<28x128xbf16> to vector<24x128xbf16>
    %c3_66 = arith.constant 3 : index
    %c0_67 = arith.constant 0 : index
    %c0_68 = arith.constant 0 : index
    %118 = vector.load %arg9[%c3_66, %c0_67, %c0_68] : memref<5x128x128xbf16, #tpu.memory_space<vmem>>, vector<1x128x128xbf16>
    %119 = vector.shape_cast %118 : vector<1x128x128xbf16> to vector<128x128xbf16>
    %cst_69 = arith.constant dense<0.000000e+00> : vector<24x128xf32>
    %120 = tpu.matmul %117, %119, %cst_69 {dimension_numbers = #tpu.dot_dimension_numbers<[1], [0], [0], [1], [0, 0, 1, 1], [], []>} : vector<24x128xbf16>, vector<128x128xbf16>, vector<24x128xf32> -> vector<24x128xf32>
    %121 = arith.addf %116, %120 : vector<24x128xf32>
    %122 = vector.extract_strided_slice %100 {offsets = [4, 0], sizes = [24, 128], strides = [1, 1]} : vector<28x128xbf16> to vector<24x128xbf16>
    %c4_70 = arith.constant 4 : index
    %c0_71 = arith.constant 0 : index
    %c0_72 = arith.constant 0 : index
    %123 = vector.load %arg9[%c4_70, %c0_71, %c0_72] : memref<5x128x128xbf16, #tpu.memory_space<vmem>>, vector<1x128x128xbf16>
    %124 = vector.shape_cast %123 : vector<1x128x128xbf16> to vector<128x128xbf16>
    %cst_73 = arith.constant dense<0.000000e+00> : vector<24x128xf32>
    %125 = tpu.matmul %122, %124, %cst_73 {dimension_numbers = #tpu.dot_dimension_numbers<[1], [0], [0], [1], [0, 0, 1, 1], [], []>} : vector<24x128xbf16>, vector<128x128xbf16>, vector<24x128xf32> -> vector<24x128xf32>
    %126 = arith.addf %121, %125 : vector<24x128xf32>
    %c0_74 = arith.constant 0 : index
    %c0_75 = arith.constant 0 : index
    %127 = vector.load %arg10[%c0_74, %c0_75] : memref<1x128xf32, #tpu.memory_space<vmem>>, vector<1x128xf32>
    %128 = vector.shape_cast %127 : vector<1x128xf32> to vector<128xf32>
    %129 = vector.shape_cast %128 : vector<128xf32> to vector<1x128xf32>
    %130 = vector.broadcast %129 : vector<1x128xf32> to vector<24x128xf32>
    %131 = arith.mulf %126, %130 : vector<24x128xf32>
    %c0_76 = arith.constant 0 : index
    %c0_77 = arith.constant 0 : index
    %132 = vector.load %arg11[%c0_76, %c0_77] : memref<1x128xf32, #tpu.memory_space<vmem>>, vector<1x128xf32>
    %133 = vector.shape_cast %132 : vector<1x128xf32> to vector<128xf32>
    %134 = vector.shape_cast %133 : vector<128xf32> to vector<1x128xf32>
    %135 = vector.broadcast %134 : vector<1x128xf32> to vector<24x128xf32>
    %136 = arith.addf %131, %135 : vector<24x128xf32>
    %137 = math.tanh %136 : vector<24x128xf32>
    %c4_i32 = arith.constant 4 : i32
    %138 = arith.subi %0, %c4_i32 : i32
    %139 = tpu.iota {dimensions = array<i32: 0>} : vector<24x128xi32>
    %140 = vector.broadcast %138 : i32 to vector<24x128xi32>
    %141 = arith.addi %140, %139 : vector<24x128xi32>
    %c0_i32_78 = arith.constant 0 : i32
    %142 = vector.broadcast %c0_i32_78 : i32 to vector<24x128xi32>
    %143 = arith.cmpi sge, %141, %142 : vector<24x128xi32>
    %c16_i32_79 = arith.constant 16 : i32
    %144 = vector.broadcast %c16_i32_79 : i32 to vector<24x128xi32>
    %145 = arith.cmpi slt, %141, %144 : vector<24x128xi32>
    %146 = arith.andi %143, %145 : vector<24x128xi1>
    %cst_80 = arith.constant 0.000000e+00 : f32
    %147 = vector.broadcast %cst_80 : f32 to vector<24x128xf32>
    %148 = arith.select %146, %137, %147 : vector<24x128xi1>, vector<24x128xf32>
    %149 = arith.truncf %148 : vector<24x128xf32> to vector<24x128xbf16>
    %cst_81 = arith.constant 0.000000e+00 : f32
    %150 = vector.broadcast %cst_81 : f32 to vector<20x128xf32>
    %151 = vector.extract_strided_slice %149 {offsets = [0, 0], sizes = [20, 128], strides = [1, 1]} : vector<24x128xbf16> to vector<20x128xbf16>
    %c0_82 = arith.constant 0 : index
    %c0_83 = arith.constant 0 : index
    %c0_84 = arith.constant 0 : index
    %152 = vector.load %arg12[%c0_82, %c0_83, %c0_84] : memref<5x128x128xbf16, #tpu.memory_space<vmem>>, vector<1x128x128xbf16>
    %153 = vector.shape_cast %152 : vector<1x128x128xbf16> to vector<128x128xbf16>
    %cst_85 = arith.constant dense<0.000000e+00> : vector<20x128xf32>
    %154 = tpu.matmul %151, %153, %cst_85 {dimension_numbers = #tpu.dot_dimension_numbers<[1], [0], [0], [1], [0, 0, 1, 1], [], []>} : vector<20x128xbf16>, vector<128x128xbf16>, vector<20x128xf32> -> vector<20x128xf32>
    %155 = arith.addf %150, %154 : vector<20x128xf32>
    %156 = vector.extract_strided_slice %149 {offsets = [1, 0], sizes = [20, 128], strides = [1, 1]} : vector<24x128xbf16> to vector<20x128xbf16>
    %c1_86 = arith.constant 1 : index
    %c0_87 = arith.constant 0 : index
    %c0_88 = arith.constant 0 : index
    %157 = vector.load %arg12[%c1_86, %c0_87, %c0_88] : memref<5x128x128xbf16, #tpu.memory_space<vmem>>, vector<1x128x128xbf16>
    %158 = vector.shape_cast %157 : vector<1x128x128xbf16> to vector<128x128xbf16>
    %cst_89 = arith.constant dense<0.000000e+00> : vector<20x128xf32>
    %159 = tpu.matmul %156, %158, %cst_89 {dimension_numbers = #tpu.dot_dimension_numbers<[1], [0], [0], [1], [0, 0, 1, 1], [], []>} : vector<20x128xbf16>, vector<128x128xbf16>, vector<20x128xf32> -> vector<20x128xf32>
    %160 = arith.addf %155, %159 : vector<20x128xf32>
    %161 = vector.extract_strided_slice %149 {offsets = [2, 0], sizes = [20, 128], strides = [1, 1]} : vector<24x128xbf16> to vector<20x128xbf16>
    %c2_90 = arith.constant 2 : index
    %c0_91 = arith.constant 0 : index
    %c0_92 = arith.constant 0 : index
    %162 = vector.load %arg12[%c2_90, %c0_91, %c0_92] : memref<5x128x128xbf16, #tpu.memory_space<vmem>>, vector<1x128x128xbf16>
    %163 = vector.shape_cast %162 : vector<1x128x128xbf16> to vector<128x128xbf16>
    %cst_93 = arith.constant dense<0.000000e+00> : vector<20x128xf32>
    %164 = tpu.matmul %161, %163, %cst_93 {dimension_numbers = #tpu.dot_dimension_numbers<[1], [0], [0], [1], [0, 0, 1, 1], [], []>} : vector<20x128xbf16>, vector<128x128xbf16>, vector<20x128xf32> -> vector<20x128xf32>
    %165 = arith.addf %160, %164 : vector<20x128xf32>
    %166 = vector.extract_strided_slice %149 {offsets = [3, 0], sizes = [20, 128], strides = [1, 1]} : vector<24x128xbf16> to vector<20x128xbf16>
    %c3_94 = arith.constant 3 : index
    %c0_95 = arith.constant 0 : index
    %c0_96 = arith.constant 0 : index
    %167 = vector.load %arg12[%c3_94, %c0_95, %c0_96] : memref<5x128x128xbf16, #tpu.memory_space<vmem>>, vector<1x128x128xbf16>
    %168 = vector.shape_cast %167 : vector<1x128x128xbf16> to vector<128x128xbf16>
    %cst_97 = arith.constant dense<0.000000e+00> : vector<20x128xf32>
    %169 = tpu.matmul %166, %168, %cst_97 {dimension_numbers = #tpu.dot_dimension_numbers<[1], [0], [0], [1], [0, 0, 1, 1], [], []>} : vector<20x128xbf16>, vector<128x128xbf16>, vector<20x128xf32> -> vector<20x128xf32>
    %170 = arith.addf %165, %169 : vector<20x128xf32>
    %171 = vector.extract_strided_slice %149 {offsets = [4, 0], sizes = [20, 128], strides = [1, 1]} : vector<24x128xbf16> to vector<20x128xbf16>
    %c4_98 = arith.constant 4 : index
    %c0_99 = arith.constant 0 : index
    %c0_100 = arith.constant 0 : index
    %172 = vector.load %arg12[%c4_98, %c0_99, %c0_100] : memref<5x128x128xbf16, #tpu.memory_space<vmem>>, vector<1x128x128xbf16>
    %173 = vector.shape_cast %172 : vector<1x128x128xbf16> to vector<128x128xbf16>
    %cst_101 = arith.constant dense<0.000000e+00> : vector<20x128xf32>
    %174 = tpu.matmul %171, %173, %cst_101 {dimension_numbers = #tpu.dot_dimension_numbers<[1], [0], [0], [1], [0, 0, 1, 1], [], []>} : vector<20x128xbf16>, vector<128x128xbf16>, vector<20x128xf32> -> vector<20x128xf32>
    %175 = arith.addf %170, %174 : vector<20x128xf32>
    %c0_102 = arith.constant 0 : index
    %c0_103 = arith.constant 0 : index
    %176 = vector.load %arg13[%c0_102, %c0_103] : memref<1x128xf32, #tpu.memory_space<vmem>>, vector<1x128xf32>
    %177 = vector.shape_cast %176 : vector<1x128xf32> to vector<128xf32>
    %178 = vector.shape_cast %177 : vector<128xf32> to vector<1x128xf32>
    %179 = vector.broadcast %178 : vector<1x128xf32> to vector<20x128xf32>
    %180 = arith.mulf %175, %179 : vector<20x128xf32>
    %c0_104 = arith.constant 0 : index
    %c0_105 = arith.constant 0 : index
    %181 = vector.load %arg14[%c0_104, %c0_105] : memref<1x128xf32, #tpu.memory_space<vmem>>, vector<1x128xf32>
    %182 = vector.shape_cast %181 : vector<1x128xf32> to vector<128xf32>
    %183 = vector.shape_cast %182 : vector<128xf32> to vector<1x128xf32>
    %184 = vector.broadcast %183 : vector<1x128xf32> to vector<20x128xf32>
    %185 = arith.addf %180, %184 : vector<20x128xf32>
    %186 = math.tanh %185 : vector<20x128xf32>
    %c2_i32 = arith.constant 2 : i32
    %187 = arith.subi %0, %c2_i32 : i32
    %188 = tpu.iota {dimensions = array<i32: 0>} : vector<20x128xi32>
    %189 = vector.broadcast %187 : i32 to vector<20x128xi32>
    %190 = arith.addi %189, %188 : vector<20x128xi32>
    %c0_i32_106 = arith.constant 0 : i32
    %191 = vector.broadcast %c0_i32_106 : i32 to vector<20x128xi32>
    %192 = arith.cmpi sge, %190, %191 : vector<20x128xi32>
    %c16_i32_107 = arith.constant 16 : i32
    %193 = vector.broadcast %c16_i32_107 : i32 to vector<20x128xi32>
    %194 = arith.cmpi slt, %190, %193 : vector<20x128xi32>
    %195 = arith.andi %192, %194 : vector<20x128xi1>
    %cst_108 = arith.constant 0.000000e+00 : f32
    %196 = vector.broadcast %cst_108 : f32 to vector<20x128xf32>
    %197 = arith.select %195, %186, %196 : vector<20x128xi1>, vector<20x128xf32>
    %198 = arith.truncf %197 : vector<20x128xf32> to vector<20x128xbf16>
    %cst_109 = arith.constant 0.000000e+00 : f32
    %199 = vector.broadcast %cst_109 : f32 to vector<16x128xf32>
    %200 = vector.extract_strided_slice %198 {offsets = [0, 0], sizes = [16, 128], strides = [1, 1]} : vector<20x128xbf16> to vector<16x128xbf16>
    %c0_110 = arith.constant 0 : index
    %c0_111 = arith.constant 0 : index
    %c0_112 = arith.constant 0 : index
    %201 = vector.load %arg15[%c0_110, %c0_111, %c0_112] : memref<5x128x128xbf16, #tpu.memory_space<vmem>>, vector<1x128x128xbf16>
    %202 = vector.shape_cast %201 : vector<1x128x128xbf16> to vector<128x128xbf16>
    %cst_113 = arith.constant dense<0.000000e+00> : vector<16x128xf32>
    %203 = tpu.matmul %200, %202, %cst_113 {dimension_numbers = #tpu.dot_dimension_numbers<[1], [0], [0], [1], [0, 0, 1, 1], [], []>} : vector<16x128xbf16>, vector<128x128xbf16>, vector<16x128xf32> -> vector<16x128xf32>
    %204 = arith.addf %199, %203 : vector<16x128xf32>
    %205 = vector.extract_strided_slice %198 {offsets = [1, 0], sizes = [16, 128], strides = [1, 1]} : vector<20x128xbf16> to vector<16x128xbf16>
    %c1_114 = arith.constant 1 : index
    %c0_115 = arith.constant 0 : index
    %c0_116 = arith.constant 0 : index
    %206 = vector.load %arg15[%c1_114, %c0_115, %c0_116] : memref<5x128x128xbf16, #tpu.memory_space<vmem>>, vector<1x128x128xbf16>
    %207 = vector.shape_cast %206 : vector<1x128x128xbf16> to vector<128x128xbf16>
    %cst_117 = arith.constant dense<0.000000e+00> : vector<16x128xf32>
    %208 = tpu.matmul %205, %207, %cst_117 {dimension_numbers = #tpu.dot_dimension_numbers<[1], [0], [0], [1], [0, 0, 1, 1], [], []>} : vector<16x128xbf16>, vector<128x128xbf16>, vector<16x128xf32> -> vector<16x128xf32>
    %209 = arith.addf %204, %208 : vector<16x128xf32>
    %210 = vector.extract_strided_slice %198 {offsets = [2, 0], sizes = [16, 128], strides = [1, 1]} : vector<20x128xbf16> to vector<16x128xbf16>
    %c2_118 = arith.constant 2 : index
    %c0_119 = arith.constant 0 : index
    %c0_120 = arith.constant 0 : index
    %211 = vector.load %arg15[%c2_118, %c0_119, %c0_120] : memref<5x128x128xbf16, #tpu.memory_space<vmem>>, vector<1x128x128xbf16>
    %212 = vector.shape_cast %211 : vector<1x128x128xbf16> to vector<128x128xbf16>
    %cst_121 = arith.constant dense<0.000000e+00> : vector<16x128xf32>
    %213 = tpu.matmul %210, %212, %cst_121 {dimension_numbers = #tpu.dot_dimension_numbers<[1], [0], [0], [1], [0, 0, 1, 1], [], []>} : vector<16x128xbf16>, vector<128x128xbf16>, vector<16x128xf32> -> vector<16x128xf32>
    %214 = arith.addf %209, %213 : vector<16x128xf32>
    %215 = vector.extract_strided_slice %198 {offsets = [3, 0], sizes = [16, 128], strides = [1, 1]} : vector<20x128xbf16> to vector<16x128xbf16>
    %c3_122 = arith.constant 3 : index
    %c0_123 = arith.constant 0 : index
    %c0_124 = arith.constant 0 : index
    %216 = vector.load %arg15[%c3_122, %c0_123, %c0_124] : memref<5x128x128xbf16, #tpu.memory_space<vmem>>, vector<1x128x128xbf16>
    %217 = vector.shape_cast %216 : vector<1x128x128xbf16> to vector<128x128xbf16>
    %cst_125 = arith.constant dense<0.000000e+00> : vector<16x128xf32>
    %218 = tpu.matmul %215, %217, %cst_125 {dimension_numbers = #tpu.dot_dimension_numbers<[1], [0], [0], [1], [0, 0, 1, 1], [], []>} : vector<16x128xbf16>, vector<128x128xbf16>, vector<16x128xf32> -> vector<16x128xf32>
    %219 = arith.addf %214, %218 : vector<16x128xf32>
    %220 = vector.extract_strided_slice %198 {offsets = [4, 0], sizes = [16, 128], strides = [1, 1]} : vector<20x128xbf16> to vector<16x128xbf16>
    %c4_126 = arith.constant 4 : index
    %c0_127 = arith.constant 0 : index
    %c0_128 = arith.constant 0 : index
    %221 = vector.load %arg15[%c4_126, %c0_127, %c0_128] : memref<5x128x128xbf16, #tpu.memory_space<vmem>>, vector<1x128x128xbf16>
    %222 = vector.shape_cast %221 : vector<1x128x128xbf16> to vector<128x128xbf16>
    %cst_129 = arith.constant dense<0.000000e+00> : vector<16x128xf32>
    %223 = tpu.matmul %220, %222, %cst_129 {dimension_numbers = #tpu.dot_dimension_numbers<[1], [0], [0], [1], [0, 0, 1, 1], [], []>} : vector<16x128xbf16>, vector<128x128xbf16>, vector<16x128xf32> -> vector<16x128xf32>
    %224 = arith.addf %219, %223 : vector<16x128xf32>
    %c0_130 = arith.constant 0 : index
    %c0_131 = arith.constant 0 : index
    %225 = vector.load %arg16[%c0_130, %c0_131] : memref<1x128xf32, #tpu.memory_space<vmem>>, vector<1x128xf32>
    %226 = vector.shape_cast %225 : vector<1x128xf32> to vector<128xf32>
    %227 = vector.shape_cast %226 : vector<128xf32> to vector<1x128xf32>
    %228 = vector.broadcast %227 : vector<1x128xf32> to vector<16x128xf32>
    %229 = arith.mulf %224, %228 : vector<16x128xf32>
    %c0_132 = arith.constant 0 : index
    %c0_133 = arith.constant 0 : index
    %230 = vector.load %arg17[%c0_132, %c0_133] : memref<1x128xf32, #tpu.memory_space<vmem>>, vector<1x128xf32>
    %231 = vector.shape_cast %230 : vector<1x128xf32> to vector<128xf32>
    %232 = vector.shape_cast %231 : vector<128xf32> to vector<1x128xf32>
    %233 = vector.broadcast %232 : vector<1x128xf32> to vector<16x128xf32>
    %234 = arith.addf %229, %233 : vector<16x128xf32>
    %c0_134 = arith.constant 0 : index
    %c0_135 = arith.constant 0 : index
    %c0_136 = arith.constant 0 : index
    %c0_137 = arith.constant 0 : index
    %235 = vector.load %arg18[%c0_134, %c0_135, %c0_136, %c0_137] : memref<1x1x16x128xf32, #tpu.memory_space<vmem>>, vector<1x1x16x128xf32>
    %236 = vector.shape_cast %235 : vector<1x1x16x128xf32> to vector<16x128xf32>
    %237 = vector.shape_cast %234 : vector<16x128xf32> to vector<1x1x16x128xf32>
    tpu.vector_store %arg18[%c0_134, %c0_135, %c0_136, %c0_137], %237 {strides = array<i32>} : memref<1x1x16x128xf32, #tpu.memory_space<vmem>>, vector<1x1x16x128xf32>,
    return
  }
  func.func @transform_0(%arg0: i32, %arg1: i32) -> (i32, i32, i32, i32) {
    %c0_i32 = arith.constant 0 : i32
    %c0_i32_0 = arith.constant 0 : i32
    %c0_i32_1 = arith.constant 0 : i32
    return %arg0, %arg1, %c0_i32, %c0_i32_0 : i32, i32, i32, i32
  }
  func.func @transform_1(%arg0: i32, %arg1: i32) -> (i32, i32, i32) {
    %c0_i32 = arith.constant 0 : i32
    %c0_i32_0 = arith.constant 0 : i32
    %c0_i32_1 = arith.constant 0 : i32
    %c0_i32_2 = arith.constant 0 : i32
    return %c0_i32, %c0_i32_0, %c0_i32_1 : i32, i32, i32
  }
  func.func @transform_2(%arg0: i32, %arg1: i32) -> (i32, i32) {
    %c0_i32 = arith.constant 0 : i32
    %c0_i32_0 = arith.constant 0 : i32
    %c0_i32_1 = arith.constant 0 : i32
    return %c0_i32, %c0_i32_0 : i32, i32
  }
  func.func @transform_3(%arg0: i32, %arg1: i32) -> (i32, i32) {
    %c0_i32 = arith.constant 0 : i32
    %c0_i32_0 = arith.constant 0 : i32
    %c0_i32_1 = arith.constant 0 : i32
    return %c0_i32, %c0_i32_0 : i32, i32
  }
  func.func @transform_4(%arg0: i32, %arg1: i32) -> (i32, i32, i32) {
    %c0_i32 = arith.constant 0 : i32
    %c0_i32_0 = arith.constant 0 : i32
    %c0_i32_1 = arith.constant 0 : i32
    %c0_i32_2 = arith.constant 0 : i32
    return %c0_i32, %c0_i32_0, %c0_i32_1 : i32, i32, i32
  }
  func.func @transform_5(%arg0: i32, %arg1: i32) -> (i32, i32) {
    %c0_i32 = arith.constant 0 : i32
    %c0_i32_0 = arith.constant 0 : i32
    %c0_i32_1 = arith.constant 0 : i32
    return %c0_i32, %c0_i32_0 : i32, i32
  }
  func.func @transform_6(%arg0: i32, %arg1: i32) -> (i32, i32) {
    %c0_i32 = arith.constant 0 : i32
    %c0_i32_0 = arith.constant 0 : i32
    %c0_i32_1 = arith.constant 0 : i32
    return %c0_i32, %c0_i32_0 : i32, i32
  }
  func.func @transform_7(%arg0: i32, %arg1: i32) -> (i32, i32, i32) {
    %c0_i32 = arith.constant 0 : i32
    %c0_i32_0 = arith.constant 0 : i32
    %c0_i32_1 = arith.constant 0 : i32
    %c0_i32_2 = arith.constant 0 : i32
    return %c0_i32, %c0_i32_0, %c0_i32_1 : i32, i32, i32
  }
  func.func @transform_8(%arg0: i32, %arg1: i32) -> (i32, i32) {
    %c0_i32 = arith.constant 0 : i32
    %c0_i32_0 = arith.constant 0 : i32
    %c0_i32_1 = arith.constant 0 : i32
    return %c0_i32, %c0_i32_0 : i32, i32
  }
  func.func @transform_9(%arg0: i32, %arg1: i32) -> (i32, i32) {
    %c0_i32 = arith.constant 0 : i32
    %c0_i32_0 = arith.constant 0 : i32
    %c0_i32_1 = arith.constant 0 : i32
    return %c0_i32, %c0_i32_0 : i32, i32
  }
  func.func @transform_10(%arg0: i32, %arg1: i32) -> (i32, i32, i32) {
    %c0_i32 = arith.constant 0 : i32
    %c0_i32_0 = arith.constant 0 : i32
    %c0_i32_1 = arith.constant 0 : i32
    %c0_i32_2 = arith.constant 0 : i32
    return %c0_i32, %c0_i32_0, %c0_i32_1 : i32, i32, i32
  }
  func.func @transform_11(%arg0: i32, %arg1: i32) -> (i32, i32) {
    %c0_i32 = arith.constant 0 : i32
    %c0_i32_0 = arith.constant 0 : i32
    %c0_i32_1 = arith.constant 0 : i32
    return %c0_i32, %c0_i32_0 : i32, i32
  }
  func.func @transform_12(%arg0: i32, %arg1: i32) -> (i32, i32) {
    %c0_i32 = arith.constant 0 : i32
    %c0_i32_0 = arith.constant 0 : i32
    %c0_i32_1 = arith.constant 0 : i32
    return %c0_i32, %c0_i32_0 : i32, i32
  }
  func.func @transform_13(%arg0: i32, %arg1: i32) -> (i32, i32, i32) {
    %c0_i32 = arith.constant 0 : i32
    %c0_i32_0 = arith.constant 0 : i32
    %c0_i32_1 = arith.constant 0 : i32
    %c0_i32_2 = arith.constant 0 : i32
    return %c0_i32, %c0_i32_0, %c0_i32_1 : i32, i32, i32
  }
  func.func @transform_14(%arg0: i32, %arg1: i32) -> (i32, i32) {
    %c0_i32 = arith.constant 0 : i32
    %c0_i32_0 = arith.constant 0 : i32
    %c0_i32_1 = arith.constant 0 : i32
    return %c0_i32, %c0_i32_0 : i32, i32
  }
  func.func @transform_15(%arg0: i32, %arg1: i32) -> (i32, i32) {
    %c0_i32 = arith.constant 0 : i32
    %c0_i32_0 = arith.constant 0 : i32
    %c0_i32_1 = arith.constant 0 : i32
    return %c0_i32, %c0_i32_0 : i32, i32
  }
  func.func @transform_16(%arg0: i32, %arg1: i32) -> (i32, i32, i32, i32) {
    %c0_i32 = arith.constant 0 : i32
    %c0_i32_0 = arith.constant 0 : i32
    %c0_i32_1 = arith.constant 0 : i32
    return %arg0, %arg1, %c0_i32, %c0_i32_0 : i32, i32, i32, i32
  }
}

</mosaic_0001>

<llo_original>
// kernel: tpu_custom_call.1
$region0: #{tpu_custom_call.1}
  #allocation0 [shape = 'u32[]', space=smem, size = 0x4, offset = 0x4, fixed_abs, tag = 'smem constant byte address 0x4 - core index']
  #allocation1 [shape = 'u32[144,128]{1,0:T(1,128)}', space=vmem, size = 0x12000, scoped, tag = 'internal scratch']
  %s0 = inlined_call_operand.vmem [shape: bf16[2,1,36,128], index: 0, kind: input, shape index: {}]
  %s1 = inlined_call_operand.hbm [shape: bf16[5,128,128], index: 1, kind: input, shape index: {}]
  %s2 = inlined_call_operand.vmem [shape: f32[1,128], index: 2, kind: input, shape index: {}]
  %s3 = inlined_call_operand.vmem [shape: f32[1,128], index: 3, kind: input, shape index: {}]
  %s4 = inlined_call_operand.hbm [shape: bf16[5,128,128], index: 4, kind: input, shape index: {}]
  %s5 = inlined_call_operand.vmem [shape: f32[1,128], index: 5, kind: input, shape index: {}]
  %s6 = inlined_call_operand.vmem [shape: f32[1,128], index: 6, kind: input, shape index: {}]
  %s7 = inlined_call_operand.hbm [shape: bf16[5,128,128], index: 7, kind: input, shape index: {}]
  %s8 = inlined_call_operand.vmem [shape: f32[1,128], index: 8, kind: input, shape index: {}]
  %s9 = inlined_call_operand.vmem [shape: f32[1,128], index: 9, kind: input, shape index: {}]
  %s10 = inlined_call_operand.hbm [shape: bf16[5,128,128], index: 10, kind: input, shape index: {}]
  %s11 = inlined_call_operand.vmem [shape: f32[1,128], index: 11, kind: input, shape index: {}]
  %s12 = inlined_call_operand.vmem [shape: f32[1,128], index: 12, kind: input, shape index: {}]
  %s13 = inlined_call_operand.hbm [shape: bf16[5,128,128], index: 13, kind: input, shape index: {}]
  %s14 = inlined_call_operand.vmem [shape: f32[1,128], index: 14, kind: input, shape index: {}]
  %s15 = inlined_call_operand.vmem [shape: f32[1,128], index: 15, kind: input, shape index: {}]
  %s16 = inlined_call_operand.hbm [shape: f32[2,1,16,128], index: 16, kind: output, shape index: {}]
  %s17 = sld [smem:[#allocation0]]
  $region117: #{tpu_custom_call.1} parent=0
    _
  %s19 = ssub.s32 1, %s17
  %s20 = scalar_select 0, %s19, %s17
  $region1: #{tpu_custom_call.1} parent=0
    #allocation2 [shape = 'u8[163840]{0}', space=vmem, size = 0x28000, scoped, tag = 'input window, operand 1, single buffered']
    #allocation3 [shape = 's32[2]{0}', space=sflag, size = 0x8, scoped, tag = 'scoped memory for tpu_custom_call.1']
    #allocation4 [shape = 's32[2]{0}', space=sflag, size = 0x8, scoped, tag = 'scoped memory for tpu_custom_call.1']
    #allocation5 [shape = 'u8[163840]{0}', space=vmem, size = 0x28000, scoped, tag = 'input window, operand 4, single buffered']
    #allocation6 [shape = 's32[1]{0}', space=sflag, size = 0x4, scoped, tag = 'scoped memory for tpu_custom_call.1']
    #allocation7 [shape = 'u8[163840]{0}', space=vmem, size = 0x28000, scoped, tag = 'input window, operand 7, single buffered']
    #allocation8 [shape = 'u8[163840]{0}', space=vmem, size = 0x28000, scoped, tag = 'input window, operand 10, single buffered']
    #allocation9 [shape = 's32[1]{0}', space=sflag, size = 0x4, scoped, tag = 'scoped memory for tpu_custom_call.1']
    #allocation10 [shape = 'u8[163840]{0}', space=vmem, size = 0x28000, scoped, tag = 'input window, operand 13, single buffered']
    #allocation11 [shape = 'u8[16384]{0}', space=vmem, size = 0x4000, scoped, tag = 'output window, operand 0']
    %21 = vsyncpa [#allocation3], 0
    %22 = vsyncpa [#allocation6], 0
    %23 = vsyncpa [#allocation9], 0
    %24 = vsyncpa [#allocation4], 0
    %s25 = scalar_lea.sflag [#allocation4], 1
    %26 = vsyncpa %s25, 0
    loop: start=0, step=1, limit=4
    $region2: #{tpu_custom_call.1} parent=1 // loop_pre_header
      _
    $region3: #{tpu_custom_call.1} parent=1 // loop_header
      %s28 = sphi 0, %s32
      %p29 = scmp.ge.s32.totalorder %s28, 4
      %s35 = sphi 0, %s47
      %s36 = sphi 0, %s43
      %s37 = sphi 0, %s35
      %s38 = sphi 0, %s36
      %s39 = sphi 0, %s37
      %s40 = sphi 0, %s38
      %s52 = sphi 0, %s54
      %s55 = sphi 0, %s52
      %s56 = sphi 0, %s55
      %s72 = sphi 0, %s56
      %s76 = sphi 0, %s76
      %s78 = sphi 0, %s76
      %s79 = sphi 0, %s78
      %s93 = sphi 0, %s79
      %s97 = sphi 0, %s97
      %s99 = sphi 0, %s97
      %s100 = sphi 0, %s99
      %s114 = sphi 0, %s100
      %s118 = sphi 0, %s118
      %s120 = sphi 0, %s118
      %s121 = sphi 0, %s120
      %s135 = sphi 0, %s121
      %s139 = sphi 0, %s139
      %s141 = sphi 0, %s139
      %s142 = sphi 0, %s141
      %s156 = sphi 0, %s142
      %s160 = sphi 0, %s160
      %s162 = sphi 0, %s160
      %s163 = sphi 0, %s162
      %s177 = sphi 0, %s163
      %s181 = sphi 0, %s181
      %s183 = sphi 0, %s181
      %s184 = sphi 0, %s183
      %s198 = sphi 0, %s184
      %s202 = sphi 0, %s202
      %s204 = sphi 0, %s202
      %s205 = sphi 0, %s204
      %s219 = sphi 0, %s205
      %s223 = sphi 0, %s223
      %s225 = sphi 0, %s223
      %s226 = sphi 0, %s225
      %s240 = sphi 0, %s226
      %s244 = sphi 0, %s244
      %s246 = sphi 0, %s244
      %s247 = sphi 0, %s246
      %s261 = sphi 0, %s247
      %s265 = sphi 0, %s265
      %s267 = sphi 0, %s265
      %s268 = sphi 0, %s267
      %s282 = sphi 0, %s268
      %s286 = sphi 0, %s286
      %s288 = sphi 0, %s286
      %s289 = sphi 0, %s288
      %s303 = sphi 0, %s289
      %s307 = sphi 0, %s307
      %s309 = sphi 0, %s307
      %s310 = sphi 0, %s309
      %s324 = sphi 0, %s310
      %s328 = sphi 0, %s328
      %s330 = sphi 0, %s328
      %s331 = sphi 0, %s330
      %s345 = sphi 0, %s331
      %s349 = sphi 0, %s349
      %s351 = sphi 0, %s349
      %s352 = sphi 0, %s351
      %s366 = sphi 0, %s352
      %s370 = sphi 0, %s370
      %s372 = sphi 0, %s370
      %s373 = sphi 0, %s372
      %s387 = sphi 0, %s373
      %s395 = sphi 0, %s397
      %s398 = sphi 0, %s395
      %s399 = sphi 0, %s398
      %s415 = sphi 0, %s399
    $region4: #{tpu_custom_call.1} parent=1 // loop_header_branch
      %31 = sbr.rel (%p29) target = $region8
    $region5: #{tpu_custom_call.1} parent=1 // loop_body
      %s33 = ssub.s32 %s28, 1
      %s34 = ssub.s32 %s28, 2
      %s41 = sadd.s32 1, %s36
      %p42 = scmp.ge.s32.totalorder %s41, 1
      %s43 = scalar_select %p42, 0, %s41
      %s44 = sadd.s32 1, %s35
      %s45 = scalar_select %p42, %s44, %s35
      %p46 = scmp.ge.s32.totalorder %s45, 2
      %s47 = scalar_select %p46, 0, %s45
      %s48 = ssub.s32 %s35, %s47
      %s49 = ssub.s32 %s36, %s43
      %s50 = sor.u32 %s48, %s49
      %p51 = scmp.eq.s32.totalorder %s50, 0
      %s53 = sadd.s32 %s52, 1
      %s54 = scalar_select %p51, %s52, %s53
      %p57 = pneg %p51
      %p58 = scmp.eq.s32.totalorder %s28, 1
      %p59 = por %p57, %p58
      %p60 = scmp.ne.s32.totalorder %s52, %s55
      %p61 = scmp.eq.s32.totalorder %s28, 0
      %p62 = por %p60, %p61
      %p63 = scmp.ne.s32.totalorder %s52, %s55
      %p64 = scmp.eq.s32.totalorder %s33, 1
      %p65 = por %p63, %p64
      %p66 = scmp.ne.s32.totalorder %s55, %s56
      %p67 = scmp.eq.s32.totalorder %s33, 0
      %p68 = por %p66, %p67
      %p69 = scmp.ne.s32.totalorder %s55, %s56
      %p70 = scmp.eq.s32.totalorder %s34, 1
      %p71 = por %p69, %p70
      %p73 = scmp.ne.s32.totalorder %s56, %s72
      %p74 = scmp.eq.s32.totalorder %s34, 0
      %p75 = por %p73, %p74
      %s77 = sadd.s32 %s76, 1
      %p80 = scmp.eq.s32.totalorder %s28, 1
      %p81 = scmp.ne.s32.totalorder %s76, %s78
      %p82 = scmp.eq.s32.totalorder %s28, 0
      %p83 = por %p81, %p82
      %p84 = scmp.ne.s32.totalorder %s76, %s78
      %p85 = scmp.eq.s32.totalorder %s33, 1
      %p86 = por %p84, %p85
      %p87 = scmp.ne.s32.totalorder %s78, %s79
      %p88 = scmp.eq.s32.totalorder %s33, 0
      %p89 = por %p87, %p88
      %p90 = scmp.ne.s32.totalorder %s78, %s79
      %p91 = scmp.eq.s32.totalorder %s34, 1
      %p92 = por %p90, %p91
      %p94 = scmp.ne.s32.totalorder %s79, %s93
      %p95 = scmp.eq.s32.totalorder %s34, 0
      %p96 = por %p94, %p95
      %s98 = sadd.s32 %s97, 1
      %p101 = scmp.eq.s32.totalorder %s28, 1
      %p102 = scmp.ne.s32.totalorder %s97, %s99
      %p103 = scmp.eq.s32.totalorder %s28, 0
      %p104 = por %p102, %p103
      %p105 = scmp.ne.s32.totalorder %s97, %s99
      %p106 = scmp.eq.s32.totalorder %s33, 1
      %p107 = por %p105, %p106
      %p108 = scmp.ne.s32.totalorder %s99, %s100
      %p109 = scmp.eq.s32.totalorder %s33, 0
      %p110 = por %p108, %p109
      %p111 = scmp.ne.s32.totalorder %s99, %s100
      %p112 = scmp.eq.s32.totalorder %s34, 1
      %p113 = por %p111, %p112
      %p115 = scmp.ne.s32.totalorder %s100, %s114
      %p116 = scmp.eq.s32.totalorder %s34, 0
      %p117 = por %p115, %p116
      %s119 = sadd.s32 %s118, 1
      %p122 = scmp.eq.s32.totalorder %s28, 1
      %p123 = scmp.ne.s32.totalorder %s118, %s120
      %p124 = scmp.eq.s32.totalorder %s28, 0
      %p125 = por %p123, %p124
      %p126 = scmp.ne.s32.totalorder %s118, %s120
      %p127 = scmp.eq.s32.totalorder %s33, 1
      %p128 = por %p126, %p127
      %p129 = scmp.ne.s32.totalorder %s120, %s121
      %p130 = scmp.eq.s32.totalorder %s33, 0
      %p131 = por %p129, %p130
      %p132 = scmp.ne.s32.totalorder %s120, %s121
      %p133 = scmp.eq.s32.totalorder %s34, 1
      %p134 = por %p132, %p133
      %p136 = scmp.ne.s32.totalorder %s121, %s135
      %p137 = scmp.eq.s32.totalorder %s34, 0
      %p138 = por %p136, %p137
      %s140 = sadd.s32 %s139, 1
      %p143 = scmp.eq.s32.totalorder %s28, 1
      %p144 = scmp.ne.s32.totalorder %s139, %s141
      %p145 = scmp.eq.s32.totalorder %s28, 0
      %p146 = por %p144, %p145
      %p147 = scmp.ne.s32.totalorder %s139, %s141
      %p148 = scmp.eq.s32.totalorder %s33, 1
      %p149 = por %p147, %p148
      %p150 = scmp.ne.s32.totalorder %s141, %s142
      %p151 = scmp.eq.s32.totalorder %s33, 0
      %p152 = por %p150, %p151
      %p153 = scmp.ne.s32.totalorder %s141, %s142
      %p154 = scmp.eq.s32.totalorder %s34, 1
      %p155 = por %p153, %p154
      %p157 = scmp.ne.s32.totalorder %s142, %s156
      %p158 = scmp.eq.s32.totalorder %s34, 0
      %p159 = por %p157, %p158
      %s161 = sadd.s32 %s160, 1
      %p164 = scmp.eq.s32.totalorder %s28, 1
      %p165 = scmp.ne.s32.totalorder %s160, %s162
      %p166 = scmp.eq.s32.totalorder %s28, 0
      %p167 = por %p165, %p166
      %p168 = scmp.ne.s32.totalorder %s160, %s162
      %p169 = scmp.eq.s32.totalorder %s33, 1
      %p170 = por %p168, %p169
      %p171 = scmp.ne.s32.totalorder %s162, %s163
      %p172 = scmp.eq.s32.totalorder %s33, 0
      %p173 = por %p171, %p172
      %p174 = scmp.ne.s32.totalorder %s162, %s163
      %p175 = scmp.eq.s32.totalorder %s34, 1
      %p176 = por %p174, %p175
      %p178 = scmp.ne.s32.totalorder %s163, %s177
      %p179 = scmp.eq.s32.totalorder %s34, 0
      %p180 = por %p178, %p179
      %s182 = sadd.s32 %s181, 1
      %p185 = scmp.eq.s32.totalorder %s28, 1
      %p186 = scmp.ne.s32.totalorder %s181, %s183
      %p187 = scmp.eq.s32.totalorder %s28, 0
      %p188 = por %p186, %p187
      %p189 = scmp.ne.s32.totalorder %s181, %s183
      %p190 = scmp.eq.s32.totalorder %s33, 1
      %p191 = por %p189, %p190
      %p192 = scmp.ne.s32.totalorder %s183, %s184
      %p193 = scmp.eq.s32.totalorder %s33, 0
      %p194 = por %p192, %p193
      %p195 = scmp.ne.s32.totalorder %s183, %s184
      %p196 = scmp.eq.s32.totalorder %s34, 1
      %p197 = por %p195, %p196
      %p199 = scmp.ne.s32.totalorder %s184, %s198
      %p200 = scmp.eq.s32.totalorder %s34, 0
      %p201 = por %p199, %p200
      %s203 = sadd.s32 %s202, 1
      %p206 = scmp.eq.s32.totalorder %s28, 1
      %p207 = scmp.ne.s32.totalorder %s202, %s204
      %p208 = scmp.eq.s32.totalorder %s28, 0
      %p209 = por %p207, %p208
      %p210 = scmp.ne.s32.totalorder %s202, %s204
      %p211 = scmp.eq.s32.totalorder %s33, 1
      %p212 = por %p210, %p211
      %p213 = scmp.ne.s32.totalorder %s204, %s205
      %p214 = scmp.eq.s32.totalorder %s33, 0
      %p215 = por %p213, %p214
      %p216 = scmp.ne.s32.totalorder %s204, %s205
      %p217 = scmp.eq.s32.totalorder %s34, 1
      %p218 = por %p216, %p217
      %p220 = scmp.ne.s32.totalorder %s205, %s219
      %p221 = scmp.eq.s32.totalorder %s34, 0
      %p222 = por %p220, %p221
      %s224 = sadd.s32 %s223, 1
      %p227 = scmp.eq.s32.totalorder %s28, 1
      %p228 = scmp.ne.s32.totalorder %s223, %s225
      %p229 = scmp.eq.s32.totalorder %s28, 0
      %p230 = por %p228, %p229
      %p231 = scmp.ne.s32.totalorder %s223, %s225
      %p232 = scmp.eq.s32.totalorder %s33, 1
      %p233 = por %p231, %p232
      %p234 = scmp.ne.s32.totalorder %s225, %s226
      %p235 = scmp.eq.s32.totalorder %s33, 0
      %p236 = por %p234, %p235
      %p237 = scmp.ne.s32.totalorder %s225, %s226
      %p238 = scmp.eq.s32.totalorder %s34, 1
      %p239 = por %p237, %p238
      %p241 = scmp.ne.s32.totalorder %s226, %s240
      %p242 = scmp.eq.s32.totalorder %s34, 0
      %p243 = por %p241, %p242
      %s245 = sadd.s32 %s244, 1
      %p248 = scmp.eq.s32.totalorder %s28, 1
      %p249 = scmp.ne.s32.totalorder %s244, %s246
      %p250 = scmp.eq.s32.totalorder %s28, 0
      %p251 = por %p249, %p250
      %p252 = scmp.ne.s32.totalorder %s244, %s246
      %p253 = scmp.eq.s32.totalorder %s33, 1
      %p254 = por %p252, %p253
      %p255 = scmp.ne.s32.totalorder %s246, %s247
      %p256 = scmp.eq.s32.totalorder %s33, 0
      %p257 = por %p255, %p256
      %p258 = scmp.ne.s32.totalorder %s246, %s247
      %p259 = scmp.eq.s32.totalorder %s34, 1
      %p260 = por %p258, %p259
      %p262 = scmp.ne.s32.totalorder %s247, %s261
      %p263 = scmp.eq.s32.totalorder %s34, 0
      %p264 = por %p262, %p263
      %s266 = sadd.s32 %s265, 1
      %p269 = scmp.eq.s32.totalorder %s28, 1
      %p270 = scmp.ne.s32.totalorder %s265, %s267
      %p271 = scmp.eq.s32.totalorder %s28, 0
      %p272 = por %p270, %p271
      %p273 = scmp.ne.s32.totalorder %s265, %s267
      %p274 = scmp.eq.s32.totalorder %s33, 1
      %p275 = por %p273, %p274
      %p276 = scmp.ne.s32.totalorder %s267, %s268
      %p277 = scmp.eq.s32.totalorder %s33, 0
      %p278 = por %p276, %p277
      %p279 = scmp.ne.s32.totalorder %s267, %s268
      %p280 = scmp.eq.s32.totalorder %s34, 1
      %p281 = por %p279, %p280
      %p283 = scmp.ne.s32.totalorder %s268, %s282
      %p284 = scmp.eq.s32.totalorder %s34, 0
      %p285 = por %p283, %p284
      %s287 = sadd.s32 %s286, 1
      %p290 = scmp.eq.s32.totalorder %s28, 1
      %p291 = scmp.ne.s32.totalorder %s286, %s288
      %p292 = scmp.eq.s32.totalorder %s28, 0
      %p293 = por %p291, %p292
      %p294 = scmp.ne.s32.totalorder %s286, %s288
      %p295 = scmp.eq.s32.totalorder %s33, 1
      %p296 = por %p294, %p295
      %p297 = scmp.ne.s32.totalorder %s288, %s289
      %p298 = scmp.eq.s32.totalorder %s33, 0
      %p299 = por %p297, %p298
      %p300 = scmp.ne.s32.totalorder %s288, %s289
      %p301 = scmp.eq.s32.totalorder %s34, 1
      %p302 = por %p300, %p301
      %p304 = scmp.ne.s32.totalorder %s289, %s303
      %p305 = scmp.eq.s32.totalorder %s34, 0
      %p306 = por %p304, %p305
      %s308 = sadd.s32 %s307, 1
      %p311 = scmp.eq.s32.totalorder %s28, 1
      %p312 = scmp.ne.s32.totalorder %s307, %s309
      %p313 = scmp.eq.s32.totalorder %s28, 0
      %p314 = por %p312, %p313
      %p315 = scmp.ne.s32.totalorder %s307, %s309
      %p316 = scmp.eq.s32.totalorder %s33, 1
      %p317 = por %p315, %p316
      %p318 = scmp.ne.s32.totalorder %s309, %s310
      %p319 = scmp.eq.s32.totalorder %s33, 0
      %p320 = por %p318, %p319
      %p321 = scmp.ne.s32.totalorder %s309, %s310
      %p322 = scmp.eq.s32.totalorder %s34, 1
      %p323 = por %p321, %p322
      %p325 = scmp.ne.s32.totalorder %s310, %s324
      %p326 = scmp.eq.s32.totalorder %s34, 0
      %p327 = por %p325, %p326
      %s329 = sadd.s32 %s328, 1
      %p332 = scmp.eq.s32.totalorder %s28, 1
      %p333 = scmp.ne.s32.totalorder %s328, %s330
      %p334 = scmp.eq.s32.totalorder %s28, 0
      %p335 = por %p333, %p334
      %p336 = scmp.ne.s32.totalorder %s328, %s330
      %p337 = scmp.eq.s32.totalorder %s33, 1
      %p338 = por %p336, %p337
      %p339 = scmp.ne.s32.totalorder %s330, %s331
      %p340 = scmp.eq.s32.totalorder %s33, 0
      %p341 = por %p339, %p340
      %p342 = scmp.ne.s32.totalorder %s330, %s331
      %p343 = scmp.eq.s32.totalorder %s34, 1
      %p344 = por %p342, %p343
      %p346 = scmp.ne.s32.totalorder %s331, %s345
      %p347 = scmp.eq.s32.totalorder %s34, 0
      %p348 = por %p346, %p347
      %s350 = sadd.s32 %s349, 1
      %p353 = scmp.eq.s32.totalorder %s28, 1
      %p354 = scmp.ne.s32.totalorder %s349, %s351
      %p355 = scmp.eq.s32.totalorder %s28, 0
      %p356 = por %p354, %p355
      %p357 = scmp.ne.s32.totalorder %s349, %s351
      %p358 = scmp.eq.s32.totalorder %s33, 1
      %p359 = por %p357, %p358
      %p360 = scmp.ne.s32.totalorder %s351, %s352
      %p361 = scmp.eq.s32.totalorder %s33, 0
      %p362 = por %p360, %p361
      %p363 = scmp.ne.s32.totalorder %s351, %s352
      %p364 = scmp.eq.s32.totalorder %s34, 1
      %p365 = por %p363, %p364
      %p367 = scmp.ne.s32.totalorder %s352, %s366
      %p368 = scmp.eq.s32.totalorder %s34, 0
      %p369 = por %p367, %p368
      %s371 = sadd.s32 %s370, 1
      %p374 = scmp.eq.s32.totalorder %s28, 1
      %p375 = scmp.ne.s32.totalorder %s370, %s372
      %p376 = scmp.eq.s32.totalorder %s28, 0
      %p377 = por %p375, %p376
      %p378 = scmp.ne.s32.totalorder %s370, %s372
      %p379 = scmp.eq.s32.totalorder %s33, 1
      %p380 = por %p378, %p379
      %p381 = scmp.ne.s32.totalorder %s372, %s373
      %p382 = scmp.eq.s32.totalorder %s33, 0
      %p383 = por %p381, %p382
      %p384 = scmp.ne.s32.totalorder %s372, %s373
      %p385 = scmp.eq.s32.totalorder %s34, 1
      %p386 = por %p384, %p385
      %p388 = scmp.ne.s32.totalorder %s373, %s387
      %p389 = scmp.eq.s32.totalorder %s34, 0
      %p390 = por %p388, %p389
      %s391 = ssub.s32 %s35, %s47
      %s392 = ssub.s32 %s36, %s43
      %s393 = sor.u32 %s391, %s392
      %p394 = scmp.eq.s32.totalorder %s393, 0
      %s396 = sadd.s32 %s395, 1
      %s397 = scalar_select %p394, %s395, %s396
      %p400 = pneg %p394
      %p401 = scmp.eq.s32.totalorder %s28, 1
      %p402 = por %p400, %p401
      %p403 = scmp.ne.s32.totalorder %s395, %s398
      %p404 = scmp.eq.s32.totalorder %s28, 0
      %p405 = por %p403, %p404
      %p406 = scmp.ne.s32.totalorder %s395, %s398
      %p407 = scmp.eq.s32.totalorder %s33, 1
      %p408 = por %p406, %p407
      %p409 = scmp.ne.s32.totalorder %s398, %s399
      %p410 = scmp.eq.s32.totalorder %s33, 0
      %p411 = por %p409, %p410
      %p412 = scmp.ne.s32.totalorder %s398, %s399
      %p413 = scmp.eq.s32.totalorder %s34, 1
      %p414 = por %p412, %p413
      %p416 = scmp.ne.s32.totalorder %s399, %s415
      %p417 = scmp.eq.s32.totalorder %s34, 0
      %p418 = por %p416, %p417
      %p419 = scmp.le.s32.totalorder 1, %s28
      %p420 = scmp.lt.s32.totalorder %s28, 3
      %p421 = pnand %p419, %p420
      %p422 = pneg %p421
      // Predicated region
      $region9: #{tpu_custom_call.1} parent=5 // pred_check
        _
      $region10: #{tpu_custom_call.1} parent=5 // pred_check_branch
        %424 = sbr.rel (%p421) target = $region12
      $region11: #{tpu_custom_call.1} parent=5 // pred_region
        %s425 = ssub.s32 %s28, 1
        // Predicated region
        $region13: #{tpu_custom_call.1} parent=11 // pred_check
          %p426 = pneg %p89
        $region14: #{tpu_custom_call.1} parent=11 // pred_check_branch
          %428 = sbr.rel (%p426) target = $region16
        $region15: #{tpu_custom_call.1} parent=11 // pred_region
          %s430 = ssub.s32 5120, 5120
          %431 = vsyncadd [#allocation3], %s430
          %s432 = sshll.u32 [#allocation2], 4
          %s433 = int_to_ptr.vmem [resolvable:$true] %s432
          %438 = dma.hbm_to_vmem [thread:$0]  %s1, 5120, %s433, [#allocation3], 64, 64, 4
        $region16: #{tpu_custom_call.1} parent=11 // pred_fallthru
          _
        // Predicated region
        $region17: #{tpu_custom_call.1} parent=11 // pred_check
          %p439 = pneg %p110
        $region18: #{tpu_custom_call.1} parent=11 // pred_check_branch
          %441 = sbr.rel (%p439) target = $region20
        $region19: #{tpu_custom_call.1} parent=11 // pred_region
          _
        $region20: #{tpu_custom_call.1} parent=11 // pred_fallthru
          _
        // Predicated region
        $region21: #{tpu_custom_call.1} parent=11 // pred_check
          %p442 = pneg %p131
        $region22: #{tpu_custom_call.1} parent=11 // pred_check_branch
          %444 = sbr.rel (%p442) target = $region24
        $region23: #{tpu_custom_call.1} parent=11 // pred_region
          _
        $region24: #{tpu_custom_call.1} parent=11 // pred_fallthru
          _
        // Predicated region
        $region25: #{tpu_custom_call.1} parent=11 // pred_check
          %p445 = pneg %p152
        $region26: #{tpu_custom_call.1} parent=11 // pred_check_branch
          %447 = sbr.rel (%p445) target = $region28
        $region27: #{tpu_custom_call.1} parent=11 // pred_region
          %s449 = ssub.s32 5120, 5120
          %450 = vsyncadd [#allocation6], %s449
          %s451 = sshll.u32 [#allocation5], 4
          %s452 = int_to_ptr.vmem [resolvable:$true] %s451
          %457 = dma.hbm_to_vmem [thread:$0]  %s4, 5120, %s452, [#allocation6], 64, 64, 4
        $region28: #{tpu_custom_call.1} parent=11 // pred_fallthru
          _
        // Predicated region
        $region29: #{tpu_custom_call.1} parent=11 // pred_check
          %p458 = pneg %p173
        $region30: #{tpu_custom_call.1} parent=11 // pred_check_branch
          %460 = sbr.rel (%p458) target = $region32
        $region31: #{tpu_custom_call.1} parent=11 // pred_region
          _
        $region32: #{tpu_custom_call.1} parent=11 // pred_fallthru
          _
        // Predicated region
        $region33: #{tpu_custom_call.1} parent=11 // pred_check
          %p461 = pneg %p194
        $region34: #{tpu_custom_call.1} parent=11 // pred_check_branch
          %463 = sbr.rel (%p461) target = $region36
        $region35: #{tpu_custom_call.1} parent=11 // pred_region
          _
        $region36: #{tpu_custom_call.1} parent=11 // pred_fallthru
          _
        // Predicated region
        $region37: #{tpu_custom_call.1} parent=11 // pred_check
          %p464 = pneg %p215
        $region38: #{tpu_custom_call.1} parent=11 // pred_check_branch
          %466 = sbr.rel (%p464) target = $region40
        $region39: #{tpu_custom_call.1} parent=11 // pred_region
          %s468 = ssub.s32 5120, 5120
          %469 = vsyncadd [#allocation6], %s468
          %s470 = sshll.u32 [#allocation7], 4
          %s471 = int_to_ptr.vmem [resolvable:$true] %s470
          %476 = dma.hbm_to_vmem [thread:$0]  %s7, 5120, %s471, [#allocation6], 64, 64, 4
        $region40: #{tpu_custom_call.1} parent=11 // pred_fallthru
          _
        // Predicated region
        $region41: #{tpu_custom_call.1} parent=11 // pred_check
          %p477 = pneg %p236
        $region42: #{tpu_custom_call.1} parent=11 // pred_check_branch
          %479 = sbr.rel (%p477) target = $region44
        $region43: #{tpu_custom_call.1} parent=11 // pred_region
          _
        $region44: #{tpu_custom_call.1} parent=11 // pred_fallthru
          _
        // Predicated region
        $region45: #{tpu_custom_call.1} parent=11 // pred_check
          %p480 = pneg %p257
        $region46: #{tpu_custom_call.1} parent=11 // pred_check_branch
          %482 = sbr.rel (%p480) target = $region48
        $region47: #{tpu_custom_call.1} parent=11 // pred_region
          _
        $region48: #{tpu_custom_call.1} parent=11 // pred_fallthru
          _
        // Predicated region
        $region49: #{tpu_custom_call.1} parent=11 // pred_check
          %p483 = pneg %p278
        $region50: #{tpu_custom_call.1} parent=11 // pred_check_branch
          %485 = sbr.rel (%p483) target = $region52
        $region51: #{tpu_custom_call.1} parent=11 // pred_region
          %s487 = ssub.s32 5120, 5120
          %488 = vsyncadd [#allocation9], %s487
          %s489 = sshll.u32 [#allocation8], 4
          %s490 = int_to_ptr.vmem [resolvable:$true] %s489
          %495 = dma.hbm_to_vmem [thread:$0]  %s10, 5120, %s490, [#allocation9], 64, 64, 4
        $region52: #{tpu_custom_call.1} parent=11 // pred_fallthru
          _
        // Predicated region
        $region53: #{tpu_custom_call.1} parent=11 // pred_check
          %p496 = pneg %p299
        $region54: #{tpu_custom_call.1} parent=11 // pred_check_branch
          %498 = sbr.rel (%p496) target = $region56
        $region55: #{tpu_custom_call.1} parent=11 // pred_region
          _
        $region56: #{tpu_custom_call.1} parent=11 // pred_fallthru
          _
        // Predicated region
        $region57: #{tpu_custom_call.1} parent=11 // pred_check
          %p499 = pneg %p320
        $region58: #{tpu_custom_call.1} parent=11 // pred_check_branch
          %501 = sbr.rel (%p499) target = $region60
        $region59: #{tpu_custom_call.1} parent=11 // pred_region
          _
        $region60: #{tpu_custom_call.1} parent=11 // pred_fallthru
          _
        // Predicated region
        $region61: #{tpu_custom_call.1} parent=11 // pred_check
          %p502 = pneg %p341
        $region62: #{tpu_custom_call.1} parent=11 // pred_check_branch
          %504 = sbr.rel (%p502) target = $region64
        $region63: #{tpu_custom_call.1} parent=11 // pred_region
          %s506 = ssub.s32 5120, 5120
          %507 = vsyncadd [#allocation9], %s506
          %s508 = sshll.u32 [#allocation10], 4
          %s509 = int_to_ptr.vmem [resolvable:$true] %s508
          %514 = dma.hbm_to_vmem [thread:$0]  %s13, 5120, %s509, [#allocation9], 64, 64, 4
        $region64: #{tpu_custom_call.1} parent=11 // pred_fallthru
          _
        // Predicated region
        $region65: #{tpu_custom_call.1} parent=11 // pred_check
          %p515 = pneg %p362
        $region66: #{tpu_custom_call.1} parent=11 // pred_check_branch
          %517 = sbr.rel (%p515) target = $region68
        $region67: #{tpu_custom_call.1} parent=11 // pred_region
          _
        $region68: #{tpu_custom_call.1} parent=11 // pred_fallthru
          _
        // Predicated region
        $region69: #{tpu_custom_call.1} parent=11 // pred_check
          %p518 = pneg %p383
        $region70: #{tpu_custom_call.1} parent=11 // pred_check_branch
          %520 = sbr.rel (%p518) target = $region72
        $region71: #{tpu_custom_call.1} parent=11 // pred_region
          _
        $region72: #{tpu_custom_call.1} parent=11 // pred_fallthru
          _
      $region12: #{tpu_custom_call.1} parent=5 // pred_fallthru
        _
      %p521 = scmp.lt.s32.totalorder %s28, 2
      // Predicated region
      $region73: #{tpu_custom_call.1} parent=5 // pred_check
        %p522 = pneg %p521
      $region74: #{tpu_custom_call.1} parent=5 // pred_check_branch
        %524 = sbr.rel (%p522) target = $region76
      $region75: #{tpu_custom_call.1} parent=5 // pred_region
        // Predicated region
        $region77: #{tpu_custom_call.1} parent=75 // pred_check
          %p525 = pneg %p62
        $region78: #{tpu_custom_call.1} parent=75 // pred_check_branch
          %527 = sbr.rel (%p525) target = $region80
        $region79: #{tpu_custom_call.1} parent=75 // pred_region
          %p528 = scmp.lt.s32.totalorder %s35, 1
          %s529 = scalar_select %p528, %s35, 1
          %p530 = scmp.lt.s32.totalorder %s36, 0
          %s531 = scalar_select %p530, %s36, 0
          %s532 = smul.addr %s531, 5
          %s533 = smul.addr %s529, 5
          %s534 = sadd.s32 %s532, %s533
          %s535 = smul.addr %s534, 4
          %s536 = scalar_lea.vmem %s0, %s535
        $region80: #{tpu_custom_call.1} parent=75 // pred_fallthru
          _
      $region76: #{tpu_custom_call.1} parent=5 // pred_fallthru
        _
      %p537 = scmp.le.s32.totalorder 1, %s28
      %p538 = scmp.lt.s32.totalorder %s28, 3
      %p539 = pnand %p537, %p538
      %p540 = pneg %p539
      // Predicated region
      $region81: #{tpu_custom_call.1} parent=5 // pred_check
        _
      $region82: #{tpu_custom_call.1} parent=5 // pred_check_branch
        %542 = sbr.rel (%p539) target = $region84
      $region83: #{tpu_custom_call.1} parent=5 // pred_region
        %s543 = ssub.s32 %s28, 1
        // Predicated region
        $region85: #{tpu_custom_call.1} parent=83 // pred_check
          %p544 = pneg %p89
        $region86: #{tpu_custom_call.1} parent=83 // pred_check_branch
          %546 = sbr.rel (%p544) target = $region88
        $region87: #{tpu_custom_call.1} parent=83 // pred_region
          %547 = dma.done [#allocation3], 5120
        $region88: #{tpu_custom_call.1} parent=83 // pred_fallthru
          _
        // Predicated region
        $region89: #{tpu_custom_call.1} parent=83 // pred_check
          %p548 = pneg %p152
        $region90: #{tpu_custom_call.1} parent=83 // pred_check_branch
          %550 = sbr.rel (%p548) target = $region92
        $region91: #{tpu_custom_call.1} parent=83 // pred_region
          %551 = dma.done [#allocation6], 5120
        $region92: #{tpu_custom_call.1} parent=83 // pred_fallthru
          _
        // Predicated region
        $region93: #{tpu_custom_call.1} parent=83 // pred_check
          %p552 = pneg %p215
        $region94: #{tpu_custom_call.1} parent=83 // pred_check_branch
          %554 = sbr.rel (%p552) target = $region96
        $region95: #{tpu_custom_call.1} parent=83 // pred_region
          %555 = dma.done [#allocation6], 5120
        $region96: #{tpu_custom_call.1} parent=83 // pred_fallthru
          _
        // Predicated region
        $region97: #{tpu_custom_call.1} parent=83 // pred_check
          %p556 = pneg %p278
        $region98: #{tpu_custom_call.1} parent=83 // pred_check_branch
          %558 = sbr.rel (%p556) target = $region100
        $region99: #{tpu_custom_call.1} parent=83 // pred_region
          %559 = dma.done [#allocation9], 5120
        $region100: #{tpu_custom_call.1} parent=83 // pred_fallthru
          _
        // Predicated region
        $region101: #{tpu_custom_call.1} parent=83 // pred_check
          %p560 = pneg %p341
        $region102: #{tpu_custom_call.1} parent=83 // pred_check_branch
          %562 = sbr.rel (%p560) target = $region104
        $region103: #{tpu_custom_call.1} parent=83 // pred_region
          %563 = dma.done [#allocation9], 5120
        $region104: #{tpu_custom_call.1} parent=83 // pred_fallthru
          _
        %p564 = scmp.lt.s32.totalorder %s37, 1
        %s565 = scalar_select %p564, %s37, 1
        %p566 = scmp.lt.s32.totalorder %s38, 0
        %s567 = scalar_select %p566, %s38, 0
        %s568 = smul.addr %s567, 5
        %s569 = smul.addr %s565, 5
        %s570 = sadd.s32 %s568, %s569
        %s571 = smul.addr %s570, 4
        %s572 = scalar_lea.vmem %s0, %s571
        %p573 = pneg %p68
        %p574 = pneg %p65
        %p575 = pneg %p89
        %p576 = pneg %p86
        %p577 = pneg %p110
        %p578 = pneg %p107
        %p579 = pneg %p131
        %p580 = pneg %p128
        %p581 = pneg %p152
        %p582 = pneg %p149
        %p583 = pneg %p173
        %p584 = pneg %p170
        %p585 = pneg %p194
        %p586 = pneg %p191
        %p587 = pneg %p215
        %p588 = pneg %p212
        %p589 = pneg %p236
        %p590 = pneg %p233
        %p591 = pneg %p257
        %p592 = pneg %p254
        %p593 = pneg %p278
        %p594 = pneg %p275
        %p595 = pneg %p299
        %p596 = pneg %p296
        %p597 = pneg %p320
        %p598 = pneg %p317
        %p599 = pneg %p341
        %p600 = pneg %p338
        %p601 = pneg %p362
        %p602 = pneg %p359
        %p603 = pneg %p383
        %p604 = pneg %p380
        %p605 = pneg %p411
        %p606 = pneg %p408
        %s607 = sand.u32 %s398, 1
        %s608 = scalar_lea.sflag [#allocation4], %s607
        %s609 = sand.u32 %s398, 1
        %s610 = smul.addr %s609, 16
        %s611 = scalar_lea.vmem [#allocation11], %s610
        %p612 = scmp.lt.s32.totalorder %s37, 1
        %s613 = scalar_select %p612, %s37, 1
        %p614 = scmp.lt.s32.totalorder %s38, 0
        %s615 = scalar_select %p614, %s38, 0
        %s616 = smul.addr %s615, 5
        %s617 = smul.addr %s613, 5
        %s618 = sadd.s32 %s616, %s617
        %s619 = smul.addr %s618, 4
        %s620 = scalar_lea.vmem %s0, %s619
        %s622 = smul.u32 %s38, 16
        %v623 = vld [vmem:[%s620] sm:$0xf]
        %v624 = vld [vmem:[%s620 + $0x4] sm:$0xf]
        %v625 = vld [vmem:[%s620 + $0x8] sm:$0xf]
        %v626 = vld [vmem:[%s620 + $0xc] sm:$0xf]
        %v627 = vld [vmem:[%s620 + $0x10] sm:$0x3]
        %v628 = vld [vmem:[#allocation2] sm:$0xf]
        %v629 = vld [vmem:[#allocation2 + $0x4] sm:$0xf]
        %v630 = vld [vmem:[#allocation2 + $0x8] sm:$0xf]
        %v631 = vld [vmem:[#allocation2 + $0xc] sm:$0xf]
        %v632 = vld [vmem:[#allocation2 + $0x10] sm:$0xf]
        %v633 = vld [vmem:[#allocation2 + $0x14] sm:$0xf]
        %v634 = vld [vmem:[#allocation2 + $0x18] sm:$0xf]
        %v635 = vld [vmem:[#allocation2 + $0x1c] sm:$0xf]
        %v636 = vld [vmem:[#allocation2 + $0x20] sm:$0xf]
        %v637 = vld [vmem:[#allocation2 + $0x24] sm:$0xf]
        %v638 = vld [vmem:[#allocation2 + $0x28] sm:$0xf]
        %v639 = vld [vmem:[#allocation2 + $0x2c] sm:$0xf]
        %v640 = vld [vmem:[#allocation2 + $0x30] sm:$0xf]
        %v641 = vld [vmem:[#allocation2 + $0x34] sm:$0xf]
        %v642 = vld [vmem:[#allocation2 + $0x38] sm:$0xf]
        %v643 = vld [vmem:[#allocation2 + $0x3c] sm:$0xf]
        %s644 = scalar_lea.vmem [#allocation2], 64
        %v645 = vld [vmem:[%s644] sm:$0xf]
        %v646 = vld [vmem:[%s644 + $0x4] sm:$0xf]
        %v647 = vld [vmem:[%s644 + $0x8] sm:$0xf]
        %v648 = vld [vmem:[%s644 + $0xc] sm:$0xf]
        %v649 = vld [vmem:[%s644 + $0x10] sm:$0xf]
        %v650 = vld [vmem:[%s644 + $0x14] sm:$0xf]
        %v651 = vld [vmem:[%s644 + $0x18] sm:$0xf]
        %v652 = vld [vmem:[%s644 + $0x1c] sm:$0xf]
        %v653 = vld [vmem:[%s644 + $0x20] sm:$0xf]
        %v654 = vld [vmem:[%s644 + $0x24] sm:$0xf]
        %v655 = vld [vmem:[%s644 + $0x28] sm:$0xf]
        %v656 = vld [vmem:[%s644 + $0x2c] sm:$0xf]
        %v657 = vld [vmem:[%s644 + $0x30] sm:$0xf]
        %v658 = vld [vmem:[%s644 + $0x34] sm:$0xf]
        %v659 = vld [vmem:[%s644 + $0x38] sm:$0xf]
        %v660 = vld [vmem:[%s644 + $0x3c] sm:$0xf]
        %v666 = vunpack.c.l.b16 %v623
        %v667 = vunpack.c.l.b16 %v624
        %v668 = vunpack.c.l.b16 %v625
        %v669 = vunpack.c.l.b16 %v626
        %v670 = vunpack.c.l.b16 %v627
        %v671 = vpack.c.b16 %v667, %v666
        %v672 = vpack.c.b16 %v669, %v668
        %v673 = vpack.c.b16 %v670, %v670
        %vm674 = vsmask.f32 7424
        %v676 = vshrl.u32 %v671, 16
        %v678 = vshll.u32 %v671, 16
        %v680 = vrot.slane %v678, 1
        %v681 = vor.u32 %v676, %v680
        %v683 = vshll.u32 %v672, 16
        %v685 = vrot.slane %v683, 1
        %v686 = vsel %vm674, %v681, %v685
        %v687 = vshrl.u32 %v672, 16
        %v689 = vor.u32 %v687, %v685
        %v691 = vshll.u32 %v673, 16
        %v693 = vrot.slane %v691, 1
        %v694 = vsel %vm674, %v689, %v693
        %v713 = vunpack.c.l.b16 %v645
        %v714 = vunpack.c.l.b16 %v646
        %v715 = vunpack.c.l.b16 %v647
        %v716 = vunpack.c.l.b16 %v648
        %v717 = vunpack.c.l.b16 %v649
        %v718 = vunpack.c.l.b16 %v650
        %v719 = vunpack.c.l.b16 %v651
        %v720 = vunpack.c.l.b16 %v652
        %v721 = vunpack.c.l.b16 %v653
        %v722 = vunpack.c.l.b16 %v654
        %v723 = vunpack.c.l.b16 %v655
        %v724 = vunpack.c.l.b16 %v656
        %v725 = vunpack.c.l.b16 %v657
        %v726 = vunpack.c.l.b16 %v658
        %v727 = vunpack.c.l.b16 %v659
        %v728 = vunpack.c.l.b16 %v660
        %v729 = vpack.c.b16 %v714, %v713
        %v730 = vpack.c.b16 %v716, %v715
        %v731 = vpack.c.b16 %v718, %v717
        %v732 = vpack.c.b16 %v720, %v719
        %v733 = vpack.c.b16 %v722, %v721
        %v734 = vpack.c.b16 %v724, %v723
        %v735 = vpack.c.b16 %v726, %v725
        %v736 = vpack.c.b16 %v728, %v727
        %745 = vmatprep.subr.bf16.mxu0 0
        %746 = vmatpush1.bf16.msra.mxu0 %v729
        %747 = vmatprep.subr.bf16.mxu0 0
        %748 = vmatpush1.bf16.msra.mxu0 %v730
        %749 = vmatprep.subr.bf16.mxu0 0
        %750 = vmatpush1.bf16.msra.mxu0 %v731
        %751 = vmatprep.subr.bf16.mxu0 0
        %752 = vmatpush1.bf16.msra.mxu0 %v732
        %753 = vmatprep.subr.bf16.mxu0 0
        %754 = vmatpush1.bf16.msra.mxu0 %v733
        %755 = vmatprep.subr.bf16.mxu0 0
        %756 = vmatpush1.bf16.msra.mxu0 %v734
        %757 = vmatprep.subr.bf16.mxu0 0
        %758 = vmatpush1.bf16.msra.mxu0 %v735
        %759 = vmatprep.subr.bf16.mxu0 0
        %760 = vmatpush1.bf16.msra.mxu0 %v736
        %761 = vmatprep.subr.bf16.mxu0 0
        %762 = vmatpush1.bf16.msra.mxu0 0
        %763 = vmatprep.subr.bf16.mxu0 0
        %764 = vmatpush1.bf16.msra.mxu0 0
        %765 = vmatprep.subr.bf16.mxu0 0
        %766 = vmatpush1.bf16.msra.mxu0 0
        %767 = vmatprep.subr.bf16.mxu0 0
        %768 = vmatpush1.bf16.msra.mxu0 0
        %769 = vmatprep.subr.bf16.mxu0 0
        %770 = vmatpush1.bf16.msra.mxu0 0
        %771 = vmatprep.subr.bf16.mxu0 0
        %772 = vmatpush1.bf16.msra.mxu0 0
        %773 = vmatprep.subr.bf16.mxu0 0
        %774 = vmatpush1.bf16.msra.mxu0 0
        %775 = vmatprep.subr.bf16.mxu0 0
        %776 = vmatpush1.bf16.msra.mxu0 0
        %777 = vmatprep.mubr.bf16.mxu0 0
        %778 = vmatmul.mubr.bf16.gmra.mrb[0].mxu0 %v686
        %v779 = vpop.f32.mrb[0].mxu0
        %v780 = vadd.f32 0.0, %v779
        %v781 = vpop.f32.mrb[0].mxu0
        %v782 = vpop.f32.mrb[0].mxu0
        %v783 = vadd.f32 0.0, %v782
        %v784 = vpop.f32.mrb[0].mxu0
        %785 = vmatprep.mubr.bf16.mxu0 0
        %786 = vmatmul.mubr.bf16.gmra.mrb[0].mxu0 %v694
        %v787 = vpop.f32.mrb[0].mxu0
        %v788 = vadd.f32 0.0, %v787
        %v789 = vpop.f32.mrb[0].mxu0
        %v790 = vpop.f32.mrb[0].mxu0
        %v791 = vadd.f32 0.0, %v790
        %v792 = vpop.f32.mrb[0].mxu0
        %793 = vdwg.mxu0
        %v812 = vunpack.c.l.b16 %v628
        %v813 = vunpack.c.l.b16 %v629
        %v814 = vunpack.c.l.b16 %v630
        %v815 = vunpack.c.l.b16 %v631
        %v816 = vunpack.c.l.b16 %v632
        %v817 = vunpack.c.l.b16 %v633
        %v818 = vunpack.c.l.b16 %v634
        %v819 = vunpack.c.l.b16 %v635
        %v820 = vunpack.c.l.b16 %v636
        %v821 = vunpack.c.l.b16 %v637
        %v822 = vunpack.c.l.b16 %v638
        %v823 = vunpack.c.l.b16 %v639
        %v824 = vunpack.c.l.b16 %v640
        %v825 = vunpack.c.l.b16 %v641
        %v826 = vunpack.c.l.b16 %v642
        %v827 = vunpack.c.l.b16 %v643
        %v828 = vpack.c.b16 %v813, %v812
        %v829 = vpack.c.b16 %v815, %v814
        %v830 = vpack.c.b16 %v817, %v816
        %v831 = vpack.c.b16 %v819, %v818
        %v832 = vpack.c.b16 %v821, %v820
        %v833 = vpack.c.b16 %v823, %v822
        %v834 = vpack.c.b16 %v825, %v824
        %v835 = vpack.c.b16 %v827, %v826
        %844 = vmatprep.subr.bf16.mxu0 0
        %845 = vmatpush1.bf16.msra.mxu0 %v828
        %846 = vmatprep.subr.bf16.mxu0 0
        %847 = vmatpush1.bf16.msra.mxu0 %v829
        %848 = vmatprep.subr.bf16.mxu0 0
        %849 = vmatpush1.bf16.msra.mxu0 %v830
        %850 = vmatprep.subr.bf16.mxu0 0
        %851 = vmatpush1.bf16.msra.mxu0 %v831
        %852 = vmatprep.subr.bf16.mxu0 0
        %853 = vmatpush1.bf16.msra.mxu0 %v832
        %854 = vmatprep.subr.bf16.mxu0 0
        %855 = vmatpush1.bf16.msra.mxu0 %v833
        %856 = vmatprep.subr.bf16.mxu0 0
        %857 = vmatpush1.bf16.msra.mxu0 %v834
        %858 = vmatprep.subr.bf16.mxu0 0
        %859 = vmatpush1.bf16.msra.mxu0 %v835
        %860 = vmatprep.subr.bf16.mxu0 0
        %861 = vmatpush1.bf16.msra.mxu0 0
        %862 = vmatprep.subr.bf16.mxu0 0
        %863 = vmatpush1.bf16.msra.mxu0 0
        %864 = vmatprep.subr.bf16.mxu0 0
        %865 = vmatpush1.bf16.msra.mxu0 0
        %866 = vmatprep.subr.bf16.mxu0 0
        %867 = vmatpush1.bf16.msra.mxu0 0
        %868 = vmatprep.subr.bf16.mxu0 0
        %869 = vmatpush1.bf16.msra.mxu0 0
        %870 = vmatprep.subr.bf16.mxu0 0
        %871 = vmatpush1.bf16.msra.mxu0 0
        %872 = vmatprep.subr.bf16.mxu0 0
        %873 = vmatpush1.bf16.msra.mxu0 0
        %874 = vmatprep.subr.bf16.mxu0 0
        %875 = vmatpush1.bf16.msra.mxu0 0
        %876 = vmatprep.mubr.bf16.mxu0 0
        %877 = vmatmul.mubr.bf16.gmra.mrb[0].mxu0 %v671
        %v878 = vpop.f32.mrb[0].mxu0
        %v879 = vadd.f32 %v780, %v878
        %v880 = vpop.f32.mrb[0].mxu0
        %v881 = vpop.f32.mrb[0].mxu0
        %v882 = vadd.f32 %v783, %v881
        %v883 = vpop.f32.mrb[0].mxu0
        %884 = vmatprep.mubr.bf16.mxu0 0
        %885 = vmatmul.mubr.bf16.gmra.mrb[0].mxu0 %v672
        %v886 = vpop.f32.mrb[0].mxu0
        %v887 = vadd.f32 %v788, %v886
        %v888 = vpop.f32.mrb[0].mxu0
        %v889 = vpop.f32.mrb[0].mxu0
        %v890 = vadd.f32 %v791, %v889
        %v891 = vpop.f32.mrb[0].mxu0
        %892 = vdwg.mxu0
        %s893 = scalar_lea.vmem [#allocation2], 128
        %v894 = vld [vmem:[%s893] sm:$0xf]
        %v895 = vld [vmem:[%s893 + $0x4] sm:$0xf]
        %v896 = vld [vmem:[%s893 + $0x8] sm:$0xf]
        %v897 = vld [vmem:[%s893 + $0xc] sm:$0xf]
        %v898 = vld [vmem:[%s893 + $0x10] sm:$0xf]
        %v899 = vld [vmem:[%s893 + $0x14] sm:$0xf]
        %v900 = vld [vmem:[%s893 + $0x18] sm:$0xf]
        %v901 = vld [vmem:[%s893 + $0x1c] sm:$0xf]
        %v902 = vld [vmem:[%s893 + $0x20] sm:$0xf]
        %v903 = vld [vmem:[%s893 + $0x24] sm:$0xf]
        %v904 = vld [vmem:[%s893 + $0x28] sm:$0xf]
        %v905 = vld [vmem:[%s893 + $0x2c] sm:$0xf]
        %v906 = vld [vmem:[%s893 + $0x30] sm:$0xf]
        %v907 = vld [vmem:[%s893 + $0x34] sm:$0xf]
        %v908 = vld [vmem:[%s893 + $0x38] sm:$0xf]
        %v909 = vld [vmem:[%s893 + $0x3c] sm:$0xf]
        %vm910 = vcmask 1046528
        %v911 = vrot.slane %v671, 1
        %v912 = vrot.slane %v672, 1
        %v913 = vsel %vm910, %v911, %v912
        %v914 = vrot.slane %v673, 1
        %v915 = vsel %vm910, %v912, %v914
        %v934 = vunpack.c.l.b16 %v894
        %v935 = vunpack.c.l.b16 %v895
        %v936 = vunpack.c.l.b16 %v896
        %v937 = vunpack.c.l.b16 %v897
        %v938 = vunpack.c.l.b16 %v898
        %v939 = vunpack.c.l.b16 %v899
        %v940 = vunpack.c.l.b16 %v900
        %v941 = vunpack.c.l.b16 %v901
        %v942 = vunpack.c.l.b16 %v902
        %v943 = vunpack.c.l.b16 %v903
        %v944 = vunpack.c.l.b16 %v904
        %v945 = vunpack.c.l.b16 %v905
        %v946 = vunpack.c.l.b16 %v906
        %v947 = vunpack.c.l.b16 %v907
        %v948 = vunpack.c.l.b16 %v908
        %v949 = vunpack.c.l.b16 %v909
        %v950 = vpack.c.b16 %v935, %v934
        %v951 = vpack.c.b16 %v937, %v936
        %v952 = vpack.c.b16 %v939, %v938
        %v953 = vpack.c.b16 %v941, %v940
        %v954 = vpack.c.b16 %v943, %v942
        %v955 = vpack.c.b16 %v945, %v944
        %v956 = vpack.c.b16 %v947, %v946
        %v957 = vpack.c.b16 %v949, %v948
        %966 = vmatprep.subr.bf16.mxu0 0
        %967 = vmatpush1.bf16.msra.mxu0 %v950
        %968 = vmatprep.subr.bf16.mxu0 0
        %969 = vmatpush1.bf16.msra.mxu0 %v951
        %970 = vmatprep.subr.bf16.mxu0 0
        %971 = vmatpush1.bf16.msra.mxu0 %v952
        %972 = vmatprep.subr.bf16.mxu0 0
        %973 = vmatpush1.bf16.msra.mxu0 %v953
        %974 = vmatprep.subr.bf16.mxu0 0
        %975 = vmatpush1.bf16.msra.mxu0 %v954
        %976 = vmatprep.subr.bf16.mxu0 0
        %977 = vmatpush1.bf16.msra.mxu0 %v955
        %978 = vmatprep.subr.bf16.mxu0 0
        %979 = vmatpush1.bf16.msra.mxu0 %v956
        %980 = vmatprep.subr.bf16.mxu0 0
        %981 = vmatpush1.bf16.msra.mxu0 %v957
        %982 = vmatprep.subr.bf16.mxu0 0
        %983 = vmatpush1.bf16.msra.mxu0 0
        %984 = vmatprep.subr.bf16.mxu0 0
        %985 = vmatpush1.bf16.msra.mxu0 0
        %986 = vmatprep.subr.bf16.mxu0 0
        %987 = vmatpush1.bf16.msra.mxu0 0
        %988 = vmatprep.subr.bf16.mxu0 0
        %989 = vmatpush1.bf16.msra.mxu0 0
        %990 = vmatprep.subr.bf16.mxu0 0
        %991 = vmatpush1.bf16.msra.mxu0 0
        %992 = vmatprep.subr.bf16.mxu0 0
        %993 = vmatpush1.bf16.msra.mxu0 0
        %994 = vmatprep.subr.bf16.mxu0 0
        %995 = vmatpush1.bf16.msra.mxu0 0
        %996 = vmatprep.subr.bf16.mxu0 0
        %997 = vmatpush1.bf16.msra.mxu0 0
        %998 = vmatprep.mubr.bf16.mxu0 0
        %999 = vmatmul.mubr.bf16.gmra.mrb[0].mxu0 %v913
        %v1000 = vpop.f32.mrb[0].mxu0
        %v1001 = vadd.f32 0.0, %v1000
        %v1002 = vpop.f32.mrb[0].mxu0
        %v1003 = vpop.f32.mrb[0].mxu0
        %v1004 = vadd.f32 0.0, %v1003
        %v1005 = vpop.f32.mrb[0].mxu0
        %1006 = vmatprep.mubr.bf16.mxu0 0
        %1007 = vmatmul.mubr.bf16.gmra.mrb[0].mxu0 %v915
        %v1008 = vpop.f32.mrb[0].mxu0
        %v1009 = vadd.f32 0.0, %v1008
        %v1010 = vpop.f32.mrb[0].mxu0
        %v1011 = vpop.f32.mrb[0].mxu0
        %v1012 = vadd.f32 0.0, %v1011
        %v1013 = vpop.f32.mrb[0].mxu0
        %1014 = vdwg.mxu0
        %v1015 = vadd.f32 %v879, %v1001
        %v1016 = vadd.f32 %v882, %v1004
        %v1017 = vadd.f32 %v887, %v1009
        %v1018 = vadd.f32 %v890, %v1012
        %s1019 = scalar_lea.vmem [#allocation2], 192
        %v1020 = vld [vmem:[%s1019] sm:$0xf]
        %v1021 = vld [vmem:[%s1019 + $0x4] sm:$0xf]
        %v1022 = vld [vmem:[%s1019 + $0x8] sm:$0xf]
        %v1023 = vld [vmem:[%s1019 + $0xc] sm:$0xf]
        %v1024 = vld [vmem:[%s1019 + $0x10] sm:$0xf]
        %v1025 = vld [vmem:[%s1019 + $0x14] sm:$0xf]
        %v1026 = vld [vmem:[%s1019 + $0x18] sm:$0xf]
        %v1027 = vld [vmem:[%s1019 + $0x1c] sm:$0xf]
        %v1028 = vld [vmem:[%s1019 + $0x20] sm:$0xf]
        %v1029 = vld [vmem:[%s1019 + $0x24] sm:$0xf]
        %v1030 = vld [vmem:[%s1019 + $0x28] sm:$0xf]
        %v1031 = vld [vmem:[%s1019 + $0x2c] sm:$0xf]
        %v1032 = vld [vmem:[%s1019 + $0x30] sm:$0xf]
        %v1033 = vld [vmem:[%s1019 + $0x34] sm:$0xf]
        %v1034 = vld [vmem:[%s1019 + $0x38] sm:$0xf]
        %v1035 = vld [vmem:[%s1019 + $0x3c] sm:$0xf]
        %vm1036 = vsmask.f32 6400
        %v1037 = vrot.slane %v676, 1
        %v1038 = vrot.slane %v678, 2
        %v1039 = vor.u32 %v1037, %v1038
        %v1040 = vrot.slane %v687, 1
        %v1041 = vrot.slane %v683, 2
        %v1042 = vor.u32 %v1040, %v1041
        %v1043 = vsel %vm1036, %v1039, %v1042
        %v1044 = vshrl.u32 %v673, 16
        %v1046 = vrot.slane %v1044, 1
        %v1047 = vrot.slane %v691, 2
        %v1048 = vor.u32 %v1046, %v1047
        %v1049 = vsel %vm1036, %v1042, %v1048
        %v1068 = vunpack.c.l.b16 %v1020
        %v1069 = vunpack.c.l.b16 %v1021
        %v1070 = vunpack.c.l.b16 %v1022
        %v1071 = vunpack.c.l.b16 %v1023
        %v1072 = vunpack.c.l.b16 %v1024
        %v1073 = vunpack.c.l.b16 %v1025
        %v1074 = vunpack.c.l.b16 %v1026
        %v1075 = vunpack.c.l.b16 %v1027
        %v1076 = vunpack.c.l.b16 %v1028
        %v1077 = vunpack.c.l.b16 %v1029
        %v1078 = vunpack.c.l.b16 %v1030
        %v1079 = vunpack.c.l.b16 %v1031
        %v1080 = vunpack.c.l.b16 %v1032
        %v1081 = vunpack.c.l.b16 %v1033
        %v1082 = vunpack.c.l.b16 %v1034
        %v1083 = vunpack.c.l.b16 %v1035
        %v1084 = vpack.c.b16 %v1069, %v1068
        %v1085 = vpack.c.b16 %v1071, %v1070
        %v1086 = vpack.c.b16 %v1073, %v1072
        %v1087 = vpack.c.b16 %v1075, %v1074
        %v1088 = vpack.c.b16 %v1077, %v1076
        %v1089 = vpack.c.b16 %v1079, %v1078
        %v1090 = vpack.c.b16 %v1081, %v1080
        %v1091 = vpack.c.b16 %v1083, %v1082
        %1100 = vmatprep.subr.bf16.mxu0 0
        %1101 = vmatpush1.bf16.msra.mxu0 %v1084
        %1102 = vmatprep.subr.bf16.mxu0 0
        %1103 = vmatpush1.bf16.msra.mxu0 %v1085
        %1104 = vmatprep.subr.bf16.mxu0 0
        %1105 = vmatpush1.bf16.msra.mxu0 %v1086
        %1106 = vmatprep.subr.bf16.mxu0 0
        %1107 = vmatpush1.bf16.msra.mxu0 %v1087
        %1108 = vmatprep.subr.bf16.mxu0 0
        %1109 = vmatpush1.bf16.msra.mxu0 %v1088
        %1110 = vmatprep.subr.bf16.mxu0 0
        %1111 = vmatpush1.bf16.msra.mxu0 %v1089
        %1112 = vmatprep.subr.bf16.mxu0 0
        %1113 = vmatpush1.bf16.msra.mxu0 %v1090
        %1114 = vmatprep.subr.bf16.mxu0 0
        %1115 = vmatpush1.bf16.msra.mxu0 %v1091
        %1116 = vmatprep.subr.bf16.mxu0 0
        %1117 = vmatpush1.bf16.msra.mxu0 0
        %1118 = vmatprep.subr.bf16.mxu0 0
        %1119 = vmatpush1.bf16.msra.mxu0 0
        %1120 = vmatprep.subr.bf16.mxu0 0
        %1121 = vmatpush1.bf16.msra.mxu0 0
        %1122 = vmatprep.subr.bf16.mxu0 0
        %1123 = vmatpush1.bf16.msra.mxu0 0
        %1124 = vmatprep.subr.bf16.mxu0 0
        %1125 = vmatpush1.bf16.msra.mxu0 0
        %1126 = vmatprep.subr.bf16.mxu0 0
        %1127 = vmatpush1.bf16.msra.mxu0 0
        %1128 = vmatprep.subr.bf16.mxu0 0
        %1129 = vmatpush1.bf16.msra.mxu0 0
        %1130 = vmatprep.subr.bf16.mxu0 0
        %1131 = vmatpush1.bf16.msra.mxu0 0
        %1132 = vmatprep.mubr.bf16.mxu0 0
        %1133 = vmatmul.mubr.bf16.gmra.mrb[0].mxu0 %v1043
        %v1134 = vpop.f32.mrb[0].mxu0
        %v1135 = vadd.f32 0.0, %v1134
        %v1136 = vpop.f32.mrb[0].mxu0
        %v1137 = vpop.f32.mrb[0].mxu0
        %v1138 = vadd.f32 0.0, %v1137
        %v1139 = vpop.f32.mrb[0].mxu0
        %1140 = vmatprep.mubr.bf16.mxu0 0
        %1141 = vmatmul.mubr.bf16.gmra.mrb[0].mxu0 %v1049
        %v1142 = vpop.f32.mrb[0].mxu0
        %v1143 = vadd.f32 0.0, %v1142
        %v1144 = vpop.f32.mrb[0].mxu0
        %v1145 = vpop.f32.mrb[0].mxu0
        %v1146 = vadd.f32 0.0, %v1145
        %v1147 = vpop.f32.mrb[0].mxu0
        %1148 = vdwg.mxu0
        %v1149 = vadd.f32 %v1015, %v1135
        %v1150 = vadd.f32 %v1016, %v1138
        %v1151 = vadd.f32 %v1017, %v1143
        %v1152 = vadd.f32 %v1018, %v1146
        %s1153 = scalar_lea.vmem [#allocation2], 256
        %v1154 = vld [vmem:[%s1153] sm:$0xf]
        %v1155 = vld [vmem:[%s1153 + $0x4] sm:$0xf]
        %v1156 = vld [vmem:[%s1153 + $0x8] sm:$0xf]
        %v1157 = vld [vmem:[%s1153 + $0xc] sm:$0xf]
        %v1158 = vld [vmem:[%s1153 + $0x10] sm:$0xf]
        %v1159 = vld [vmem:[%s1153 + $0x14] sm:$0xf]
        %v1160 = vld [vmem:[%s1153 + $0x18] sm:$0xf]
        %v1161 = vld [vmem:[%s1153 + $0x1c] sm:$0xf]
        %v1162 = vld [vmem:[%s1153 + $0x20] sm:$0xf]
        %v1163 = vld [vmem:[%s1153 + $0x24] sm:$0xf]
        %v1164 = vld [vmem:[%s1153 + $0x28] sm:$0xf]
        %v1165 = vld [vmem:[%s1153 + $0x2c] sm:$0xf]
        %v1166 = vld [vmem:[%s1153 + $0x30] sm:$0xf]
        %v1167 = vld [vmem:[%s1153 + $0x34] sm:$0xf]
        %v1168 = vld [vmem:[%s1153 + $0x38] sm:$0xf]
        %v1169 = vld [vmem:[%s1153 + $0x3c] sm:$0xf]
        %vm1170 = vcmask 1045504
        %v1171 = vrot.slane %v671, 2
        %v1172 = vrot.slane %v672, 2
        %v1173 = vsel %vm1170, %v1171, %v1172
        %v1174 = vrot.slane %v673, 2
        %v1175 = vsel %vm1170, %v1172, %v1174
        %v1194 = vunpack.c.l.b16 %v1154
        %v1195 = vunpack.c.l.b16 %v1155
        %v1196 = vunpack.c.l.b16 %v1156
        %v1197 = vunpack.c.l.b16 %v1157
        %v1198 = vunpack.c.l.b16 %v1158
        %v1199 = vunpack.c.l.b16 %v1159
        %v1200 = vunpack.c.l.b16 %v1160
        %v1201 = vunpack.c.l.b16 %v1161
        %v1202 = vunpack.c.l.b16 %v1162
        %v1203 = vunpack.c.l.b16 %v1163
        %v1204 = vunpack.c.l.b16 %v1164
        %v1205 = vunpack.c.l.b16 %v1165
        %v1206 = vunpack.c.l.b16 %v1166
        %v1207 = vunpack.c.l.b16 %v1167
        %v1208 = vunpack.c.l.b16 %v1168
        %v1209 = vunpack.c.l.b16 %v1169
        %v1210 = vpack.c.b16 %v1195, %v1194
        %v1211 = vpack.c.b16 %v1197, %v1196
        %v1212 = vpack.c.b16 %v1199, %v1198
        %v1213 = vpack.c.b16 %v1201, %v1200
        %v1214 = vpack.c.b16 %v1203, %v1202
        %v1215 = vpack.c.b16 %v1205, %v1204
        %v1216 = vpack.c.b16 %v1207, %v1206
        %v1217 = vpack.c.b16 %v1209, %v1208
        %1226 = vmatprep.subr.bf16.mxu0 0
        %1227 = vmatpush1.bf16.msra.mxu0 %v1210
        %1228 = vmatprep.subr.bf16.mxu0 0
        %1229 = vmatpush1.bf16.msra.mxu0 %v1211
        %1230 = vmatprep.subr.bf16.mxu0 0
        %1231 = vmatpush1.bf16.msra.mxu0 %v1212
        %1232 = vmatprep.subr.bf16.mxu0 0
        %1233 = vmatpush1.bf16.msra.mxu0 %v1213
        %1234 = vmatprep.subr.bf16.mxu0 0
        %1235 = vmatpush1.bf16.msra.mxu0 %v1214
        %1236 = vmatprep.subr.bf16.mxu0 0
        %1237 = vmatpush1.bf16.msra.mxu0 %v1215
        %1238 = vmatprep.subr.bf16.mxu0 0
        %1239 = vmatpush1.bf16.msra.mxu0 %v1216
        %1240 = vmatprep.subr.bf16.mxu0 0
        %1241 = vmatpush1.bf16.msra.mxu0 %v1217
        %1242 = vmatprep.subr.bf16.mxu0 0
        %1243 = vmatpush1.bf16.msra.mxu0 0
        %1244 = vmatprep.subr.bf16.mxu0 0
        %1245 = vmatpush1.bf16.msra.mxu0 0
        %1246 = vmatprep.subr.bf16.mxu0 0
        %1247 = vmatpush1.bf16.msra.mxu0 0
        %1248 = vmatprep.subr.bf16.mxu0 0
        %1249 = vmatpush1.bf16.msra.mxu0 0
        %1250 = vmatprep.subr.bf16.mxu0 0
        %1251 = vmatpush1.bf16.msra.mxu0 0
        %1252 = vmatprep.subr.bf16.mxu0 0
        %1253 = vmatpush1.bf16.msra.mxu0 0
        %1254 = vmatprep.subr.bf16.mxu0 0
        %1255 = vmatpush1.bf16.msra.mxu0 0
        %1256 = vmatprep.subr.bf16.mxu0 0
        %1257 = vmatpush1.bf16.msra.mxu0 0
        %1258 = vmatprep.mubr.bf16.mxu0 0
        %1259 = vmatmul.mubr.bf16.gmra.mrb[0].mxu0 %v1173
        %v1260 = vpop.f32.mrb[0].mxu0
        %v1261 = vadd.f32 0.0, %v1260
        %v1262 = vpop.f32.mrb[0].mxu0
        %v1263 = vpop.f32.mrb[0].mxu0
        %v1264 = vadd.f32 0.0, %v1263
        %v1265 = vpop.f32.mrb[0].mxu0
        %1266 = vmatprep.mubr.bf16.mxu0 0
        %1267 = vmatmul.mubr.bf16.gmra.mrb[0].mxu0 %v1175
        %v1268 = vpop.f32.mrb[0].mxu0
        %v1269 = vadd.f32 0.0, %v1268
        %v1270 = vpop.f32.mrb[0].mxu0
        %v1271 = vpop.f32.mrb[0].mxu0
        %v1272 = vadd.f32 0.0, %v1271
        %v1273 = vpop.f32.mrb[0].mxu0
        %1274 = vdwg.mxu0
        %v1275 = vadd.f32 %v1149, %v1261
        %v1276 = vadd.f32 %v1150, %v1264
        %v1277 = vadd.f32 %v1151, %v1269
        %v1278 = vadd.f32 %v1152, %v1272
        %v1279 = vld [vmem:[%s2] sm:$0x1]
        %v1281 = vlaneseq
        %v1282 = vshrl.u32 %v1281, 7
        %v1283 = vsub.s32 0, %v1282
        %v1284 = vrot.slane %v1279, %v1283
        %v1286 = vmul.f32 %v1275, %v1284
        %v1287 = vmul.f32 %v1276, %v1284
        %v1288 = vmul.f32 %v1277, %v1284
        %v1289 = vmul.f32 %v1278, %v1284
        %v1290 = vld [vmem:[%s3] sm:$0x1]
        %v1292 = vlaneseq
        %v1293 = vshrl.u32 %v1292, 7
        %v1294 = vsub.s32 0, %v1293
        %v1295 = vrot.slane %v1290, %v1294
        %v1297 = vadd.f32 %v1286, %v1295
        %v1298 = vadd.f32 %v1287, %v1295
        %v1299 = vadd.f32 %v1288, %v1295
        %v1300 = vadd.f32 %v1289, %v1295
        %v1301 = vtanh.pop %v1297
        %v1302 = vtanh.pop %v1298
        %v1303 = vtanh.pop %v1299
        %v1304 = vtanh.pop %v1300
        %s1305 = ssub.s32 %s622, 8
        %v1306 = vlaneseq
        %v1307 = vshrl.u32 %v1306, 7
        %v1308 = vadd.s32 %v1307, 8
        %v1309 = vadd.s32 %v1307, 16
        %v1310 = vadd.s32 %v1307, 24
        %v1311 = vstv %s1305
        %v1312 = vadd.s32 %v1311, %v1307
        %v1313 = vadd.s32 %v1311, %v1308
        %v1314 = vadd.s32 %v1311, %v1309
        %v1315 = vadd.s32 %v1311, %v1310
        %vm1316 = vcmp.ge.s32.totalorder %v1312, 0
        %vm1317 = vcmp.ge.s32.totalorder %v1313, 0
        %vm1318 = vcmp.ge.s32.totalorder %v1314, 0
        %vm1319 = vcmp.ge.s32.totalorder %v1315, 0
        %vm1320 = vcmp.lt.s32.totalorder %v1312, 16
        %vm1321 = vcmp.lt.s32.totalorder %v1313, 16
        %vm1322 = vcmp.lt.s32.totalorder %v1314, 16
        %vm1323 = vcmp.lt.s32.totalorder %v1315, 16
        %vm1324 = vmand %vm1316, %vm1320
        %vm1325 = vmand %vm1317, %vm1321
        %vm1326 = vmand %vm1318, %vm1322
        %vm1327 = vmand %vm1319, %vm1323
        %v1328 = vsel %vm1324, %v1301, 0.0
        %v1329 = vsel %vm1325, %v1302, 0.0
        %v1330 = vsel %vm1326, %v1303, 0.0
        %v1331 = vsel %vm1327, %v1304, 0.0
        %v1332 = vpack.c.bf16 %v1329, %v1328
        %v1333 = vpack.c.bf16 %v1331, %v1330
        %v1334 = vld [vmem:[#allocation5] sm:$0xf]
        %v1335 = vld [vmem:[#allocation5 + $0x4] sm:$0xf]
        %v1336 = vld [vmem:[#allocation5 + $0x8] sm:$0xf]
        %v1337 = vld [vmem:[#allocation5 + $0xc] sm:$0xf]
        %v1338 = vld [vmem:[#allocation5 + $0x10] sm:$0xf]
        %v1339 = vld [vmem:[#allocation5 + $0x14] sm:$0xf]
        %v1340 = vld [vmem:[#allocation5 + $0x18] sm:$0xf]
        %v1341 = vld [vmem:[#allocation5 + $0x1c] sm:$0xf]
        %v1342 = vld [vmem:[#allocation5 + $0x20] sm:$0xf]
        %v1343 = vld [vmem:[#allocation5 + $0x24] sm:$0xf]
        %v1344 = vld [vmem:[#allocation5 + $0x28] sm:$0xf]
        %v1345 = vld [vmem:[#allocation5 + $0x2c] sm:$0xf]
        %v1346 = vld [vmem:[#allocation5 + $0x30] sm:$0xf]
        %v1347 = vld [vmem:[#allocation5 + $0x34] sm:$0xf]
        %v1348 = vld [vmem:[#allocation5 + $0x38] sm:$0xf]
        %v1349 = vld [vmem:[#allocation5 + $0x3c] sm:$0xf]
        %s1350 = scalar_lea.vmem [#allocation5], 64
        %v1351 = vld [vmem:[%s1350] sm:$0xf]
        %v1352 = vld [vmem:[%s1350 + $0x4] sm:$0xf]
        %v1353 = vld [vmem:[%s1350 + $0x8] sm:$0xf]
        %v1354 = vld [vmem:[%s1350 + $0xc] sm:$0xf]
        %v1355 = vld [vmem:[%s1350 + $0x10] sm:$0xf]
        %v1356 = vld [vmem:[%s1350 + $0x14] sm:$0xf]
        %v1357 = vld [vmem:[%s1350 + $0x18] sm:$0xf]
        %v1358 = vld [vmem:[%s1350 + $0x1c] sm:$0xf]
        %v1359 = vld [vmem:[%s1350 + $0x20] sm:$0xf]
        %v1360 = vld [vmem:[%s1350 + $0x24] sm:$0xf]
        %v1361 = vld [vmem:[%s1350 + $0x28] sm:$0xf]
        %v1362 = vld [vmem:[%s1350 + $0x2c] sm:$0xf]
        %v1363 = vld [vmem:[%s1350 + $0x30] sm:$0xf]
        %v1364 = vld [vmem:[%s1350 + $0x34] sm:$0xf]
        %v1365 = vld [vmem:[%s1350 + $0x38] sm:$0xf]
        %v1366 = vld [vmem:[%s1350 + $0x3c] sm:$0xf]
        %v1368 = vshrl.u32 %v1332, 16
        %v1370 = vshll.u32 %v1332, 16
        %v1372 = vrot.slane %v1370, 1
        %v1373 = vor.u32 %v1368, %v1372
        %v1375 = vshll.u32 %v1333, 16
        %v1377 = vrot.slane %v1375, 1
        %v1378 = vsel %vm674, %v1373, %v1377
        %v1379 = vshrl.u32 %v1333, 16
        %v1381 = vor.u32 %v1379, %v1377
        %v1400 = vunpack.c.l.b16 %v1351
        %v1401 = vunpack.c.l.b16 %v1352
        %v1402 = vunpack.c.l.b16 %v1353
        %v1403 = vunpack.c.l.b16 %v1354
        %v1404 = vunpack.c.l.b16 %v1355
        %v1405 = vunpack.c.l.b16 %v1356
        %v1406 = vunpack.c.l.b16 %v1357
        %v1407 = vunpack.c.l.b16 %v1358
        %v1408 = vunpack.c.l.b16 %v1359
        %v1409 = vunpack.c.l.b16 %v1360
        %v1410 = vunpack.c.l.b16 %v1361
        %v1411 = vunpack.c.l.b16 %v1362
        %v1412 = vunpack.c.l.b16 %v1363
        %v1413 = vunpack.c.l.b16 %v1364
        %v1414 = vunpack.c.l.b16 %v1365
        %v1415 = vunpack.c.l.b16 %v1366
        %v1416 = vpack.c.b16 %v1401, %v1400
        %v1417 = vpack.c.b16 %v1403, %v1402
        %v1418 = vpack.c.b16 %v1405, %v1404
        %v1419 = vpack.c.b16 %v1407, %v1406
        %v1420 = vpack.c.b16 %v1409, %v1408
        %v1421 = vpack.c.b16 %v1411, %v1410
        %v1422 = vpack.c.b16 %v1413, %v1412
        %v1423 = vpack.c.b16 %v1415, %v1414
        %1432 = vmatprep.subr.bf16.mxu0 0
        %1433 = vmatpush1.bf16.msra.mxu0 %v1416
        %1434 = vmatprep.subr.bf16.mxu0 0
        %1435 = vmatpush1.bf16.msra.mxu0 %v1417
        %1436 = vmatprep.subr.bf16.mxu0 0
        %1437 = vmatpush1.bf16.msra.mxu0 %v1418
        %1438 = vmatprep.subr.bf16.mxu0 0
        %1439 = vmatpush1.bf16.msra.mxu0 %v1419
        %1440 = vmatprep.subr.bf16.mxu0 0
        %1441 = vmatpush1.bf16.msra.mxu0 %v1420
        %1442 = vmatprep.subr.bf16.mxu0 0
        %1443 = vmatpush1.bf16.msra.mxu0 %v1421
        %1444 = vmatprep.subr.bf16.mxu0 0
        %1445 = vmatpush1.bf16.msra.mxu0 %v1422
        %1446 = vmatprep.subr.bf16.mxu0 0
        %1447 = vmatpush1.bf16.msra.mxu0 %v1423
        %1448 = vmatprep.subr.bf16.mxu0 0
        %1449 = vmatpush1.bf16.msra.mxu0 0
        %1450 = vmatprep.subr.bf16.mxu0 0
        %1451 = vmatpush1.bf16.msra.mxu0 0
        %1452 = vmatprep.subr.bf16.mxu0 0
        %1453 = vmatpush1.bf16.msra.mxu0 0
        %1454 = vmatprep.subr.bf16.mxu0 0
        %1455 = vmatpush1.bf16.msra.mxu0 0
        %1456 = vmatprep.subr.bf16.mxu0 0
        %1457 = vmatpush1.bf16.msra.mxu0 0
        %1458 = vmatprep.subr.bf16.mxu0 0
        %1459 = vmatpush1.bf16.msra.mxu0 0
        %1460 = vmatprep.subr.bf16.mxu0 0
        %1461 = vmatpush1.bf16.msra.mxu0 0
        %1462 = vmatprep.subr.bf16.mxu0 0
        %1463 = vmatpush1.bf16.msra.mxu0 0
        %1464 = vmatprep.mubr.bf16.mxu0 0
        %1465 = vmatmul.mubr.bf16.gmra.mrb[0].mxu0 %v1378
        %v1466 = vpop.f32.mrb[0].mxu0
        %v1467 = vadd.f32 0.0, %v1466
        %v1468 = vpop.f32.mrb[0].mxu0
        %v1469 = vpop.f32.mrb[0].mxu0
        %v1470 = vadd.f32 0.0, %v1469
        %v1471 = vpop.f32.mrb[0].mxu0
        %1472 = vmatprep.mubr.bf16.mxu0 0
        %1473 = vmatmul.mubr.bf16.gmra.mrb[0].mxu0 %v1381
        %v1474 = vpop.f32.mrb[0].mxu0
        %v1475 = vadd.f32 0.0, %v1474
        %v1476 = vpop.f32.mrb[0].mxu0
        %v1477 = vpop.f32.mrb[0].mxu0
        %v1478 = vadd.f32 0.0, %v1477
        %v1479 = vpop.f32.mrb[0].mxu0
        %1480 = vdwg.mxu0
        %v1497 = vunpack.c.l.b16 %v1334
        %v1498 = vunpack.c.l.b16 %v1335
        %v1499 = vunpack.c.l.b16 %v1336
        %v1500 = vunpack.c.l.b16 %v1337
        %v1501 = vunpack.c.l.b16 %v1338
        %v1502 = vunpack.c.l.b16 %v1339
        %v1503 = vunpack.c.l.b16 %v1340
        %v1504 = vunpack.c.l.b16 %v1341
        %v1505 = vunpack.c.l.b16 %v1342
        %v1506 = vunpack.c.l.b16 %v1343
        %v1507 = vunpack.c.l.b16 %v1344
        %v1508 = vunpack.c.l.b16 %v1345
        %v1509 = vunpack.c.l.b16 %v1346
        %v1510 = vunpack.c.l.b16 %v1347
        %v1511 = vunpack.c.l.b16 %v1348
        %v1512 = vunpack.c.l.b16 %v1349
        %v1513 = vpack.c.b16 %v1498, %v1497
        %v1514 = vpack.c.b16 %v1500, %v1499
        %v1515 = vpack.c.b16 %v1502, %v1501
        %v1516 = vpack.c.b16 %v1504, %v1503
        %v1517 = vpack.c.b16 %v1506, %v1505
        %v1518 = vpack.c.b16 %v1508, %v1507
        %v1519 = vpack.c.b16 %v1510, %v1509
        %v1520 = vpack.c.b16 %v1512, %v1511
        %1529 = vmatprep.subr.bf16.mxu0 0
        %1530 = vmatpush1.bf16.msra.mxu0 %v1513
        %1531 = vmatprep.subr.bf16.mxu0 0
        %1532 = vmatpush1.bf16.msra.mxu0 %v1514
        %1533 = vmatprep.subr.bf16.mxu0 0
        %1534 = vmatpush1.bf16.msra.mxu0 %v1515
        %1535 = vmatprep.subr.bf16.mxu0 0
        %1536 = vmatpush1.bf16.msra.mxu0 %v1516
        %1537 = vmatprep.subr.bf16.mxu0 0
        %1538 = vmatpush1.bf16.msra.mxu0 %v1517
        %1539 = vmatprep.subr.bf16.mxu0 0
        %1540 = vmatpush1.bf16.msra.mxu0 %v1518
        %1541 = vmatprep.subr.bf16.mxu0 0
        %1542 = vmatpush1.bf16.msra.mxu0 %v1519
        %1543 = vmatprep.subr.bf16.mxu0 0
        %1544 = vmatpush1.bf16.msra.mxu0 %v1520
        %1545 = vmatprep.subr.bf16.mxu0 0
        %1546 = vmatpush1.bf16.msra.mxu0 0
        %1547 = vmatprep.subr.bf16.mxu0 0
        %1548 = vmatpush1.bf16.msra.mxu0 0
        %1549 = vmatprep.subr.bf16.mxu0 0
        %1550 = vmatpush1.bf16.msra.mxu0 0
        %1551 = vmatprep.subr.bf16.mxu0 0
        %1552 = vmatpush1.bf16.msra.mxu0 0
        %1553 = vmatprep.subr.bf16.mxu0 0
        %1554 = vmatpush1.bf16.msra.mxu0 0
        %1555 = vmatprep.subr.bf16.mxu0 0
        %1556 = vmatpush1.bf16.msra.mxu0 0
        %1557 = vmatprep.subr.bf16.mxu0 0
        %1558 = vmatpush1.bf16.msra.mxu0 0
        %1559 = vmatprep.subr.bf16.mxu0 0
        %1560 = vmatpush1.bf16.msra.mxu0 0
        %1561 = vmatprep.mubr.bf16.mxu0 0
        %1562 = vmatmul.mubr.bf16.gmra.mrb[0].mxu0 %v1332
        %v1563 = vpop.f32.mrb[0].mxu0
        %v1564 = vadd.f32 %v1467, %v1563
        %v1565 = vpop.f32.mrb[0].mxu0
        %v1566 = vpop.f32.mrb[0].mxu0
        %v1567 = vadd.f32 %v1470, %v1566
        %v1568 = vpop.f32.mrb[0].mxu0
        %1569 = vmatprep.mubr.bf16.mxu0 0
        %1570 = vmatmul.mubr.bf16.gmra.mrb[0].mxu0 %v1333
        %v1571 = vpop.f32.mrb[0].mxu0
        %v1572 = vadd.f32 %v1475, %v1571
        %v1573 = vpop.f32.mrb[0].mxu0
        %v1574 = vpop.f32.mrb[0].mxu0
        %v1575 = vadd.f32 %v1478, %v1574
        %v1576 = vpop.f32.mrb[0].mxu0
        %1577 = vdwg.mxu0
        %s1578 = scalar_lea.vmem [#allocation5], 128
        %v1579 = vld [vmem:[%s1578] sm:$0xf]
        %v1580 = vld [vmem:[%s1578 + $0x4] sm:$0xf]
        %v1581 = vld [vmem:[%s1578 + $0x8] sm:$0xf]
        %v1582 = vld [vmem:[%s1578 + $0xc] sm:$0xf]
        %v1583 = vld [vmem:[%s1578 + $0x10] sm:$0xf]
        %v1584 = vld [vmem:[%s1578 + $0x14] sm:$0xf]
        %v1585 = vld [vmem:[%s1578 + $0x18] sm:$0xf]
        %v1586 = vld [vmem:[%s1578 + $0x1c] sm:$0xf]
        %v1587 = vld [vmem:[%s1578 + $0x20] sm:$0xf]
        %v1588 = vld [vmem:[%s1578 + $0x24] sm:$0xf]
        %v1589 = vld [vmem:[%s1578 + $0x28] sm:$0xf]
        %v1590 = vld [vmem:[%s1578 + $0x2c] sm:$0xf]
        %v1591 = vld [vmem:[%s1578 + $0x30] sm:$0xf]
        %v1592 = vld [vmem:[%s1578 + $0x34] sm:$0xf]
        %v1593 = vld [vmem:[%s1578 + $0x38] sm:$0xf]
        %v1594 = vld [vmem:[%s1578 + $0x3c] sm:$0xf]
        %v1597 = vrot.slane %v1332, 1
        %v1598 = vrot.slane %v1333, 1
        %v1599 = vsel %vm910, %v1597, %v1598
        %v1618 = vunpack.c.l.b16 %v1579
        %v1619 = vunpack.c.l.b16 %v1580
        %v1620 = vunpack.c.l.b16 %v1581
        %v1621 = vunpack.c.l.b16 %v1582
        %v1622 = vunpack.c.l.b16 %v1583
        %v1623 = vunpack.c.l.b16 %v1584
        %v1624 = vunpack.c.l.b16 %v1585
        %v1625 = vunpack.c.l.b16 %v1586
        %v1626 = vunpack.c.l.b16 %v1587
        %v1627 = vunpack.c.l.b16 %v1588
        %v1628 = vunpack.c.l.b16 %v1589
        %v1629 = vunpack.c.l.b16 %v1590
        %v1630 = vunpack.c.l.b16 %v1591
        %v1631 = vunpack.c.l.b16 %v1592
        %v1632 = vunpack.c.l.b16 %v1593
        %v1633 = vunpack.c.l.b16 %v1594
        %v1634 = vpack.c.b16 %v1619, %v1618
        %v1635 = vpack.c.b16 %v1621, %v1620
        %v1636 = vpack.c.b16 %v1623, %v1622
        %v1637 = vpack.c.b16 %v1625, %v1624
        %v1638 = vpack.c.b16 %v1627, %v1626
        %v1639 = vpack.c.b16 %v1629, %v1628
        %v1640 = vpack.c.b16 %v1631, %v1630
        %v1641 = vpack.c.b16 %v1633, %v1632
        %1650 = vmatprep.subr.bf16.mxu0 0
        %1651 = vmatpush1.bf16.msra.mxu0 %v1634
        %1652 = vmatprep.subr.bf16.mxu0 0
        %1653 = vmatpush1.bf16.msra.mxu0 %v1635
        %1654 = vmatprep.subr.bf16.mxu0 0
        %1655 = vmatpush1.bf16.msra.mxu0 %v1636
        %1656 = vmatprep.subr.bf16.mxu0 0
        %1657 = vmatpush1.bf16.msra.mxu0 %v1637
        %1658 = vmatprep.subr.bf16.mxu0 0
        %1659 = vmatpush1.bf16.msra.mxu0 %v1638
        %1660 = vmatprep.subr.bf16.mxu0 0
        %1661 = vmatpush1.bf16.msra.mxu0 %v1639
        %1662 = vmatprep.subr.bf16.mxu0 0
        %1663 = vmatpush1.bf16.msra.mxu0 %v1640
        %1664 = vmatprep.subr.bf16.mxu0 0
        %1665 = vmatpush1.bf16.msra.mxu0 %v1641
        %1666 = vmatprep.subr.bf16.mxu0 0
        %1667 = vmatpush1.bf16.msra.mxu0 0
        %1668 = vmatprep.subr.bf16.mxu0 0
        %1669 = vmatpush1.bf16.msra.mxu0 0
        %1670 = vmatprep.subr.bf16.mxu0 0
        %1671 = vmatpush1.bf16.msra.mxu0 0
        %1672 = vmatprep.subr.bf16.mxu0 0
        %1673 = vmatpush1.bf16.msra.mxu0 0
        %1674 = vmatprep.subr.bf16.mxu0 0
        %1675 = vmatpush1.bf16.msra.mxu0 0
        %1676 = vmatprep.subr.bf16.mxu0 0
        %1677 = vmatpush1.bf16.msra.mxu0 0
        %1678 = vmatprep.subr.bf16.mxu0 0
        %1679 = vmatpush1.bf16.msra.mxu0 0
        %1680 = vmatprep.subr.bf16.mxu0 0
        %1681 = vmatpush1.bf16.msra.mxu0 0
        %1682 = vmatprep.mubr.bf16.mxu0 0
        %1683 = vmatmul.mubr.bf16.gmra.mrb[0].mxu0 %v1599
        %v1684 = vpop.f32.mrb[0].mxu0
        %v1685 = vadd.f32 0.0, %v1684
        %v1686 = vpop.f32.mrb[0].mxu0
        %v1687 = vpop.f32.mrb[0].mxu0
        %v1688 = vadd.f32 0.0, %v1687
        %v1689 = vpop.f32.mrb[0].mxu0
        %1690 = vmatprep.mubr.bf16.mxu0 0
        %1691 = vmatmul.mubr.bf16.gmra.mrb[0].mxu0 %v1598
        %v1692 = vpop.f32.mrb[0].mxu0
        %v1693 = vadd.f32 0.0, %v1692
        %v1694 = vpop.f32.mrb[0].mxu0
        %v1695 = vpop.f32.mrb[0].mxu0
        %v1696 = vadd.f32 0.0, %v1695
        %v1697 = vpop.f32.mrb[0].mxu0
        %1698 = vdwg.mxu0
        %v1699 = vadd.f32 %v1564, %v1685
        %v1700 = vadd.f32 %v1567, %v1688
        %v1701 = vadd.f32 %v1572, %v1693
        %v1702 = vadd.f32 %v1575, %v1696
        %s1703 = scalar_lea.vmem [#allocation5], 192
        %v1704 = vld [vmem:[%s1703] sm:$0xf]
        %v1705 = vld [vmem:[%s1703 + $0x4] sm:$0xf]
        %v1706 = vld [vmem:[%s1703 + $0x8] sm:$0xf]
        %v1707 = vld [vmem:[%s1703 + $0xc] sm:$0xf]
        %v1708 = vld [vmem:[%s1703 + $0x10] sm:$0xf]
        %v1709 = vld [vmem:[%s1703 + $0x14] sm:$0xf]
        %v1710 = vld [vmem:[%s1703 + $0x18] sm:$0xf]
        %v1711 = vld [vmem:[%s1703 + $0x1c] sm:$0xf]
        %v1712 = vld [vmem:[%s1703 + $0x20] sm:$0xf]
        %v1713 = vld [vmem:[%s1703 + $0x24] sm:$0xf]
        %v1714 = vld [vmem:[%s1703 + $0x28] sm:$0xf]
        %v1715 = vld [vmem:[%s1703 + $0x2c] sm:$0xf]
        %v1716 = vld [vmem:[%s1703 + $0x30] sm:$0xf]
        %v1717 = vld [vmem:[%s1703 + $0x34] sm:$0xf]
        %v1718 = vld [vmem:[%s1703 + $0x38] sm:$0xf]
        %v1719 = vld [vmem:[%s1703 + $0x3c] sm:$0xf]
        %v1720 = vrot.slane %v1368, 1
        %v1721 = vrot.slane %v1370, 2
        %v1722 = vor.u32 %v1720, %v1721
        %v1723 = vrot.slane %v1379, 1
        %v1724 = vrot.slane %v1375, 2
        %v1725 = vor.u32 %v1723, %v1724
        %v1726 = vsel %vm1036, %v1722, %v1725
        %v1745 = vunpack.c.l.b16 %v1704
        %v1746 = vunpack.c.l.b16 %v1705
        %v1747 = vunpack.c.l.b16 %v1706
        %v1748 = vunpack.c.l.b16 %v1707
        %v1749 = vunpack.c.l.b16 %v1708
        %v1750 = vunpack.c.l.b16 %v1709
        %v1751 = vunpack.c.l.b16 %v1710
        %v1752 = vunpack.c.l.b16 %v1711
        %v1753 = vunpack.c.l.b16 %v1712
        %v1754 = vunpack.c.l.b16 %v1713
        %v1755 = vunpack.c.l.b16 %v1714
        %v1756 = vunpack.c.l.b16 %v1715
        %v1757 = vunpack.c.l.b16 %v1716
        %v1758 = vunpack.c.l.b16 %v1717
        %v1759 = vunpack.c.l.b16 %v1718
        %v1760 = vunpack.c.l.b16 %v1719
        %v1761 = vpack.c.b16 %v1746, %v1745
        %v1762 = vpack.c.b16 %v1748, %v1747
        %v1763 = vpack.c.b16 %v1750, %v1749
        %v1764 = vpack.c.b16 %v1752, %v1751
        %v1765 = vpack.c.b16 %v1754, %v1753
        %v1766 = vpack.c.b16 %v1756, %v1755
        %v1767 = vpack.c.b16 %v1758, %v1757
        %v1768 = vpack.c.b16 %v1760, %v1759
        %1777 = vmatprep.subr.bf16.mxu0 0
        %1778 = vmatpush1.bf16.msra.mxu0 %v1761
        %1779 = vmatprep.subr.bf16.mxu0 0
        %1780 = vmatpush1.bf16.msra.mxu0 %v1762
        %1781 = vmatprep.subr.bf16.mxu0 0
        %1782 = vmatpush1.bf16.msra.mxu0 %v1763
        %1783 = vmatprep.subr.bf16.mxu0 0
        %1784 = vmatpush1.bf16.msra.mxu0 %v1764
        %1785 = vmatprep.subr.bf16.mxu0 0
        %1786 = vmatpush1.bf16.msra.mxu0 %v1765
        %1787 = vmatprep.subr.bf16.mxu0 0
        %1788 = vmatpush1.bf16.msra.mxu0 %v1766
        %1789 = vmatprep.subr.bf16.mxu0 0
        %1790 = vmatpush1.bf16.msra.mxu0 %v1767
        %1791 = vmatprep.subr.bf16.mxu0 0
        %1792 = vmatpush1.bf16.msra.mxu0 %v1768
        %1793 = vmatprep.subr.bf16.mxu0 0
        %1794 = vmatpush1.bf16.msra.mxu0 0
        %1795 = vmatprep.subr.bf16.mxu0 0
        %1796 = vmatpush1.bf16.msra.mxu0 0
        %1797 = vmatprep.subr.bf16.mxu0 0
        %1798 = vmatpush1.bf16.msra.mxu0 0
        %1799 = vmatprep.subr.bf16.mxu0 0
        %1800 = vmatpush1.bf16.msra.mxu0 0
        %1801 = vmatprep.subr.bf16.mxu0 0
        %1802 = vmatpush1.bf16.msra.mxu0 0
        %1803 = vmatprep.subr.bf16.mxu0 0
        %1804 = vmatpush1.bf16.msra.mxu0 0
        %1805 = vmatprep.subr.bf16.mxu0 0
        %1806 = vmatpush1.bf16.msra.mxu0 0
        %1807 = vmatprep.subr.bf16.mxu0 0
        %1808 = vmatpush1.bf16.msra.mxu0 0
        %1809 = vmatprep.mubr.bf16.mxu0 0
        %1810 = vmatmul.mubr.bf16.gmra.mrb[0].mxu0 %v1726
        %v1811 = vpop.f32.mrb[0].mxu0
        %v1812 = vadd.f32 0.0, %v1811
        %v1813 = vpop.f32.mrb[0].mxu0
        %v1814 = vpop.f32.mrb[0].mxu0
        %v1815 = vadd.f32 0.0, %v1814
        %v1816 = vpop.f32.mrb[0].mxu0
        %1817 = vmatprep.mubr.bf16.mxu0 0
        %1818 = vmatmul.mubr.bf16.gmra.mrb[0].mxu0 %v1725
        %v1819 = vpop.f32.mrb[0].mxu0
        %v1820 = vadd.f32 0.0, %v1819
        %v1821 = vpop.f32.mrb[0].mxu0
        %v1822 = vpop.f32.mrb[0].mxu0
        %v1823 = vadd.f32 0.0, %v1822
        %v1824 = vpop.f32.mrb[0].mxu0
        %1825 = vdwg.mxu0
        %v1826 = vadd.f32 %v1699, %v1812
        %v1827 = vadd.f32 %v1700, %v1815
        %v1828 = vadd.f32 %v1701, %v1820
        %v1829 = vadd.f32 %v1702, %v1823
        %s1830 = scalar_lea.vmem [#allocation5], 256
        %v1831 = vld [vmem:[%s1830] sm:$0xf]
        %v1832 = vld [vmem:[%s1830 + $0x4] sm:$0xf]
        %v1833 = vld [vmem:[%s1830 + $0x8] sm:$0xf]
        %v1834 = vld [vmem:[%s1830 + $0xc] sm:$0xf]
        %v1835 = vld [vmem:[%s1830 + $0x10] sm:$0xf]
        %v1836 = vld [vmem:[%s1830 + $0x14] sm:$0xf]
        %v1837 = vld [vmem:[%s1830 + $0x18] sm:$0xf]
        %v1838 = vld [vmem:[%s1830 + $0x1c] sm:$0xf]
        %v1839 = vld [vmem:[%s1830 + $0x20] sm:$0xf]
        %v1840 = vld [vmem:[%s1830 + $0x24] sm:$0xf]
        %v1841 = vld [vmem:[%s1830 + $0x28] sm:$0xf]
        %v1842 = vld [vmem:[%s1830 + $0x2c] sm:$0xf]
        %v1843 = vld [vmem:[%s1830 + $0x30] sm:$0xf]
        %v1844 = vld [vmem:[%s1830 + $0x34] sm:$0xf]
        %v1845 = vld [vmem:[%s1830 + $0x38] sm:$0xf]
        %v1846 = vld [vmem:[%s1830 + $0x3c] sm:$0xf]
        %v1847 = vrot.slane %v1332, 2
        %v1848 = vrot.slane %v1333, 2
        %v1849 = vsel %vm1170, %v1847, %v1848
        %v1868 = vunpack.c.l.b16 %v1831
        %v1869 = vunpack.c.l.b16 %v1832
        %v1870 = vunpack.c.l.b16 %v1833
        %v1871 = vunpack.c.l.b16 %v1834
        %v1872 = vunpack.c.l.b16 %v1835
        %v1873 = vunpack.c.l.b16 %v1836
        %v1874 = vunpack.c.l.b16 %v1837
        %v1875 = vunpack.c.l.b16 %v1838
        %v1876 = vunpack.c.l.b16 %v1839
        %v1877 = vunpack.c.l.b16 %v1840
        %v1878 = vunpack.c.l.b16 %v1841
        %v1879 = vunpack.c.l.b16 %v1842
        %v1880 = vunpack.c.l.b16 %v1843
        %v1881 = vunpack.c.l.b16 %v1844
        %v1882 = vunpack.c.l.b16 %v1845
        %v1883 = vunpack.c.l.b16 %v1846
        %v1884 = vpack.c.b16 %v1869, %v1868
        %v1885 = vpack.c.b16 %v1871, %v1870
        %v1886 = vpack.c.b16 %v1873, %v1872
        %v1887 = vpack.c.b16 %v1875, %v1874
        %v1888 = vpack.c.b16 %v1877, %v1876
        %v1889 = vpack.c.b16 %v1879, %v1878
        %v1890 = vpack.c.b16 %v1881, %v1880
        %v1891 = vpack.c.b16 %v1883, %v1882
        %1900 = vmatprep.subr.bf16.mxu0 0
        %1901 = vmatpush1.bf16.msra.mxu0 %v1884
        %1902 = vmatprep.subr.bf16.mxu0 0
        %1903 = vmatpush1.bf16.msra.mxu0 %v1885
        %1904 = vmatprep.subr.bf16.mxu0 0
        %1905 = vmatpush1.bf16.msra.mxu0 %v1886
        %1906 = vmatprep.subr.bf16.mxu0 0
        %1907 = vmatpush1.bf16.msra.mxu0 %v1887
        %1908 = vmatprep.subr.bf16.mxu0 0
        %1909 = vmatpush1.bf16.msra.mxu0 %v1888
        %1910 = vmatprep.subr.bf16.mxu0 0
        %1911 = vmatpush1.bf16.msra.mxu0 %v1889
        %1912 = vmatprep.subr.bf16.mxu0 0
        %1913 = vmatpush1.bf16.msra.mxu0 %v1890
        %1914 = vmatprep.subr.bf16.mxu0 0
        %1915 = vmatpush1.bf16.msra.mxu0 %v1891
        %1916 = vmatprep.subr.bf16.mxu0 0
        %1917 = vmatpush1.bf16.msra.mxu0 0
        %1918 = vmatprep.subr.bf16.mxu0 0
        %1919 = vmatpush1.bf16.msra.mxu0 0
        %1920 = vmatprep.subr.bf16.mxu0 0
        %1921 = vmatpush1.bf16.msra.mxu0 0
        %1922 = vmatprep.subr.bf16.mxu0 0
        %1923 = vmatpush1.bf16.msra.mxu0 0
        %1924 = vmatprep.subr.bf16.mxu0 0
        %1925 = vmatpush1.bf16.msra.mxu0 0
        %1926 = vmatprep.subr.bf16.mxu0 0
        %1927 = vmatpush1.bf16.msra.mxu0 0
        %1928 = vmatprep.subr.bf16.mxu0 0
        %1929 = vmatpush1.bf16.msra.mxu0 0
        %1930 = vmatprep.subr.bf16.mxu0 0
        %1931 = vmatpush1.bf16.msra.mxu0 0
        %1932 = vmatprep.mubr.bf16.mxu0 0
        %1933 = vmatmul.mubr.bf16.gmra.mrb[0].mxu0 %v1849
        %v1934 = vpop.f32.mrb[0].mxu0
        %v1935 = vadd.f32 0.0, %v1934
        %v1936 = vpop.f32.mrb[0].mxu0
        %v1937 = vpop.f32.mrb[0].mxu0
        %v1938 = vadd.f32 0.0, %v1937
        %v1939 = vpop.f32.mrb[0].mxu0
        %1940 = vmatprep.mubr.bf16.mxu0 0
        %1941 = vmatmul.mubr.bf16.gmra.mrb[0].mxu0 %v1848
        %v1942 = vpop.f32.mrb[0].mxu0
        %v1943 = vadd.f32 0.0, %v1942
        %v1944 = vpop.f32.mrb[0].mxu0
        %v1945 = vpop.f32.mrb[0].mxu0
        %v1946 = vadd.f32 0.0, %v1945
        %v1947 = vpop.f32.mrb[0].mxu0
        %1948 = vdwg.mxu0
        %v1949 = vadd.f32 %v1826, %v1935
        %v1950 = vadd.f32 %v1827, %v1938
        %v1951 = vadd.f32 %v1828, %v1943
        %v1952 = vadd.f32 %v1829, %v1946
        %v1953 = vld [vmem:[%s5] sm:$0x1]
        %v1955 = vlaneseq
        %v1956 = vshrl.u32 %v1955, 7
        %v1957 = vsub.s32 0, %v1956
        %v1958 = vrot.slane %v1953, %v1957
        %v1960 = vmul.f32 %v1949, %v1958
        %v1961 = vmul.f32 %v1950, %v1958
        %v1962 = vmul.f32 %v1951, %v1958
        %v1963 = vmul.f32 %v1952, %v1958
        %v1964 = vld [vmem:[%s6] sm:$0x1]
        %v1966 = vlaneseq
        %v1967 = vshrl.u32 %v1966, 7
        %v1968 = vsub.s32 0, %v1967
        %v1969 = vrot.slane %v1964, %v1968
        %v1971 = vadd.f32 %v1960, %v1969
        %v1972 = vadd.f32 %v1961, %v1969
        %v1973 = vadd.f32 %v1962, %v1969
        %v1974 = vadd.f32 %v1963, %v1969
        %v1975 = vtanh.pop %v1971
        %v1976 = vtanh.pop %v1972
        %v1977 = vtanh.pop %v1973
        %v1978 = vtanh.pop %v1974
        %s1979 = ssub.s32 %s622, 6
        %v1980 = vstv %s1979
        %v1981 = vadd.s32 %v1980, %v1307
        %v1982 = vadd.s32 %v1980, %v1308
        %v1983 = vadd.s32 %v1980, %v1309
        %v1984 = vadd.s32 %v1980, %v1310
        %vm1985 = vcmp.ge.s32.totalorder %v1981, 0
        %vm1986 = vcmp.ge.s32.totalorder %v1982, 0
        %vm1987 = vcmp.ge.s32.totalorder %v1983, 0
        %vm1988 = vcmp.ge.s32.totalorder %v1984, 0
        %vm1989 = vcmp.lt.s32.totalorder %v1981, 16
        %vm1990 = vcmp.lt.s32.totalorder %v1982, 16
        %vm1991 = vcmp.lt.s32.totalorder %v1983, 16
        %vm1992 = vcmp.lt.s32.totalorder %v1984, 16
        %vm1993 = vmand %vm1985, %vm1989
        %vm1994 = vmand %vm1986, %vm1990
        %vm1995 = vmand %vm1987, %vm1991
        %vm1996 = vmand %vm1988, %vm1992
        %v1997 = vsel %vm1993, %v1975, 0.0
        %v1998 = vsel %vm1994, %v1976, 0.0
        %v1999 = vsel %vm1995, %v1977, 0.0
        %v2000 = vsel %vm1996, %v1978, 0.0
        %v2001 = vpack.c.bf16 %v1998, %v1997
        %v2002 = vpack.c.bf16 %v2000, %v1999
        %v2003 = vld [vmem:[#allocation7] sm:$0xf]
        %v2004 = vld [vmem:[#allocation7 + $0x4] sm:$0xf]
        %v2005 = vld [vmem:[#allocation7 + $0x8] sm:$0xf]
        %v2006 = vld [vmem:[#allocation7 + $0xc] sm:$0xf]
        %v2007 = vld [vmem:[#allocation7 + $0x10] sm:$0xf]
        %v2008 = vld [vmem:[#allocation7 + $0x14] sm:$0xf]
        %v2009 = vld [vmem:[#allocation7 + $0x18] sm:$0xf]
        %v2010 = vld [vmem:[#allocation7 + $0x1c] sm:$0xf]
        %v2011 = vld [vmem:[#allocation7 + $0x20] sm:$0xf]
        %v2012 = vld [vmem:[#allocation7 + $0x24] sm:$0xf]
        %v2013 = vld [vmem:[#allocation7 + $0x28] sm:$0xf]
        %v2014 = vld [vmem:[#allocation7 + $0x2c] sm:$0xf]
        %v2015 = vld [vmem:[#allocation7 + $0x30] sm:$0xf]
        %v2016 = vld [vmem:[#allocation7 + $0x34] sm:$0xf]
        %v2017 = vld [vmem:[#allocation7 + $0x38] sm:$0xf]
        %v2018 = vld [vmem:[#allocation7 + $0x3c] sm:$0xf]
        %s2019 = scalar_lea.vmem [#allocation7], 64
        %v2020 = vld [vmem:[%s2019] sm:$0xf]
        %v2021 = vld [vmem:[%s2019 + $0x4] sm:$0xf]
        %v2022 = vld [vmem:[%s2019 + $0x8] sm:$0xf]
        %v2023 = vld [vmem:[%s2019 + $0xc] sm:$0xf]
        %v2024 = vld [vmem:[%s2019 + $0x10] sm:$0xf]
        %v2025 = vld [vmem:[%s2019 + $0x14] sm:$0xf]
        %v2026 = vld [vmem:[%s2019 + $0x18] sm:$0xf]
        %v2027 = vld [vmem:[%s2019 + $0x1c] sm:$0xf]
        %v2028 = vld [vmem:[%s2019 + $0x20] sm:$0xf]
        %v2029 = vld [vmem:[%s2019 + $0x24] sm:$0xf]
        %v2030 = vld [vmem:[%s2019 + $0x28] sm:$0xf]
        %v2031 = vld [vmem:[%s2019 + $0x2c] sm:$0xf]
        %v2032 = vld [vmem:[%s2019 + $0x30] sm:$0xf]
        %v2033 = vld [vmem:[%s2019 + $0x34] sm:$0xf]
        %v2034 = vld [vmem:[%s2019 + $0x38] sm:$0xf]
        %v2035 = vld [vmem:[%s2019 + $0x3c] sm:$0xf]
        %v2037 = vshrl.u32 %v2001, 16
        %v2039 = vshll.u32 %v2001, 16
        %v2041 = vrot.slane %v2039, 1
        %v2042 = vor.u32 %v2037, %v2041
        %v2044 = vshll.u32 %v2002, 16
        %v2046 = vrot.slane %v2044, 1
        %v2047 = vsel %vm674, %v2042, %v2046
        %v2048 = vshrl.u32 %v2002, 16
        %v2050 = vor.u32 %v2048, %v2046
        %v2069 = vunpack.c.l.b16 %v2020
        %v2070 = vunpack.c.l.b16 %v2021
        %v2071 = vunpack.c.l.b16 %v2022
        %v2072 = vunpack.c.l.b16 %v2023
        %v2073 = vunpack.c.l.b16 %v2024
        %v2074 = vunpack.c.l.b16 %v2025
        %v2075 = vunpack.c.l.b16 %v2026
        %v2076 = vunpack.c.l.b16 %v2027
        %v2077 = vunpack.c.l.b16 %v2028
        %v2078 = vunpack.c.l.b16 %v2029
        %v2079 = vunpack.c.l.b16 %v2030
        %v2080 = vunpack.c.l.b16 %v2031
        %v2081 = vunpack.c.l.b16 %v2032
        %v2082 = vunpack.c.l.b16 %v2033
        %v2083 = vunpack.c.l.b16 %v2034
        %v2084 = vunpack.c.l.b16 %v2035
        %v2085 = vpack.c.b16 %v2070, %v2069
        %v2086 = vpack.c.b16 %v2072, %v2071
        %v2087 = vpack.c.b16 %v2074, %v2073
        %v2088 = vpack.c.b16 %v2076, %v2075
        %v2089 = vpack.c.b16 %v2078, %v2077
        %v2090 = vpack.c.b16 %v2080, %v2079
        %v2091 = vpack.c.b16 %v2082, %v2081
        %v2092 = vpack.c.b16 %v2084, %v2083
        %2101 = vmatprep.subr.bf16.mxu0 0
        %2102 = vmatpush1.bf16.msra.mxu0 %v2085
        %2103 = vmatprep.subr.bf16.mxu0 0
        %2104 = vmatpush1.bf16.msra.mxu0 %v2086
        %2105 = vmatprep.subr.bf16.mxu0 0
        %2106 = vmatpush1.bf16.msra.mxu0 %v2087
        %2107 = vmatprep.subr.bf16.mxu0 0
        %2108 = vmatpush1.bf16.msra.mxu0 %v2088
        %2109 = vmatprep.subr.bf16.mxu0 0
        %2110 = vmatpush1.bf16.msra.mxu0 %v2089
        %2111 = vmatprep.subr.bf16.mxu0 0
        %2112 = vmatpush1.bf16.msra.mxu0 %v2090
        %2113 = vmatprep.subr.bf16.mxu0 0
        %2114 = vmatpush1.bf16.msra.mxu0 %v2091
        %2115 = vmatprep.subr.bf16.mxu0 0
        %2116 = vmatpush1.bf16.msra.mxu0 %v2092
        %2117 = vmatprep.subr.bf16.mxu0 0
        %2118 = vmatpush1.bf16.msra.mxu0 0
        %2119 = vmatprep.subr.bf16.mxu0 0
        %2120 = vmatpush1.bf16.msra.mxu0 0
        %2121 = vmatprep.subr.bf16.mxu0 0
        %2122 = vmatpush1.bf16.msra.mxu0 0
        %2123 = vmatprep.subr.bf16.mxu0 0
        %2124 = vmatpush1.bf16.msra.mxu0 0
        %2125 = vmatprep.subr.bf16.mxu0 0
        %2126 = vmatpush1.bf16.msra.mxu0 0
        %2127 = vmatprep.subr.bf16.mxu0 0
        %2128 = vmatpush1.bf16.msra.mxu0 0
        %2129 = vmatprep.subr.bf16.mxu0 0
        %2130 = vmatpush1.bf16.msra.mxu0 0
        %2131 = vmatprep.subr.bf16.mxu0 0
        %2132 = vmatpush1.bf16.msra.mxu0 0
        %2133 = vmatprep.mubr.bf16.mxu0 0
        %2134 = vmatmul.mubr.bf16.gmra.mrb[0].mxu0 %v2047
        %v2135 = vpop.f32.mrb[0].mxu0
        %v2136 = vadd.f32 0.0, %v2135
        %v2137 = vpop.f32.mrb[0].mxu0
        %v2138 = vpop.f32.mrb[0].mxu0
        %v2139 = vadd.f32 0.0, %v2138
        %v2140 = vpop.f32.mrb[0].mxu0
        %2141 = vmatprep.mubr.bf16.mxu0 0
        %2142 = vmatmul.mubr.bf16.gmra.mrb[0].mxu0 %v2050
        %v2143 = vpop.f32.mrb[0].mxu0
        %v2144 = vadd.f32 0.0, %v2143
        %v2145 = vpop.f32.mrb[0].mxu0
        %v2146 = vpop.f32.mrb[0].mxu0
        %v2147 = vpop.f32.mrb[0].mxu0
        %2148 = vdwg.mxu0
        %v2165 = vunpack.c.l.b16 %v2003
        %v2166 = vunpack.c.l.b16 %v2004
        %v2167 = vunpack.c.l.b16 %v2005
        %v2168 = vunpack.c.l.b16 %v2006
        %v2169 = vunpack.c.l.b16 %v2007
        %v2170 = vunpack.c.l.b16 %v2008
        %v2171 = vunpack.c.l.b16 %v2009
        %v2172 = vunpack.c.l.b16 %v2010
        %v2173 = vunpack.c.l.b16 %v2011
        %v2174 = vunpack.c.l.b16 %v2012
        %v2175 = vunpack.c.l.b16 %v2013
        %v2176 = vunpack.c.l.b16 %v2014
        %v2177 = vunpack.c.l.b16 %v2015
        %v2178 = vunpack.c.l.b16 %v2016
        %v2179 = vunpack.c.l.b16 %v2017
        %v2180 = vunpack.c.l.b16 %v2018
        %v2181 = vpack.c.b16 %v2166, %v2165
        %v2182 = vpack.c.b16 %v2168, %v2167
        %v2183 = vpack.c.b16 %v2170, %v2169
        %v2184 = vpack.c.b16 %v2172, %v2171
        %v2185 = vpack.c.b16 %v2174, %v2173
        %v2186 = vpack.c.b16 %v2176, %v2175
        %v2187 = vpack.c.b16 %v2178, %v2177
        %v2188 = vpack.c.b16 %v2180, %v2179
        %2197 = vmatprep.subr.bf16.mxu0 0
        %2198 = vmatpush1.bf16.msra.mxu0 %v2181
        %2199 = vmatprep.subr.bf16.mxu0 0
        %2200 = vmatpush1.bf16.msra.mxu0 %v2182
        %2201 = vmatprep.subr.bf16.mxu0 0
        %2202 = vmatpush1.bf16.msra.mxu0 %v2183
        %2203 = vmatprep.subr.bf16.mxu0 0
        %2204 = vmatpush1.bf16.msra.mxu0 %v2184
        %2205 = vmatprep.subr.bf16.mxu0 0
        %2206 = vmatpush1.bf16.msra.mxu0 %v2185
        %2207 = vmatprep.subr.bf16.mxu0 0
        %2208 = vmatpush1.bf16.msra.mxu0 %v2186
        %2209 = vmatprep.subr.bf16.mxu0 0
        %2210 = vmatpush1.bf16.msra.mxu0 %v2187
        %2211 = vmatprep.subr.bf16.mxu0 0
        %2212 = vmatpush1.bf16.msra.mxu0 %v2188
        %2213 = vmatprep.subr.bf16.mxu0 0
        %2214 = vmatpush1.bf16.msra.mxu0 0
        %2215 = vmatprep.subr.bf16.mxu0 0
        %2216 = vmatpush1.bf16.msra.mxu0 0
        %2217 = vmatprep.subr.bf16.mxu0 0
        %2218 = vmatpush1.bf16.msra.mxu0 0
        %2219 = vmatprep.subr.bf16.mxu0 0
        %2220 = vmatpush1.bf16.msra.mxu0 0
        %2221 = vmatprep.subr.bf16.mxu0 0
        %2222 = vmatpush1.bf16.msra.mxu0 0
        %2223 = vmatprep.subr.bf16.mxu0 0
        %2224 = vmatpush1.bf16.msra.mxu0 0
        %2225 = vmatprep.subr.bf16.mxu0 0
        %2226 = vmatpush1.bf16.msra.mxu0 0
        %2227 = vmatprep.subr.bf16.mxu0 0
        %2228 = vmatpush1.bf16.msra.mxu0 0
        %2229 = vmatprep.mubr.bf16.mxu0 0
        %2230 = vmatmul.mubr.bf16.gmra.mrb[0].mxu0 %v2001
        %v2231 = vpop.f32.mrb[0].mxu0
        %v2232 = vadd.f32 %v2136, %v2231
        %v2233 = vpop.f32.mrb[0].mxu0
        %v2234 = vpop.f32.mrb[0].mxu0
        %v2235 = vadd.f32 %v2139, %v2234
        %v2236 = vpop.f32.mrb[0].mxu0
        %2237 = vmatprep.mubr.bf16.mxu0 0
        %2238 = vmatmul.mubr.bf16.gmra.mrb[0].mxu0 %v2002
        %v2239 = vpop.f32.mrb[0].mxu0
        %v2240 = vadd.f32 %v2144, %v2239
        %v2241 = vpop.f32.mrb[0].mxu0
        %v2242 = vpop.f32.mrb[0].mxu0
        %v2243 = vpop.f32.mrb[0].mxu0
        %2244 = vdwg.mxu0
        %s2245 = scalar_lea.vmem [#allocation7], 128
        %v2246 = vld [vmem:[%s2245] sm:$0xf]
        %v2247 = vld [vmem:[%s2245 + $0x4] sm:$0xf]
        %v2248 = vld [vmem:[%s2245 + $0x8] sm:$0xf]
        %v2249 = vld [vmem:[%s2245 + $0xc] sm:$0xf]
        %v2250 = vld [vmem:[%s2245 + $0x10] sm:$0xf]
        %v2251 = vld [vmem:[%s2245 + $0x14] sm:$0xf]
        %v2252 = vld [vmem:[%s2245 + $0x18] sm:$0xf]
        %v2253 = vld [vmem:[%s2245 + $0x1c] sm:$0xf]
        %v2254 = vld [vmem:[%s2245 + $0x20] sm:$0xf]
        %v2255 = vld [vmem:[%s2245 + $0x24] sm:$0xf]
        %v2256 = vld [vmem:[%s2245 + $0x28] sm:$0xf]
        %v2257 = vld [vmem:[%s2245 + $0x2c] sm:$0xf]
        %v2258 = vld [vmem:[%s2245 + $0x30] sm:$0xf]
        %v2259 = vld [vmem:[%s2245 + $0x34] sm:$0xf]
        %v2260 = vld [vmem:[%s2245 + $0x38] sm:$0xf]
        %v2261 = vld [vmem:[%s2245 + $0x3c] sm:$0xf]
        %v2264 = vrot.slane %v2001, 1
        %v2265 = vrot.slane %v2002, 1
        %v2266 = vsel %vm910, %v2264, %v2265
        %v2285 = vunpack.c.l.b16 %v2246
        %v2286 = vunpack.c.l.b16 %v2247
        %v2287 = vunpack.c.l.b16 %v2248
        %v2288 = vunpack.c.l.b16 %v2249
        %v2289 = vunpack.c.l.b16 %v2250
        %v2290 = vunpack.c.l.b16 %v2251
        %v2291 = vunpack.c.l.b16 %v2252
        %v2292 = vunpack.c.l.b16 %v2253
        %v2293 = vunpack.c.l.b16 %v2254
        %v2294 = vunpack.c.l.b16 %v2255
        %v2295 = vunpack.c.l.b16 %v2256
        %v2296 = vunpack.c.l.b16 %v2257
        %v2297 = vunpack.c.l.b16 %v2258
        %v2298 = vunpack.c.l.b16 %v2259
        %v2299 = vunpack.c.l.b16 %v2260
        %v2300 = vunpack.c.l.b16 %v2261
        %v2301 = vpack.c.b16 %v2286, %v2285
        %v2302 = vpack.c.b16 %v2288, %v2287
        %v2303 = vpack.c.b16 %v2290, %v2289
        %v2304 = vpack.c.b16 %v2292, %v2291
        %v2305 = vpack.c.b16 %v2294, %v2293
        %v2306 = vpack.c.b16 %v2296, %v2295
        %v2307 = vpack.c.b16 %v2298, %v2297
        %v2308 = vpack.c.b16 %v2300, %v2299
        %2317 = vmatprep.subr.bf16.mxu0 0
        %2318 = vmatpush1.bf16.msra.mxu0 %v2301
        %2319 = vmatprep.subr.bf16.mxu0 0
        %2320 = vmatpush1.bf16.msra.mxu0 %v2302
        %2321 = vmatprep.subr.bf16.mxu0 0
        %2322 = vmatpush1.bf16.msra.mxu0 %v2303
        %2323 = vmatprep.subr.bf16.mxu0 0
        %2324 = vmatpush1.bf16.msra.mxu0 %v2304
        %2325 = vmatprep.subr.bf16.mxu0 0
        %2326 = vmatpush1.bf16.msra.mxu0 %v2305
        %2327 = vmatprep.subr.bf16.mxu0 0
        %2328 = vmatpush1.bf16.msra.mxu0 %v2306
        %2329 = vmatprep.subr.bf16.mxu0 0
        %2330 = vmatpush1.bf16.msra.mxu0 %v2307
        %2331 = vmatprep.subr.bf16.mxu0 0
        %2332 = vmatpush1.bf16.msra.mxu0 %v2308
        %2333 = vmatprep.subr.bf16.mxu0 0
        %2334 = vmatpush1.bf16.msra.mxu0 0
        %2335 = vmatprep.subr.bf16.mxu0 0
        %2336 = vmatpush1.bf16.msra.mxu0 0
        %2337 = vmatprep.subr.bf16.mxu0 0
        %2338 = vmatpush1.bf16.msra.mxu0 0
        %2339 = vmatprep.subr.bf16.mxu0 0
        %2340 = vmatpush1.bf16.msra.mxu0 0
        %2341 = vmatprep.subr.bf16.mxu0 0
        %2342 = vmatpush1.bf16.msra.mxu0 0
        %2343 = vmatprep.subr.bf16.mxu0 0
        %2344 = vmatpush1.bf16.msra.mxu0 0
        %2345 = vmatprep.subr.bf16.mxu0 0
        %2346 = vmatpush1.bf16.msra.mxu0 0
        %2347 = vmatprep.subr.bf16.mxu0 0
        %2348 = vmatpush1.bf16.msra.mxu0 0
        %2349 = vmatprep.mubr.bf16.mxu0 0
        %2350 = vmatmul.mubr.bf16.gmra.mrb[0].mxu0 %v2266
        %v2351 = vpop.f32.mrb[0].mxu0
        %v2352 = vadd.f32 0.0, %v2351
        %v2353 = vpop.f32.mrb[0].mxu0
        %v2354 = vpop.f32.mrb[0].mxu0
        %v2355 = vadd.f32 0.0, %v2354
        %v2356 = vpop.f32.mrb[0].mxu0
        %2357 = vmatprep.mubr.bf16.mxu0 0
        %2358 = vmatmul.mubr.bf16.gmra.mrb[0].mxu0 %v2265
        %v2359 = vpop.f32.mrb[0].mxu0
        %v2360 = vadd.f32 0.0, %v2359
        %v2361 = vpop.f32.mrb[0].mxu0
        %v2362 = vpop.f32.mrb[0].mxu0
        %v2363 = vpop.f32.mrb[0].mxu0
        %2364 = vdwg.mxu0
        %v2365 = vadd.f32 %v2232, %v2352
        %v2366 = vadd.f32 %v2235, %v2355
        %v2367 = vadd.f32 %v2240, %v2360
        %s2368 = scalar_lea.vmem [#allocation7], 192
        %v2369 = vld [vmem:[%s2368] sm:$0xf]
        %v2370 = vld [vmem:[%s2368 + $0x4] sm:$0xf]
        %v2371 = vld [vmem:[%s2368 + $0x8] sm:$0xf]
        %v2372 = vld [vmem:[%s2368 + $0xc] sm:$0xf]
        %v2373 = vld [vmem:[%s2368 + $0x10] sm:$0xf]
        %v2374 = vld [vmem:[%s2368 + $0x14] sm:$0xf]
        %v2375 = vld [vmem:[%s2368 + $0x18] sm:$0xf]
        %v2376 = vld [vmem:[%s2368 + $0x1c] sm:$0xf]
        %v2377 = vld [vmem:[%s2368 + $0x20] sm:$0xf]
        %v2378 = vld [vmem:[%s2368 + $0x24] sm:$0xf]
        %v2379 = vld [vmem:[%s2368 + $0x28] sm:$0xf]
        %v2380 = vld [vmem:[%s2368 + $0x2c] sm:$0xf]
        %v2381 = vld [vmem:[%s2368 + $0x30] sm:$0xf]
        %v2382 = vld [vmem:[%s2368 + $0x34] sm:$0xf]
        %v2383 = vld [vmem:[%s2368 + $0x38] sm:$0xf]
        %v2384 = vld [vmem:[%s2368 + $0x3c] sm:$0xf]
        %v2385 = vrot.slane %v2037, 1
        %v2386 = vrot.slane %v2039, 2
        %v2387 = vor.u32 %v2385, %v2386
        %v2388 = vrot.slane %v2048, 1
        %v2389 = vrot.slane %v2044, 2
        %v2390 = vor.u32 %v2388, %v2389
        %v2391 = vsel %vm1036, %v2387, %v2390
        %v2410 = vunpack.c.l.b16 %v2369
        %v2411 = vunpack.c.l.b16 %v2370
        %v2412 = vunpack.c.l.b16 %v2371
        %v2413 = vunpack.c.l.b16 %v2372
        %v2414 = vunpack.c.l.b16 %v2373
        %v2415 = vunpack.c.l.b16 %v2374
        %v2416 = vunpack.c.l.b16 %v2375
        %v2417 = vunpack.c.l.b16 %v2376
        %v2418 = vunpack.c.l.b16 %v2377
        %v2419 = vunpack.c.l.b16 %v2378
        %v2420 = vunpack.c.l.b16 %v2379
        %v2421 = vunpack.c.l.b16 %v2380
        %v2422 = vunpack.c.l.b16 %v2381
        %v2423 = vunpack.c.l.b16 %v2382
        %v2424 = vunpack.c.l.b16 %v2383
        %v2425 = vunpack.c.l.b16 %v2384
        %v2426 = vpack.c.b16 %v2411, %v2410
        %v2427 = vpack.c.b16 %v2413, %v2412
        %v2428 = vpack.c.b16 %v2415, %v2414
        %v2429 = vpack.c.b16 %v2417, %v2416
        %v2430 = vpack.c.b16 %v2419, %v2418
        %v2431 = vpack.c.b16 %v2421, %v2420
        %v2432 = vpack.c.b16 %v2423, %v2422
        %v2433 = vpack.c.b16 %v2425, %v2424
        %2442 = vmatprep.subr.bf16.mxu0 0
        %2443 = vmatpush1.bf16.msra.mxu0 %v2426
        %2444 = vmatprep.subr.bf16.mxu0 0
        %2445 = vmatpush1.bf16.msra.mxu0 %v2427
        %2446 = vmatprep.subr.bf16.mxu0 0
        %2447 = vmatpush1.bf16.msra.mxu0 %v2428
        %2448 = vmatprep.subr.bf16.mxu0 0
        %2449 = vmatpush1.bf16.msra.mxu0 %v2429
        %2450 = vmatprep.subr.bf16.mxu0 0
        %2451 = vmatpush1.bf16.msra.mxu0 %v2430
        %2452 = vmatprep.subr.bf16.mxu0 0
        %2453 = vmatpush1.bf16.msra.mxu0 %v2431
        %2454 = vmatprep.subr.bf16.mxu0 0
        %2455 = vmatpush1.bf16.msra.mxu0 %v2432
        %2456 = vmatprep.subr.bf16.mxu0 0
        %2457 = vmatpush1.bf16.msra.mxu0 %v2433
        %2458 = vmatprep.subr.bf16.mxu0 0
        %2459 = vmatpush1.bf16.msra.mxu0 0
        %2460 = vmatprep.subr.bf16.mxu0 0
        %2461 = vmatpush1.bf16.msra.mxu0 0
        %2462 = vmatprep.subr.bf16.mxu0 0
        %2463 = vmatpush1.bf16.msra.mxu0 0
        %2464 = vmatprep.subr.bf16.mxu0 0
        %2465 = vmatpush1.bf16.msra.mxu0 0
        %2466 = vmatprep.subr.bf16.mxu0 0
        %2467 = vmatpush1.bf16.msra.mxu0 0
        %2468 = vmatprep.subr.bf16.mxu0 0
        %2469 = vmatpush1.bf16.msra.mxu0 0
        %2470 = vmatprep.subr.bf16.mxu0 0
        %2471 = vmatpush1.bf16.msra.mxu0 0
        %2472 = vmatprep.subr.bf16.mxu0 0
        %2473 = vmatpush1.bf16.msra.mxu0 0
        %2474 = vmatprep.mubr.bf16.mxu0 0
        %2475 = vmatmul.mubr.bf16.gmra.mrb[0].mxu0 %v2391
        %v2476 = vpop.f32.mrb[0].mxu0
        %v2477 = vadd.f32 0.0, %v2476
        %v2478 = vpop.f32.mrb[0].mxu0
        %v2479 = vpop.f32.mrb[0].mxu0
        %v2480 = vadd.f32 0.0, %v2479
        %v2481 = vpop.f32.mrb[0].mxu0
        %2482 = vmatprep.mubr.bf16.mxu0 0
        %2483 = vmatmul.mubr.bf16.gmra.mrb[0].mxu0 %v2390
        %v2484 = vpop.f32.mrb[0].mxu0
        %v2485 = vadd.f32 0.0, %v2484
        %v2486 = vpop.f32.mrb[0].mxu0
        %v2487 = vpop.f32.mrb[0].mxu0
        %v2488 = vpop.f32.mrb[0].mxu0
        %2489 = vdwg.mxu0
        %v2490 = vadd.f32 %v2365, %v2477
        %v2491 = vadd.f32 %v2366, %v2480
        %v2492 = vadd.f32 %v2367, %v2485
        %s2493 = scalar_lea.vmem [#allocation7], 256
        %v2494 = vld [vmem:[%s2493] sm:$0xf]
        %v2495 = vld [vmem:[%s2493 + $0x4] sm:$0xf]
        %v2496 = vld [vmem:[%s2493 + $0x8] sm:$0xf]
        %v2497 = vld [vmem:[%s2493 + $0xc] sm:$0xf]
        %v2498 = vld [vmem:[%s2493 + $0x10] sm:$0xf]
        %v2499 = vld [vmem:[%s2493 + $0x14] sm:$0xf]
        %v2500 = vld [vmem:[%s2493 + $0x18] sm:$0xf]
        %v2501 = vld [vmem:[%s2493 + $0x1c] sm:$0xf]
        %v2502 = vld [vmem:[%s2493 + $0x20] sm:$0xf]
        %v2503 = vld [vmem:[%s2493 + $0x24] sm:$0xf]
        %v2504 = vld [vmem:[%s2493 + $0x28] sm:$0xf]
        %v2505 = vld [vmem:[%s2493 + $0x2c] sm:$0xf]
        %v2506 = vld [vmem:[%s2493 + $0x30] sm:$0xf]
        %v2507 = vld [vmem:[%s2493 + $0x34] sm:$0xf]
        %v2508 = vld [vmem:[%s2493 + $0x38] sm:$0xf]
        %v2509 = vld [vmem:[%s2493 + $0x3c] sm:$0xf]
        %v2510 = vrot.slane %v2001, 2
        %v2511 = vrot.slane %v2002, 2
        %v2512 = vsel %vm1170, %v2510, %v2511
        %v2531 = vunpack.c.l.b16 %v2494
        %v2532 = vunpack.c.l.b16 %v2495
        %v2533 = vunpack.c.l.b16 %v2496
        %v2534 = vunpack.c.l.b16 %v2497
        %v2535 = vunpack.c.l.b16 %v2498
        %v2536 = vunpack.c.l.b16 %v2499
        %v2537 = vunpack.c.l.b16 %v2500
        %v2538 = vunpack.c.l.b16 %v2501
        %v2539 = vunpack.c.l.b16 %v2502
        %v2540 = vunpack.c.l.b16 %v2503
        %v2541 = vunpack.c.l.b16 %v2504
        %v2542 = vunpack.c.l.b16 %v2505
        %v2543 = vunpack.c.l.b16 %v2506
        %v2544 = vunpack.c.l.b16 %v2507
        %v2545 = vunpack.c.l.b16 %v2508
        %v2546 = vunpack.c.l.b16 %v2509
        %v2547 = vpack.c.b16 %v2532, %v2531
        %v2548 = vpack.c.b16 %v2534, %v2533
        %v2549 = vpack.c.b16 %v2536, %v2535
        %v2550 = vpack.c.b16 %v2538, %v2537
        %v2551 = vpack.c.b16 %v2540, %v2539
        %v2552 = vpack.c.b16 %v2542, %v2541
        %v2553 = vpack.c.b16 %v2544, %v2543
        %v2554 = vpack.c.b16 %v2546, %v2545
        %2563 = vmatprep.subr.bf16.mxu0 0
        %2564 = vmatpush1.bf16.msra.mxu0 %v2547
        %2565 = vmatprep.subr.bf16.mxu0 0
        %2566 = vmatpush1.bf16.msra.mxu0 %v2548
        %2567 = vmatprep.subr.bf16.mxu0 0
        %2568 = vmatpush1.bf16.msra.mxu0 %v2549
        %2569 = vmatprep.subr.bf16.mxu0 0
        %2570 = vmatpush1.bf16.msra.mxu0 %v2550
        %2571 = vmatprep.subr.bf16.mxu0 0
        %2572 = vmatpush1.bf16.msra.mxu0 %v2551
        %2573 = vmatprep.subr.bf16.mxu0 0
        %2574 = vmatpush1.bf16.msra.mxu0 %v2552
        %2575 = vmatprep.subr.bf16.mxu0 0
        %2576 = vmatpush1.bf16.msra.mxu0 %v2553
        %2577 = vmatprep.subr.bf16.mxu0 0
        %2578 = vmatpush1.bf16.msra.mxu0 %v2554
        %2579 = vmatprep.subr.bf16.mxu0 0
        %2580 = vmatpush1.bf16.msra.mxu0 0
        %2581 = vmatprep.subr.bf16.mxu0 0
        %2582 = vmatpush1.bf16.msra.mxu0 0
        %2583 = vmatprep.subr.bf16.mxu0 0
        %2584 = vmatpush1.bf16.msra.mxu0 0
        %2585 = vmatprep.subr.bf16.mxu0 0
        %2586 = vmatpush1.bf16.msra.mxu0 0
        %2587 = vmatprep.subr.bf16.mxu0 0
        %2588 = vmatpush1.bf16.msra.mxu0 0
        %2589 = vmatprep.subr.bf16.mxu0 0
        %2590 = vmatpush1.bf16.msra.mxu0 0
        %2591 = vmatprep.subr.bf16.mxu0 0
        %2592 = vmatpush1.bf16.msra.mxu0 0
        %2593 = vmatprep.subr.bf16.mxu0 0
        %2594 = vmatpush1.bf16.msra.mxu0 0
        %2595 = vmatprep.mubr.bf16.mxu0 0
        %2596 = vmatmul.mubr.bf16.gmra.mrb[0].mxu0 %v2512
        %v2597 = vpop.f32.mrb[0].mxu0
        %v2598 = vadd.f32 0.0, %v2597
        %v2599 = vpop.f32.mrb[0].mxu0
        %v2600 = vpop.f32.mrb[0].mxu0
        %v2601 = vadd.f32 0.0, %v2600
        %v2602 = vpop.f32.mrb[0].mxu0
        %2603 = vmatprep.mubr.bf16.mxu0 0
        %2604 = vmatmul.mubr.bf16.gmra.mrb[0].mxu0 %v2511
        %v2605 = vpop.f32.mrb[0].mxu0
        %v2606 = vadd.f32 0.0, %v2605
        %v2607 = vpop.f32.mrb[0].mxu0
        %v2608 = vpop.f32.mrb[0].mxu0
        %v2609 = vpop.f32.mrb[0].mxu0
        %2610 = vdwg.mxu0
        %v2611 = vadd.f32 %v2490, %v2598
        %v2612 = vadd.f32 %v2491, %v2601
        %v2613 = vadd.f32 %v2492, %v2606
        %v2614 = vld [vmem:[%s8] sm:$0x1]
        %v2616 = vlaneseq
        %v2617 = vshrl.u32 %v2616, 7
        %v2618 = vsub.s32 0, %v2617
        %v2619 = vrot.slane %v2614, %v2618
        %v2621 = vmul.f32 %v2611, %v2619
        %v2622 = vmul.f32 %v2612, %v2619
        %v2623 = vmul.f32 %v2613, %v2619
        %v2624 = vld [vmem:[%s9] sm:$0x1]
        %v2626 = vlaneseq
        %v2627 = vshrl.u32 %v2626, 7
        %v2628 = vsub.s32 0, %v2627
        %v2629 = vrot.slane %v2624, %v2628
        %v2631 = vadd.f32 %v2621, %v2629
        %v2632 = vadd.f32 %v2622, %v2629
        %v2633 = vadd.f32 %v2623, %v2629
        %v2634 = vtanh.pop %v2631
        %v2635 = vtanh.pop %v2632
        %v2636 = vtanh.pop %v2633
        %s2637 = ssub.s32 %s622, 4
        %v2638 = vstv %s2637
        %v2639 = vadd.s32 %v2638, %v1307
        %v2640 = vadd.s32 %v2638, %v1308
        %v2641 = vadd.s32 %v2638, %v1309
        %vm2642 = vcmp.ge.s32.totalorder %v2639, 0
        %vm2643 = vcmp.ge.s32.totalorder %v2640, 0
        %vm2644 = vcmp.ge.s32.totalorder %v2641, 0
        %vm2645 = vcmp.lt.s32.totalorder %v2639, 16
        %vm2646 = vcmp.lt.s32.totalorder %v2640, 16
        %vm2647 = vcmp.lt.s32.totalorder %v2641, 16
        %vm2648 = vmand %vm2642, %vm2645
        %vm2649 = vmand %vm2643, %vm2646
        %vm2650 = vmand %vm2644, %vm2647
        %v2651 = vsel %vm2648, %v2634, 0.0
        %v2652 = vsel %vm2649, %v2635, 0.0
        %v2653 = vsel %vm2650, %v2636, 0.0
        %v2654 = vpack.c.bf16 %v2652, %v2651
        %v2655 = vpack.c.bf16 %v2653, %v2653
        %v2656 = vld [vmem:[#allocation8] sm:$0xf]
        %v2657 = vld [vmem:[#allocation8 + $0x4] sm:$0xf]
        %v2658 = vld [vmem:[#allocation8 + $0x8] sm:$0xf]
        %v2659 = vld [vmem:[#allocation8 + $0xc] sm:$0xf]
        %v2660 = vld [vmem:[#allocation8 + $0x10] sm:$0xf]
        %v2661 = vld [vmem:[#allocation8 + $0x14] sm:$0xf]
        %v2662 = vld [vmem:[#allocation8 + $0x18] sm:$0xf]
        %v2663 = vld [vmem:[#allocation8 + $0x1c] sm:$0xf]
        %v2664 = vld [vmem:[#allocation8 + $0x20] sm:$0xf]
        %v2665 = vld [vmem:[#allocation8 + $0x24] sm:$0xf]
        %v2666 = vld [vmem:[#allocation8 + $0x28] sm:$0xf]
        %v2667 = vld [vmem:[#allocation8 + $0x2c] sm:$0xf]
        %v2668 = vld [vmem:[#allocation8 + $0x30] sm:$0xf]
        %v2669 = vld [vmem:[#allocation8 + $0x34] sm:$0xf]
        %v2670 = vld [vmem:[#allocation8 + $0x38] sm:$0xf]
        %v2671 = vld [vmem:[#allocation8 + $0x3c] sm:$0xf]
        %s2672 = scalar_lea.vmem [#allocation8], 64
        %v2673 = vld [vmem:[%s2672] sm:$0xf]
        %v2674 = vld [vmem:[%s2672 + $0x4] sm:$0xf]
        %v2675 = vld [vmem:[%s2672 + $0x8] sm:$0xf]
        %v2676 = vld [vmem:[%s2672 + $0xc] sm:$0xf]
        %v2677 = vld [vmem:[%s2672 + $0x10] sm:$0xf]
        %v2678 = vld [vmem:[%s2672 + $0x14] sm:$0xf]
        %v2679 = vld [vmem:[%s2672 + $0x18] sm:$0xf]
        %v2680 = vld [vmem:[%s2672 + $0x1c] sm:$0xf]
        %v2681 = vld [vmem:[%s2672 + $0x20] sm:$0xf]
        %v2682 = vld [vmem:[%s2672 + $0x24] sm:$0xf]
        %v2683 = vld [vmem:[%s2672 + $0x28] sm:$0xf]
        %v2684 = vld [vmem:[%s2672 + $0x2c] sm:$0xf]
        %v2685 = vld [vmem:[%s2672 + $0x30] sm:$0xf]
        %v2686 = vld [vmem:[%s2672 + $0x34] sm:$0xf]
        %v2687 = vld [vmem:[%s2672 + $0x38] sm:$0xf]
        %v2688 = vld [vmem:[%s2672 + $0x3c] sm:$0xf]
        %v2690 = vshrl.u32 %v2654, 16
        %v2692 = vshll.u32 %v2654, 16
        %v2694 = vrot.slane %v2692, 1
        %v2695 = vor.u32 %v2690, %v2694
        %v2697 = vshll.u32 %v2655, 16
        %v2699 = vrot.slane %v2697, 1
        %v2700 = vsel %vm674, %v2695, %v2699
        %v2701 = vshrl.u32 %v2655, 16
        %v2703 = vor.u32 %v2701, %v2699
        %v2722 = vunpack.c.l.b16 %v2673
        %v2723 = vunpack.c.l.b16 %v2674
        %v2724 = vunpack.c.l.b16 %v2675
        %v2725 = vunpack.c.l.b16 %v2676
        %v2726 = vunpack.c.l.b16 %v2677
        %v2727 = vunpack.c.l.b16 %v2678
        %v2728 = vunpack.c.l.b16 %v2679
        %v2729 = vunpack.c.l.b16 %v2680
        %v2730 = vunpack.c.l.b16 %v2681
        %v2731 = vunpack.c.l.b16 %v2682
        %v2732 = vunpack.c.l.b16 %v2683
        %v2733 = vunpack.c.l.b16 %v2684
        %v2734 = vunpack.c.l.b16 %v2685
        %v2735 = vunpack.c.l.b16 %v2686
        %v2736 = vunpack.c.l.b16 %v2687
        %v2737 = vunpack.c.l.b16 %v2688
        %v2738 = vpack.c.b16 %v2723, %v2722
        %v2739 = vpack.c.b16 %v2725, %v2724
        %v2740 = vpack.c.b16 %v2727, %v2726
        %v2741 = vpack.c.b16 %v2729, %v2728
        %v2742 = vpack.c.b16 %v2731, %v2730
        %v2743 = vpack.c.b16 %v2733, %v2732
        %v2744 = vpack.c.b16 %v2735, %v2734
        %v2745 = vpack.c.b16 %v2737, %v2736
        %2754 = vmatprep.subr.bf16.mxu0 0
        %2755 = vmatpush1.bf16.msra.mxu0 %v2738
        %2756 = vmatprep.subr.bf16.mxu0 0
        %2757 = vmatpush1.bf16.msra.mxu0 %v2739
        %2758 = vmatprep.subr.bf16.mxu0 0
        %2759 = vmatpush1.bf16.msra.mxu0 %v2740
        %2760 = vmatprep.subr.bf16.mxu0 0
        %2761 = vmatpush1.bf16.msra.mxu0 %v2741
        %2762 = vmatprep.subr.bf16.mxu0 0
        %2763 = vmatpush1.bf16.msra.mxu0 %v2742
        %2764 = vmatprep.subr.bf16.mxu0 0
        %2765 = vmatpush1.bf16.msra.mxu0 %v2743
        %2766 = vmatprep.subr.bf16.mxu0 0
        %2767 = vmatpush1.bf16.msra.mxu0 %v2744
        %2768 = vmatprep.subr.bf16.mxu0 0
        %2769 = vmatpush1.bf16.msra.mxu0 %v2745
        %2770 = vmatprep.subr.bf16.mxu0 0
        %2771 = vmatpush1.bf16.msra.mxu0 0
        %2772 = vmatprep.subr.bf16.mxu0 0
        %2773 = vmatpush1.bf16.msra.mxu0 0
        %2774 = vmatprep.subr.bf16.mxu0 0
        %2775 = vmatpush1.bf16.msra.mxu0 0
        %2776 = vmatprep.subr.bf16.mxu0 0
        %2777 = vmatpush1.bf16.msra.mxu0 0
        %2778 = vmatprep.subr.bf16.mxu0 0
        %2779 = vmatpush1.bf16.msra.mxu0 0
        %2780 = vmatprep.subr.bf16.mxu0 0
        %2781 = vmatpush1.bf16.msra.mxu0 0
        %2782 = vmatprep.subr.bf16.mxu0 0
        %2783 = vmatpush1.bf16.msra.mxu0 0
        %2784 = vmatprep.subr.bf16.mxu0 0
        %2785 = vmatpush1.bf16.msra.mxu0 0
        %2786 = vmatprep.mubr.bf16.mxu0 0
        %2787 = vmatmul.mubr.bf16.gmra.mrb[0].mxu0 %v2700
        %v2788 = vpop.f32.mrb[0].mxu0
        %v2789 = vadd.f32 0.0, %v2788
        %v2790 = vpop.f32.mrb[0].mxu0
        %v2791 = vpop.f32.mrb[0].mxu0
        %v2792 = vadd.f32 0.0, %v2791
        %v2793 = vpop.f32.mrb[0].mxu0
        %2794 = vmatprep.mubr.bf16.mxu0 0
        %2795 = vmatmul.mubr.bf16.gmra.mrb[0].mxu0 %v2703
        %v2796 = vpop.f32.mrb[0].mxu0
        %v2797 = vadd.f32 0.0, %v2796
        %v2798 = vpop.f32.mrb[0].mxu0
        %v2799 = vpop.f32.mrb[0].mxu0
        %v2800 = vpop.f32.mrb[0].mxu0
        %2801 = vdwg.mxu0
        %v2818 = vunpack.c.l.b16 %v2656
        %v2819 = vunpack.c.l.b16 %v2657
        %v2820 = vunpack.c.l.b16 %v2658
        %v2821 = vunpack.c.l.b16 %v2659
        %v2822 = vunpack.c.l.b16 %v2660
        %v2823 = vunpack.c.l.b16 %v2661
        %v2824 = vunpack.c.l.b16 %v2662
        %v2825 = vunpack.c.l.b16 %v2663
        %v2826 = vunpack.c.l.b16 %v2664
        %v2827 = vunpack.c.l.b16 %v2665
        %v2828 = vunpack.c.l.b16 %v2666
        %v2829 = vunpack.c.l.b16 %v2667
        %v2830 = vunpack.c.l.b16 %v2668
        %v2831 = vunpack.c.l.b16 %v2669
        %v2832 = vunpack.c.l.b16 %v2670
        %v2833 = vunpack.c.l.b16 %v2671
        %v2834 = vpack.c.b16 %v2819, %v2818
        %v2835 = vpack.c.b16 %v2821, %v2820
        %v2836 = vpack.c.b16 %v2823, %v2822
        %v2837 = vpack.c.b16 %v2825, %v2824
        %v2838 = vpack.c.b16 %v2827, %v2826
        %v2839 = vpack.c.b16 %v2829, %v2828
        %v2840 = vpack.c.b16 %v2831, %v2830
        %v2841 = vpack.c.b16 %v2833, %v2832
        %2850 = vmatprep.subr.bf16.mxu0 0
        %2851 = vmatpush1.bf16.msra.mxu0 %v2834
        %2852 = vmatprep.subr.bf16.mxu0 0
        %2853 = vmatpush1.bf16.msra.mxu0 %v2835
        %2854 = vmatprep.subr.bf16.mxu0 0
        %2855 = vmatpush1.bf16.msra.mxu0 %v2836
        %2856 = vmatprep.subr.bf16.mxu0 0
        %2857 = vmatpush1.bf16.msra.mxu0 %v2837
        %2858 = vmatprep.subr.bf16.mxu0 0
        %2859 = vmatpush1.bf16.msra.mxu0 %v2838
        %2860 = vmatprep.subr.bf16.mxu0 0
        %2861 = vmatpush1.bf16.msra.mxu0 %v2839
        %2862 = vmatprep.subr.bf16.mxu0 0
        %2863 = vmatpush1.bf16.msra.mxu0 %v2840
        %2864 = vmatprep.subr.bf16.mxu0 0
        %2865 = vmatpush1.bf16.msra.mxu0 %v2841
        %2866 = vmatprep.subr.bf16.mxu0 0
        %2867 = vmatpush1.bf16.msra.mxu0 0
        %2868 = vmatprep.subr.bf16.mxu0 0
        %2869 = vmatpush1.bf16.msra.mxu0 0
        %2870 = vmatprep.subr.bf16.mxu0 0
        %2871 = vmatpush1.bf16.msra.mxu0 0
        %2872 = vmatprep.subr.bf16.mxu0 0
        %2873 = vmatpush1.bf16.msra.mxu0 0
        %2874 = vmatprep.subr.bf16.mxu0 0
        %2875 = vmatpush1.bf16.msra.mxu0 0
        %2876 = vmatprep.subr.bf16.mxu0 0
        %2877 = vmatpush1.bf16.msra.mxu0 0
        %2878 = vmatprep.subr.bf16.mxu0 0
        %2879 = vmatpush1.bf16.msra.mxu0 0
        %2880 = vmatprep.subr.bf16.mxu0 0
        %2881 = vmatpush1.bf16.msra.mxu0 0
        %2882 = vmatprep.mubr.bf16.mxu0 0
        %2883 = vmatmul.mubr.bf16.gmra.mrb[0].mxu0 %v2654
        %v2884 = vpop.f32.mrb[0].mxu0
        %v2885 = vadd.f32 %v2789, %v2884
        %v2886 = vpop.f32.mrb[0].mxu0
        %v2887 = vpop.f32.mrb[0].mxu0
        %v2888 = vadd.f32 %v2792, %v2887
        %v2889 = vpop.f32.mrb[0].mxu0
        %2890 = vmatprep.mubr.bf16.mxu0 0
        %2891 = vmatmul.mubr.bf16.gmra.mrb[0].mxu0 %v2655
        %v2892 = vpop.f32.mrb[0].mxu0
        %v2893 = vadd.f32 %v2797, %v2892
        %v2894 = vpop.f32.mrb[0].mxu0
        %v2895 = vpop.f32.mrb[0].mxu0
        %v2896 = vpop.f32.mrb[0].mxu0
        %2897 = vdwg.mxu0
        %s2898 = scalar_lea.vmem [#allocation8], 128
        %v2899 = vld [vmem:[%s2898] sm:$0xf]
        %v2900 = vld [vmem:[%s2898 + $0x4] sm:$0xf]
        %v2901 = vld [vmem:[%s2898 + $0x8] sm:$0xf]
        %v2902 = vld [vmem:[%s2898 + $0xc] sm:$0xf]
        %v2903 = vld [vmem:[%s2898 + $0x10] sm:$0xf]
        %v2904 = vld [vmem:[%s2898 + $0x14] sm:$0xf]
        %v2905 = vld [vmem:[%s2898 + $0x18] sm:$0xf]
        %v2906 = vld [vmem:[%s2898 + $0x1c] sm:$0xf]
        %v2907 = vld [vmem:[%s2898 + $0x20] sm:$0xf]
        %v2908 = vld [vmem:[%s2898 + $0x24] sm:$0xf]
        %v2909 = vld [vmem:[%s2898 + $0x28] sm:$0xf]
        %v2910 = vld [vmem:[%s2898 + $0x2c] sm:$0xf]
        %v2911 = vld [vmem:[%s2898 + $0x30] sm:$0xf]
        %v2912 = vld [vmem:[%s2898 + $0x34] sm:$0xf]
        %v2913 = vld [vmem:[%s2898 + $0x38] sm:$0xf]
        %v2914 = vld [vmem:[%s2898 + $0x3c] sm:$0xf]
        %v2917 = vrot.slane %v2654, 1
        %v2918 = vrot.slane %v2655, 1
        %v2919 = vsel %vm910, %v2917, %v2918
        %v2938 = vunpack.c.l.b16 %v2899
        %v2939 = vunpack.c.l.b16 %v2900
        %v2940 = vunpack.c.l.b16 %v2901
        %v2941 = vunpack.c.l.b16 %v2902
        %v2942 = vunpack.c.l.b16 %v2903
        %v2943 = vunpack.c.l.b16 %v2904
        %v2944 = vunpack.c.l.b16 %v2905
        %v2945 = vunpack.c.l.b16 %v2906
        %v2946 = vunpack.c.l.b16 %v2907
        %v2947 = vunpack.c.l.b16 %v2908
        %v2948 = vunpack.c.l.b16 %v2909
        %v2949 = vunpack.c.l.b16 %v2910
        %v2950 = vunpack.c.l.b16 %v2911
        %v2951 = vunpack.c.l.b16 %v2912
        %v2952 = vunpack.c.l.b16 %v2913
        %v2953 = vunpack.c.l.b16 %v2914
        %v2954 = vpack.c.b16 %v2939, %v2938
        %v2955 = vpack.c.b16 %v2941, %v2940
        %v2956 = vpack.c.b16 %v2943, %v2942
        %v2957 = vpack.c.b16 %v2945, %v2944
        %v2958 = vpack.c.b16 %v2947, %v2946
        %v2959 = vpack.c.b16 %v2949, %v2948
        %v2960 = vpack.c.b16 %v2951, %v2950
        %v2961 = vpack.c.b16 %v2953, %v2952
        %2970 = vmatprep.subr.bf16.mxu0 0
        %2971 = vmatpush1.bf16.msra.mxu0 %v2954
        %2972 = vmatprep.subr.bf16.mxu0 0
        %2973 = vmatpush1.bf16.msra.mxu0 %v2955
        %2974 = vmatprep.subr.bf16.mxu0 0
        %2975 = vmatpush1.bf16.msra.mxu0 %v2956
        %2976 = vmatprep.subr.bf16.mxu0 0
        %2977 = vmatpush1.bf16.msra.mxu0 %v2957
        %2978 = vmatprep.subr.bf16.mxu0 0
        %2979 = vmatpush1.bf16.msra.mxu0 %v2958
        %2980 = vmatprep.subr.bf16.mxu0 0
        %2981 = vmatpush1.bf16.msra.mxu0 %v2959
        %2982 = vmatprep.subr.bf16.mxu0 0
        %2983 = vmatpush1.bf16.msra.mxu0 %v2960
        %2984 = vmatprep.subr.bf16.mxu0 0
        %2985 = vmatpush1.bf16.msra.mxu0 %v2961
        %2986 = vmatprep.subr.bf16.mxu0 0
        %2987 = vmatpush1.bf16.msra.mxu0 0
        %2988 = vmatprep.subr.bf16.mxu0 0
        %2989 = vmatpush1.bf16.msra.mxu0 0
        %2990 = vmatprep.subr.bf16.mxu0 0
        %2991 = vmatpush1.bf16.msra.mxu0 0
        %2992 = vmatprep.subr.bf16.mxu0 0
        %2993 = vmatpush1.bf16.msra.mxu0 0
        %2994 = vmatprep.subr.bf16.mxu0 0
        %2995 = vmatpush1.bf16.msra.mxu0 0
        %2996 = vmatprep.subr.bf16.mxu0 0
        %2997 = vmatpush1.bf16.msra.mxu0 0
        %2998 = vmatprep.subr.bf16.mxu0 0
        %2999 = vmatpush1.bf16.msra.mxu0 0
        %3000 = vmatprep.subr.bf16.mxu0 0
        %3001 = vmatpush1.bf16.msra.mxu0 0
        %3002 = vmatprep.mubr.bf16.mxu0 0
        %3003 = vmatmul.mubr.bf16.gmra.mrb[0].mxu0 %v2919
        %v3004 = vpop.f32.mrb[0].mxu0
        %v3005 = vadd.f32 0.0, %v3004
        %v3006 = vpop.f32.mrb[0].mxu0
        %v3007 = vpop.f32.mrb[0].mxu0
        %v3008 = vadd.f32 0.0, %v3007
        %v3009 = vpop.f32.mrb[0].mxu0
        %3010 = vmatprep.mubr.bf16.mxu0 0
        %3011 = vmatmul.mubr.bf16.gmra.mrb[0].mxu0 %v2918
        %v3012 = vpop.f32.mrb[0].mxu0
        %v3013 = vadd.f32 0.0, %v3012
        %v3014 = vpop.f32.mrb[0].mxu0
        %v3015 = vpop.f32.mrb[0].mxu0
        %v3016 = vpop.f32.mrb[0].mxu0
        %3017 = vdwg.mxu0
        %v3018 = vadd.f32 %v2885, %v3005
        %v3019 = vadd.f32 %v2888, %v3008
        %v3020 = vadd.f32 %v2893, %v3013
        %s3021 = scalar_lea.vmem [#allocation8], 192
        %v3022 = vld [vmem:[%s3021] sm:$0xf]
        %v3023 = vld [vmem:[%s3021 + $0x4] sm:$0xf]
        %v3024 = vld [vmem:[%s3021 + $0x8] sm:$0xf]
        %v3025 = vld [vmem:[%s3021 + $0xc] sm:$0xf]
        %v3026 = vld [vmem:[%s3021 + $0x10] sm:$0xf]
        %v3027 = vld [vmem:[%s3021 + $0x14] sm:$0xf]
        %v3028 = vld [vmem:[%s3021 + $0x18] sm:$0xf]
        %v3029 = vld [vmem:[%s3021 + $0x1c] sm:$0xf]
        %v3030 = vld [vmem:[%s3021 + $0x20] sm:$0xf]
        %v3031 = vld [vmem:[%s3021 + $0x24] sm:$0xf]
        %v3032 = vld [vmem:[%s3021 + $0x28] sm:$0xf]
        %v3033 = vld [vmem:[%s3021 + $0x2c] sm:$0xf]
        %v3034 = vld [vmem:[%s3021 + $0x30] sm:$0xf]
        %v3035 = vld [vmem:[%s3021 + $0x34] sm:$0xf]
        %v3036 = vld [vmem:[%s3021 + $0x38] sm:$0xf]
        %v3037 = vld [vmem:[%s3021 + $0x3c] sm:$0xf]
        %v3038 = vrot.slane %v2690, 1
        %v3039 = vrot.slane %v2692, 2
        %v3040 = vor.u32 %v3038, %v3039
        %v3041 = vrot.slane %v2701, 1
        %v3042 = vrot.slane %v2697, 2
        %v3043 = vor.u32 %v3041, %v3042
        %v3044 = vsel %vm1036, %v3040, %v3043
        %v3063 = vunpack.c.l.b16 %v3022
        %v3064 = vunpack.c.l.b16 %v3023
        %v3065 = vunpack.c.l.b16 %v3024
        %v3066 = vunpack.c.l.b16 %v3025
        %v3067 = vunpack.c.l.b16 %v3026
        %v3068 = vunpack.c.l.b16 %v3027
        %v3069 = vunpack.c.l.b16 %v3028
        %v3070 = vunpack.c.l.b16 %v3029
        %v3071 = vunpack.c.l.b16 %v3030
        %v3072 = vunpack.c.l.b16 %v3031
        %v3073 = vunpack.c.l.b16 %v3032
        %v3074 = vunpack.c.l.b16 %v3033
        %v3075 = vunpack.c.l.b16 %v3034
        %v3076 = vunpack.c.l.b16 %v3035
        %v3077 = vunpack.c.l.b16 %v3036
        %v3078 = vunpack.c.l.b16 %v3037
        %v3079 = vpack.c.b16 %v3064, %v3063
        %v3080 = vpack.c.b16 %v3066, %v3065
        %v3081 = vpack.c.b16 %v3068, %v3067
        %v3082 = vpack.c.b16 %v3070, %v3069
        %v3083 = vpack.c.b16 %v3072, %v3071
        %v3084 = vpack.c.b16 %v3074, %v3073
        %v3085 = vpack.c.b16 %v3076, %v3075
        %v3086 = vpack.c.b16 %v3078, %v3077
        %3095 = vmatprep.subr.bf16.mxu0 0
        %3096 = vmatpush1.bf16.msra.mxu0 %v3079
        %3097 = vmatprep.subr.bf16.mxu0 0
        %3098 = vmatpush1.bf16.msra.mxu0 %v3080
        %3099 = vmatprep.subr.bf16.mxu0 0
        %3100 = vmatpush1.bf16.msra.mxu0 %v3081
        %3101 = vmatprep.subr.bf16.mxu0 0
        %3102 = vmatpush1.bf16.msra.mxu0 %v3082
        %3103 = vmatprep.subr.bf16.mxu0 0
        %3104 = vmatpush1.bf16.msra.mxu0 %v3083
        %3105 = vmatprep.subr.bf16.mxu0 0
        %3106 = vmatpush1.bf16.msra.mxu0 %v3084
        %3107 = vmatprep.subr.bf16.mxu0 0
        %3108 = vmatpush1.bf16.msra.mxu0 %v3085
        %3109 = vmatprep.subr.bf16.mxu0 0
        %3110 = vmatpush1.bf16.msra.mxu0 %v3086
        %3111 = vmatprep.subr.bf16.mxu0 0
        %3112 = vmatpush1.bf16.msra.mxu0 0
        %3113 = vmatprep.subr.bf16.mxu0 0
        %3114 = vmatpush1.bf16.msra.mxu0 0
        %3115 = vmatprep.subr.bf16.mxu0 0
        %3116 = vmatpush1.bf16.msra.mxu0 0
        %3117 = vmatprep.subr.bf16.mxu0 0
        %3118 = vmatpush1.bf16.msra.mxu0 0
        %3119 = vmatprep.subr.bf16.mxu0 0
        %3120 = vmatpush1.bf16.msra.mxu0 0
        %3121 = vmatprep.subr.bf16.mxu0 0
        %3122 = vmatpush1.bf16.msra.mxu0 0
        %3123 = vmatprep.subr.bf16.mxu0 0
        %3124 = vmatpush1.bf16.msra.mxu0 0
        %3125 = vmatprep.subr.bf16.mxu0 0
        %3126 = vmatpush1.bf16.msra.mxu0 0
        %3127 = vmatprep.mubr.bf16.mxu0 0
        %3128 = vmatmul.mubr.bf16.gmra.mrb[0].mxu0 %v3044
        %v3129 = vpop.f32.mrb[0].mxu0
        %v3130 = vadd.f32 0.0, %v3129
        %v3131 = vpop.f32.mrb[0].mxu0
        %v3132 = vpop.f32.mrb[0].mxu0
        %v3133 = vadd.f32 0.0, %v3132
        %v3134 = vpop.f32.mrb[0].mxu0
        %3135 = vmatprep.mubr.bf16.mxu0 0
        %3136 = vmatmul.mubr.bf16.gmra.mrb[0].mxu0 %v3043
        %v3137 = vpop.f32.mrb[0].mxu0
        %v3138 = vadd.f32 0.0, %v3137
        %v3139 = vpop.f32.mrb[0].mxu0
        %v3140 = vpop.f32.mrb[0].mxu0
        %v3141 = vpop.f32.mrb[0].mxu0
        %3142 = vdwg.mxu0
        %v3143 = vadd.f32 %v3018, %v3130
        %v3144 = vadd.f32 %v3019, %v3133
        %v3145 = vadd.f32 %v3020, %v3138
        %s3146 = scalar_lea.vmem [#allocation8], 256
        %v3147 = vld [vmem:[%s3146] sm:$0xf]
        %v3148 = vld [vmem:[%s3146 + $0x4] sm:$0xf]
        %v3149 = vld [vmem:[%s3146 + $0x8] sm:$0xf]
        %v3150 = vld [vmem:[%s3146 + $0xc] sm:$0xf]
        %v3151 = vld [vmem:[%s3146 + $0x10] sm:$0xf]
        %v3152 = vld [vmem:[%s3146 + $0x14] sm:$0xf]
        %v3153 = vld [vmem:[%s3146 + $0x18] sm:$0xf]
        %v3154 = vld [vmem:[%s3146 + $0x1c] sm:$0xf]
        %v3155 = vld [vmem:[%s3146 + $0x20] sm:$0xf]
        %v3156 = vld [vmem:[%s3146 + $0x24] sm:$0xf]
        %v3157 = vld [vmem:[%s3146 + $0x28] sm:$0xf]
        %v3158 = vld [vmem:[%s3146 + $0x2c] sm:$0xf]
        %v3159 = vld [vmem:[%s3146 + $0x30] sm:$0xf]
        %v3160 = vld [vmem:[%s3146 + $0x34] sm:$0xf]
        %v3161 = vld [vmem:[%s3146 + $0x38] sm:$0xf]
        %v3162 = vld [vmem:[%s3146 + $0x3c] sm:$0xf]
        %v3163 = vrot.slane %v2654, 2
        %v3164 = vrot.slane %v2655, 2
        %v3165 = vsel %vm1170, %v3163, %v3164
        %v3184 = vunpack.c.l.b16 %v3147
        %v3185 = vunpack.c.l.b16 %v3148
        %v3186 = vunpack.c.l.b16 %v3149
        %v3187 = vunpack.c.l.b16 %v3150
        %v3188 = vunpack.c.l.b16 %v3151
        %v3189 = vunpack.c.l.b16 %v3152
        %v3190 = vunpack.c.l.b16 %v3153
        %v3191 = vunpack.c.l.b16 %v3154
        %v3192 = vunpack.c.l.b16 %v3155
        %v3193 = vunpack.c.l.b16 %v3156
        %v3194 = vunpack.c.l.b16 %v3157
        %v3195 = vunpack.c.l.b16 %v3158
        %v3196 = vunpack.c.l.b16 %v3159
        %v3197 = vunpack.c.l.b16 %v3160
        %v3198 = vunpack.c.l.b16 %v3161
        %v3199 = vunpack.c.l.b16 %v3162
        %v3200 = vpack.c.b16 %v3185, %v3184
        %v3201 = vpack.c.b16 %v3187, %v3186
        %v3202 = vpack.c.b16 %v3189, %v3188
        %v3203 = vpack.c.b16 %v3191, %v3190
        %v3204 = vpack.c.b16 %v3193, %v3192
        %v3205 = vpack.c.b16 %v3195, %v3194
        %v3206 = vpack.c.b16 %v3197, %v3196
        %v3207 = vpack.c.b16 %v3199, %v3198
        %3216 = vmatprep.subr.bf16.mxu0 0
        %3217 = vmatpush1.bf16.msra.mxu0 %v3200
        %3218 = vmatprep.subr.bf16.mxu0 0
        %3219 = vmatpush1.bf16.msra.mxu0 %v3201
        %3220 = vmatprep.subr.bf16.mxu0 0
        %3221 = vmatpush1.bf16.msra.mxu0 %v3202
        %3222 = vmatprep.subr.bf16.mxu0 0
        %3223 = vmatpush1.bf16.msra.mxu0 %v3203
        %3224 = vmatprep.subr.bf16.mxu0 0
        %3225 = vmatpush1.bf16.msra.mxu0 %v3204
        %3226 = vmatprep.subr.bf16.mxu0 0
        %3227 = vmatpush1.bf16.msra.mxu0 %v3205
        %3228 = vmatprep.subr.bf16.mxu0 0
        %3229 = vmatpush1.bf16.msra.mxu0 %v3206
        %3230 = vmatprep.subr.bf16.mxu0 0
        %3231 = vmatpush1.bf16.msra.mxu0 %v3207
        %3232 = vmatprep.subr.bf16.mxu0 0
        %3233 = vmatpush1.bf16.msra.mxu0 0
        %3234 = vmatprep.subr.bf16.mxu0 0
        %3235 = vmatpush1.bf16.msra.mxu0 0
        %3236 = vmatprep.subr.bf16.mxu0 0
        %3237 = vmatpush1.bf16.msra.mxu0 0
        %3238 = vmatprep.subr.bf16.mxu0 0
        %3239 = vmatpush1.bf16.msra.mxu0 0
        %3240 = vmatprep.subr.bf16.mxu0 0
        %3241 = vmatpush1.bf16.msra.mxu0 0
        %3242 = vmatprep.subr.bf16.mxu0 0
        %3243 = vmatpush1.bf16.msra.mxu0 0
        %3244 = vmatprep.subr.bf16.mxu0 0
        %3245 = vmatpush1.bf16.msra.mxu0 0
        %3246 = vmatprep.subr.bf16.mxu0 0
        %3247 = vmatpush1.bf16.msra.mxu0 0
        %3248 = vmatprep.mubr.bf16.mxu0 0
        %3249 = vmatmul.mubr.bf16.gmra.mrb[0].mxu0 %v3165
        %v3250 = vpop.f32.mrb[0].mxu0
        %v3251 = vadd.f32 0.0, %v3250
        %v3252 = vpop.f32.mrb[0].mxu0
        %v3253 = vpop.f32.mrb[0].mxu0
        %v3254 = vadd.f32 0.0, %v3253
        %v3255 = vpop.f32.mrb[0].mxu0
        %3256 = vmatprep.mubr.bf16.mxu0 0
        %3257 = vmatmul.mubr.bf16.gmra.mrb[0].mxu0 %v3164
        %v3258 = vpop.f32.mrb[0].mxu0
        %v3259 = vadd.f32 0.0, %v3258
        %v3260 = vpop.f32.mrb[0].mxu0
        %v3261 = vpop.f32.mrb[0].mxu0
        %v3262 = vpop.f32.mrb[0].mxu0
        %3263 = vdwg.mxu0
        %v3264 = vadd.f32 %v3143, %v3251
        %v3265 = vadd.f32 %v3144, %v3254
        %v3266 = vadd.f32 %v3145, %v3259
        %v3267 = vld [vmem:[%s11] sm:$0x1]
        %v3269 = vlaneseq
        %v3270 = vshrl.u32 %v3269, 7
        %v3271 = vsub.s32 0, %v3270
        %v3272 = vrot.slane %v3267, %v3271
        %v3274 = vmul.f32 %v3264, %v3272
        %v3275 = vmul.f32 %v3265, %v3272
        %v3276 = vmul.f32 %v3266, %v3272
        %v3277 = vld [vmem:[%s12] sm:$0x1]
        %v3279 = vlaneseq
        %v3280 = vshrl.u32 %v3279, 7
        %v3281 = vsub.s32 0, %v3280
        %v3282 = vrot.slane %v3277, %v3281
        %v3284 = vadd.f32 %v3274, %v3282
        %v3285 = vadd.f32 %v3275, %v3282
        %v3286 = vadd.f32 %v3276, %v3282
        %v3287 = vtanh.pop %v3284
        %v3288 = vtanh.pop %v3285
        %v3289 = vtanh.pop %v3286
        %s3290 = ssub.s32 %s622, 2
        %v3291 = vstv %s3290
        %v3292 = vadd.s32 %v3291, %v1307
        %v3293 = vadd.s32 %v3291, %v1308
        %v3294 = vadd.s32 %v3291, %v1309
        %vm3295 = vcmp.ge.s32.totalorder %v3292, 0
        %vm3296 = vcmp.ge.s32.totalorder %v3293, 0
        %vm3297 = vcmp.ge.s32.totalorder %v3294, 0
        %vm3298 = vcmp.lt.s32.totalorder %v3292, 16
        %vm3299 = vcmp.lt.s32.totalorder %v3293, 16
        %vm3300 = vcmp.lt.s32.totalorder %v3294, 16
        %vm3301 = vmand %vm3295, %vm3298
        %vm3302 = vmand %vm3296, %vm3299
        %vm3303 = vmand %vm3297, %vm3300
        %v3304 = vsel %vm3301, %v3287, 0.0
        %v3305 = vsel %vm3302, %v3288, 0.0
        %v3306 = vsel %vm3303, %v3289, 0.0
        %v3307 = vpack.c.bf16 %v3305, %v3304
        %v3308 = vpack.c.bf16 %v3306, %v3306
        %v3309 = vld [vmem:[#allocation10] sm:$0xf]
        %v3310 = vld [vmem:[#allocation10 + $0x4] sm:$0xf]
        %v3311 = vld [vmem:[#allocation10 + $0x8] sm:$0xf]
        %v3312 = vld [vmem:[#allocation10 + $0xc] sm:$0xf]
        %v3313 = vld [vmem:[#allocation10 + $0x10] sm:$0xf]
        %v3314 = vld [vmem:[#allocation10 + $0x14] sm:$0xf]
        %v3315 = vld [vmem:[#allocation10 + $0x18] sm:$0xf]
        %v3316 = vld [vmem:[#allocation10 + $0x1c] sm:$0xf]
        %v3317 = vld [vmem:[#allocation10 + $0x20] sm:$0xf]
        %v3318 = vld [vmem:[#allocation10 + $0x24] sm:$0xf]
        %v3319 = vld [vmem:[#allocation10 + $0x28] sm:$0xf]
        %v3320 = vld [vmem:[#allocation10 + $0x2c] sm:$0xf]
        %v3321 = vld [vmem:[#allocation10 + $0x30] sm:$0xf]
        %v3322 = vld [vmem:[#allocation10 + $0x34] sm:$0xf]
        %v3323 = vld [vmem:[#allocation10 + $0x38] sm:$0xf]
        %v3324 = vld [vmem:[#allocation10 + $0x3c] sm:$0xf]
        %s3325 = scalar_lea.vmem [#allocation10], 64
        %v3326 = vld [vmem:[%s3325] sm:$0xf]
        %v3327 = vld [vmem:[%s3325 + $0x4] sm:$0xf]
        %v3328 = vld [vmem:[%s3325 + $0x8] sm:$0xf]
        %v3329 = vld [vmem:[%s3325 + $0xc] sm:$0xf]
        %v3330 = vld [vmem:[%s3325 + $0x10] sm:$0xf]
        %v3331 = vld [vmem:[%s3325 + $0x14] sm:$0xf]
        %v3332 = vld [vmem:[%s3325 + $0x18] sm:$0xf]
        %v3333 = vld [vmem:[%s3325 + $0x1c] sm:$0xf]
        %v3334 = vld [vmem:[%s3325 + $0x20] sm:$0xf]
        %v3335 = vld [vmem:[%s3325 + $0x24] sm:$0xf]
        %v3336 = vld [vmem:[%s3325 + $0x28] sm:$0xf]
        %v3337 = vld [vmem:[%s3325 + $0x2c] sm:$0xf]
        %v3338 = vld [vmem:[%s3325 + $0x30] sm:$0xf]
        %v3339 = vld [vmem:[%s3325 + $0x34] sm:$0xf]
        %v3340 = vld [vmem:[%s3325 + $0x38] sm:$0xf]
        %v3341 = vld [vmem:[%s3325 + $0x3c] sm:$0xf]
        %v3343 = vshrl.u32 %v3307, 16
        %v3345 = vshll.u32 %v3307, 16
        %v3347 = vrot.slane %v3345, 1
        %v3348 = vor.u32 %v3343, %v3347
        %v3350 = vshll.u32 %v3308, 16
        %v3352 = vrot.slane %v3350, 1
        %v3353 = vsel %vm674, %v3348, %v3352
        %v3371 = vunpack.c.l.b16 %v3326
        %v3372 = vunpack.c.l.b16 %v3327
        %v3373 = vunpack.c.l.b16 %v3328
        %v3374 = vunpack.c.l.b16 %v3329
        %v3375 = vunpack.c.l.b16 %v3330
        %v3376 = vunpack.c.l.b16 %v3331
        %v3377 = vunpack.c.l.b16 %v3332
        %v3378 = vunpack.c.l.b16 %v3333
        %v3379 = vunpack.c.l.b16 %v3334
        %v3380 = vunpack.c.l.b16 %v3335
        %v3381 = vunpack.c.l.b16 %v3336
        %v3382 = vunpack.c.l.b16 %v3337
        %v3383 = vunpack.c.l.b16 %v3338
        %v3384 = vunpack.c.l.b16 %v3339
        %v3385 = vunpack.c.l.b16 %v3340
        %v3386 = vunpack.c.l.b16 %v3341
        %v3387 = vpack.c.b16 %v3372, %v3371
        %v3388 = vpack.c.b16 %v3374, %v3373
        %v3389 = vpack.c.b16 %v3376, %v3375
        %v3390 = vpack.c.b16 %v3378, %v3377
        %v3391 = vpack.c.b16 %v3380, %v3379
        %v3392 = vpack.c.b16 %v3382, %v3381
        %v3393 = vpack.c.b16 %v3384, %v3383
        %v3394 = vpack.c.b16 %v3386, %v3385
        %3403 = vmatprep.subr.bf16.mxu0 0
        %3404 = vmatpush1.bf16.msra.mxu0 %v3387
        %3405 = vmatprep.subr.bf16.mxu0 0
        %3406 = vmatpush1.bf16.msra.mxu0 %v3388
        %3407 = vmatprep.subr.bf16.mxu0 0
        %3408 = vmatpush1.bf16.msra.mxu0 %v3389
        %3409 = vmatprep.subr.bf16.mxu0 0
        %3410 = vmatpush1.bf16.msra.mxu0 %v3390
        %3411 = vmatprep.subr.bf16.mxu0 0
        %3412 = vmatpush1.bf16.msra.mxu0 %v3391
        %3413 = vmatprep.subr.bf16.mxu0 0
        %3414 = vmatpush1.bf16.msra.mxu0 %v3392
        %3415 = vmatprep.subr.bf16.mxu0 0
        %3416 = vmatpush1.bf16.msra.mxu0 %v3393
        %3417 = vmatprep.subr.bf16.mxu0 0
        %3418 = vmatpush1.bf16.msra.mxu0 %v3394
        %3419 = vmatprep.subr.bf16.mxu0 0
        %3420 = vmatpush1.bf16.msra.mxu0 0
        %3421 = vmatprep.subr.bf16.mxu0 0
        %3422 = vmatpush1.bf16.msra.mxu0 0
        %3423 = vmatprep.subr.bf16.mxu0 0
        %3424 = vmatpush1.bf16.msra.mxu0 0
        %3425 = vmatprep.subr.bf16.mxu0 0
        %3426 = vmatpush1.bf16.msra.mxu0 0
        %3427 = vmatprep.subr.bf16.mxu0 0
        %3428 = vmatpush1.bf16.msra.mxu0 0
        %3429 = vmatprep.subr.bf16.mxu0 0
        %3430 = vmatpush1.bf16.msra.mxu0 0
        %3431 = vmatprep.subr.bf16.mxu0 0
        %3432 = vmatpush1.bf16.msra.mxu0 0
        %3433 = vmatprep.subr.bf16.mxu0 0
        %3434 = vmatpush1.bf16.msra.mxu0 0
        %3435 = vmatprep.mubr.bf16.mxu0 0
        %3436 = vmatmul.mubr.bf16.gmra.mrb[0].mxu0 %v3353
        %v3437 = vpop.f32.mrb[0].mxu0
        %v3438 = vadd.f32 0.0, %v3437
        %v3439 = vpop.f32.mrb[0].mxu0
        %v3440 = vpop.f32.mrb[0].mxu0
        %v3441 = vadd.f32 0.0, %v3440
        %v3442 = vpop.f32.mrb[0].mxu0
        %3443 = vdwg.mxu0
        %v3460 = vunpack.c.l.b16 %v3309
        %v3461 = vunpack.c.l.b16 %v3310
        %v3462 = vunpack.c.l.b16 %v3311
        %v3463 = vunpack.c.l.b16 %v3312
        %v3464 = vunpack.c.l.b16 %v3313
        %v3465 = vunpack.c.l.b16 %v3314
        %v3466 = vunpack.c.l.b16 %v3315
        %v3467 = vunpack.c.l.b16 %v3316
        %v3468 = vunpack.c.l.b16 %v3317
        %v3469 = vunpack.c.l.b16 %v3318
        %v3470 = vunpack.c.l.b16 %v3319
        %v3471 = vunpack.c.l.b16 %v3320
        %v3472 = vunpack.c.l.b16 %v3321
        %v3473 = vunpack.c.l.b16 %v3322
        %v3474 = vunpack.c.l.b16 %v3323
        %v3475 = vunpack.c.l.b16 %v3324
        %v3476 = vpack.c.b16 %v3461, %v3460
        %v3477 = vpack.c.b16 %v3463, %v3462
        %v3478 = vpack.c.b16 %v3465, %v3464
        %v3479 = vpack.c.b16 %v3467, %v3466
        %v3480 = vpack.c.b16 %v3469, %v3468
        %v3481 = vpack.c.b16 %v3471, %v3470
        %v3482 = vpack.c.b16 %v3473, %v3472
        %v3483 = vpack.c.b16 %v3475, %v3474
        %3492 = vmatprep.subr.bf16.mxu0 0
        %3493 = vmatpush1.bf16.msra.mxu0 %v3476
        %3494 = vmatprep.subr.bf16.mxu0 0
        %3495 = vmatpush1.bf16.msra.mxu0 %v3477
        %3496 = vmatprep.subr.bf16.mxu0 0
        %3497 = vmatpush1.bf16.msra.mxu0 %v3478
        %3498 = vmatprep.subr.bf16.mxu0 0
        %3499 = vmatpush1.bf16.msra.mxu0 %v3479
        %3500 = vmatprep.subr.bf16.mxu0 0
        %3501 = vmatpush1.bf16.msra.mxu0 %v3480
        %3502 = vmatprep.subr.bf16.mxu0 0
        %3503 = vmatpush1.bf16.msra.mxu0 %v3481
        %3504 = vmatprep.subr.bf16.mxu0 0
        %3505 = vmatpush1.bf16.msra.mxu0 %v3482
        %3506 = vmatprep.subr.bf16.mxu0 0
        %3507 = vmatpush1.bf16.msra.mxu0 %v3483
        %3508 = vmatprep.subr.bf16.mxu0 0
        %3509 = vmatpush1.bf16.msra.mxu0 0
        %3510 = vmatprep.subr.bf16.mxu0 0
        %3511 = vmatpush1.bf16.msra.mxu0 0
        %3512 = vmatprep.subr.bf16.mxu0 0
        %3513 = vmatpush1.bf16.msra.mxu0 0
        %3514 = vmatprep.subr.bf16.mxu0 0
        %3515 = vmatpush1.bf16.msra.mxu0 0
        %3516 = vmatprep.subr.bf16.mxu0 0
        %3517 = vmatpush1.bf16.msra.mxu0 0
        %3518 = vmatprep.subr.bf16.mxu0 0
        %3519 = vmatpush1.bf16.msra.mxu0 0
        %3520 = vmatprep.subr.bf16.mxu0 0
        %3521 = vmatpush1.bf16.msra.mxu0 0
        %3522 = vmatprep.subr.bf16.mxu0 0
        %3523 = vmatpush1.bf16.msra.mxu0 0
        %3524 = vmatprep.mubr.bf16.mxu0 0
        %3525 = vmatmul.mubr.bf16.gmra.mrb[0].mxu0 %v3307
        %v3526 = vpop.f32.mrb[0].mxu0
        %v3527 = vadd.f32 %v3438, %v3526
        %v3528 = vpop.f32.mrb[0].mxu0
        %v3529 = vpop.f32.mrb[0].mxu0
        %v3530 = vadd.f32 %v3441, %v3529
        %v3531 = vpop.f32.mrb[0].mxu0
        %3532 = vdwg.mxu0
        %s3533 = scalar_lea.vmem [#allocation10], 128
        %v3534 = vld [vmem:[%s3533] sm:$0xf]
        %v3535 = vld [vmem:[%s3533 + $0x4] sm:$0xf]
        %v3536 = vld [vmem:[%s3533 + $0x8] sm:$0xf]
        %v3537 = vld [vmem:[%s3533 + $0xc] sm:$0xf]
        %v3538 = vld [vmem:[%s3533 + $0x10] sm:$0xf]
        %v3539 = vld [vmem:[%s3533 + $0x14] sm:$0xf]
        %v3540 = vld [vmem:[%s3533 + $0x18] sm:$0xf]
        %v3541 = vld [vmem:[%s3533 + $0x1c] sm:$0xf]
        %v3542 = vld [vmem:[%s3533 + $0x20] sm:$0xf]
        %v3543 = vld [vmem:[%s3533 + $0x24] sm:$0xf]
        %v3544 = vld [vmem:[%s3533 + $0x28] sm:$0xf]
        %v3545 = vld [vmem:[%s3533 + $0x2c] sm:$0xf]
        %v3546 = vld [vmem:[%s3533 + $0x30] sm:$0xf]
        %v3547 = vld [vmem:[%s3533 + $0x34] sm:$0xf]
        %v3548 = vld [vmem:[%s3533 + $0x38] sm:$0xf]
        %v3549 = vld [vmem:[%s3533 + $0x3c] sm:$0xf]
        %v3552 = vrot.slane %v3307, 1
        %v3553 = vrot.slane %v3308, 1
        %v3554 = vsel %vm910, %v3552, %v3553
        %v3572 = vunpack.c.l.b16 %v3534
        %v3573 = vunpack.c.l.b16 %v3535
        %v3574 = vunpack.c.l.b16 %v3536
        %v3575 = vunpack.c.l.b16 %v3537
        %v3576 = vunpack.c.l.b16 %v3538
        %v3577 = vunpack.c.l.b16 %v3539
        %v3578 = vunpack.c.l.b16 %v3540
        %v3579 = vunpack.c.l.b16 %v3541
        %v3580 = vunpack.c.l.b16 %v3542
        %v3581 = vunpack.c.l.b16 %v3543
        %v3582 = vunpack.c.l.b16 %v3544
        %v3583 = vunpack.c.l.b16 %v3545
        %v3584 = vunpack.c.l.b16 %v3546
        %v3585 = vunpack.c.l.b16 %v3547
        %v3586 = vunpack.c.l.b16 %v3548
        %v3587 = vunpack.c.l.b16 %v3549
        %v3588 = vpack.c.b16 %v3573, %v3572
        %v3589 = vpack.c.b16 %v3575, %v3574
        %v3590 = vpack.c.b16 %v3577, %v3576
        %v3591 = vpack.c.b16 %v3579, %v3578
        %v3592 = vpack.c.b16 %v3581, %v3580
        %v3593 = vpack.c.b16 %v3583, %v3582
        %v3594 = vpack.c.b16 %v3585, %v3584
        %v3595 = vpack.c.b16 %v3587, %v3586
        %3604 = vmatprep.subr.bf16.mxu0 0
        %3605 = vmatpush1.bf16.msra.mxu0 %v3588
        %3606 = vmatprep.subr.bf16.mxu0 0
        %3607 = vmatpush1.bf16.msra.mxu0 %v3589
        %3608 = vmatprep.subr.bf16.mxu0 0
        %3609 = vmatpush1.bf16.msra.mxu0 %v3590
        %3610 = vmatprep.subr.bf16.mxu0 0
        %3611 = vmatpush1.bf16.msra.mxu0 %v3591
        %3612 = vmatprep.subr.bf16.mxu0 0
        %3613 = vmatpush1.bf16.msra.mxu0 %v3592
        %3614 = vmatprep.subr.bf16.mxu0 0
        %3615 = vmatpush1.bf16.msra.mxu0 %v3593
        %3616 = vmatprep.subr.bf16.mxu0 0
        %3617 = vmatpush1.bf16.msra.mxu0 %v3594
        %3618 = vmatprep.subr.bf16.mxu0 0
        %3619 = vmatpush1.bf16.msra.mxu0 %v3595
        %3620 = vmatprep.subr.bf16.mxu0 0
        %3621 = vmatpush1.bf16.msra.mxu0 0
        %3622 = vmatprep.subr.bf16.mxu0 0
        %3623 = vmatpush1.bf16.msra.mxu0 0
        %3624 = vmatprep.subr.bf16.mxu0 0
        %3625 = vmatpush1.bf16.msra.mxu0 0
        %3626 = vmatprep.subr.bf16.mxu0 0
        %3627 = vmatpush1.bf16.msra.mxu0 0
        %3628 = vmatprep.subr.bf16.mxu0 0
        %3629 = vmatpush1.bf16.msra.mxu0 0
        %3630 = vmatprep.subr.bf16.mxu0 0
        %3631 = vmatpush1.bf16.msra.mxu0 0
        %3632 = vmatprep.subr.bf16.mxu0 0
        %3633 = vmatpush1.bf16.msra.mxu0 0
        %3634 = vmatprep.subr.bf16.mxu0 0
        %3635 = vmatpush1.bf16.msra.mxu0 0
        %3636 = vmatprep.mubr.bf16.mxu0 0
        %3637 = vmatmul.mubr.bf16.gmra.mrb[0].mxu0 %v3554
        %v3638 = vpop.f32.mrb[0].mxu0
        %v3639 = vadd.f32 0.0, %v3638
        %v3640 = vpop.f32.mrb[0].mxu0
        %v3641 = vpop.f32.mrb[0].mxu0
        %v3642 = vadd.f32 0.0, %v3641
        %v3643 = vpop.f32.mrb[0].mxu0
        %3644 = vdwg.mxu0
        %v3645 = vadd.f32 %v3527, %v3639
        %v3646 = vadd.f32 %v3530, %v3642
        %s3647 = scalar_lea.vmem [#allocation10], 192
        %v3648 = vld [vmem:[%s3647] sm:$0xf]
        %v3649 = vld [vmem:[%s3647 + $0x4] sm:$0xf]
        %v3650 = vld [vmem:[%s3647 + $0x8] sm:$0xf]
        %v3651 = vld [vmem:[%s3647 + $0xc] sm:$0xf]
        %v3652 = vld [vmem:[%s3647 + $0x10] sm:$0xf]
        %v3653 = vld [vmem:[%s3647 + $0x14] sm:$0xf]
        %v3654 = vld [vmem:[%s3647 + $0x18] sm:$0xf]
        %v3655 = vld [vmem:[%s3647 + $0x1c] sm:$0xf]
        %v3656 = vld [vmem:[%s3647 + $0x20] sm:$0xf]
        %v3657 = vld [vmem:[%s3647 + $0x24] sm:$0xf]
        %v3658 = vld [vmem:[%s3647 + $0x28] sm:$0xf]
        %v3659 = vld [vmem:[%s3647 + $0x2c] sm:$0xf]
        %v3660 = vld [vmem:[%s3647 + $0x30] sm:$0xf]
        %v3661 = vld [vmem:[%s3647 + $0x34] sm:$0xf]
        %v3662 = vld [vmem:[%s3647 + $0x38] sm:$0xf]
        %v3663 = vld [vmem:[%s3647 + $0x3c] sm:$0xf]
        %v3664 = vrot.slane %v3343, 1
        %v3665 = vrot.slane %v3345, 2
        %v3666 = vor.u32 %v3664, %v3665
        %v3667 = vshrl.u32 %v3308, 16
        %v3669 = vrot.slane %v3667, 1
        %v3670 = vrot.slane %v3350, 2
        %v3671 = vor.u32 %v3669, %v3670
        %v3672 = vsel %vm1036, %v3666, %v3671
        %v3690 = vunpack.c.l.b16 %v3648
        %v3691 = vunpack.c.l.b16 %v3649
        %v3692 = vunpack.c.l.b16 %v3650
        %v3693 = vunpack.c.l.b16 %v3651
        %v3694 = vunpack.c.l.b16 %v3652
        %v3695 = vunpack.c.l.b16 %v3653
        %v3696 = vunpack.c.l.b16 %v3654
        %v3697 = vunpack.c.l.b16 %v3655
        %v3698 = vunpack.c.l.b16 %v3656
        %v3699 = vunpack.c.l.b16 %v3657
        %v3700 = vunpack.c.l.b16 %v3658
        %v3701 = vunpack.c.l.b16 %v3659
        %v3702 = vunpack.c.l.b16 %v3660
        %v3703 = vunpack.c.l.b16 %v3661
        %v3704 = vunpack.c.l.b16 %v3662
        %v3705 = vunpack.c.l.b16 %v3663
        %v3706 = vpack.c.b16 %v3691, %v3690
        %v3707 = vpack.c.b16 %v3693, %v3692
        %v3708 = vpack.c.b16 %v3695, %v3694
        %v3709 = vpack.c.b16 %v3697, %v3696
        %v3710 = vpack.c.b16 %v3699, %v3698
        %v3711 = vpack.c.b16 %v3701, %v3700
        %v3712 = vpack.c.b16 %v3703, %v3702
        %v3713 = vpack.c.b16 %v3705, %v3704
        %3722 = vmatprep.subr.bf16.mxu0 0
        %3723 = vmatpush1.bf16.msra.mxu0 %v3706
        %3724 = vmatprep.subr.bf16.mxu0 0
        %3725 = vmatpush1.bf16.msra.mxu0 %v3707
        %3726 = vmatprep.subr.bf16.mxu0 0
        %3727 = vmatpush1.bf16.msra.mxu0 %v3708
        %3728 = vmatprep.subr.bf16.mxu0 0
        %3729 = vmatpush1.bf16.msra.mxu0 %v3709
        %3730 = vmatprep.subr.bf16.mxu0 0
        %3731 = vmatpush1.bf16.msra.mxu0 %v3710
        %3732 = vmatprep.subr.bf16.mxu0 0
        %3733 = vmatpush1.bf16.msra.mxu0 %v3711
        %3734 = vmatprep.subr.bf16.mxu0 0
        %3735 = vmatpush1.bf16.msra.mxu0 %v3712
        %3736 = vmatprep.subr.bf16.mxu0 0
        %3737 = vmatpush1.bf16.msra.mxu0 %v3713
        %3738 = vmatprep.subr.bf16.mxu0 0
        %3739 = vmatpush1.bf16.msra.mxu0 0
        %3740 = vmatprep.subr.bf16.mxu0 0
        %3741 = vmatpush1.bf16.msra.mxu0 0
        %3742 = vmatprep.subr.bf16.mxu0 0
        %3743 = vmatpush1.bf16.msra.mxu0 0
        %3744 = vmatprep.subr.bf16.mxu0 0
        %3745 = vmatpush1.bf16.msra.mxu0 0
        %3746 = vmatprep.subr.bf16.mxu0 0
        %3747 = vmatpush1.bf16.msra.mxu0 0
        %3748 = vmatprep.subr.bf16.mxu0 0
        %3749 = vmatpush1.bf16.msra.mxu0 0
        %3750 = vmatprep.subr.bf16.mxu0 0
        %3751 = vmatpush1.bf16.msra.mxu0 0
        %3752 = vmatprep.subr.bf16.mxu0 0
        %3753 = vmatpush1.bf16.msra.mxu0 0
        %3754 = vmatprep.mubr.bf16.mxu0 0
        %3755 = vmatmul.mubr.bf16.gmra.mrb[0].mxu0 %v3672
        %v3756 = vpop.f32.mrb[0].mxu0
        %v3757 = vadd.f32 0.0, %v3756
        %v3758 = vpop.f32.mrb[0].mxu0
        %v3759 = vpop.f32.mrb[0].mxu0
        %v3760 = vadd.f32 0.0, %v3759
        %v3761 = vpop.f32.mrb[0].mxu0
        %3762 = vdwg.mxu0
        %v3763 = vadd.f32 %v3645, %v3757
        %v3764 = vadd.f32 %v3646, %v3760
        %s3765 = scalar_lea.vmem [#allocation10], 256
        %v3766 = vld [vmem:[%s3765] sm:$0xf]
        %v3767 = vld [vmem:[%s3765 + $0x4] sm:$0xf]
        %v3768 = vld [vmem:[%s3765 + $0x8] sm:$0xf]
        %v3769 = vld [vmem:[%s3765 + $0xc] sm:$0xf]
        %v3770 = vld [vmem:[%s3765 + $0x10] sm:$0xf]
        %v3771 = vld [vmem:[%s3765 + $0x14] sm:$0xf]
        %v3772 = vld [vmem:[%s3765 + $0x18] sm:$0xf]
        %v3773 = vld [vmem:[%s3765 + $0x1c] sm:$0xf]
        %v3774 = vld [vmem:[%s3765 + $0x20] sm:$0xf]
        %v3775 = vld [vmem:[%s3765 + $0x24] sm:$0xf]
        %v3776 = vld [vmem:[%s3765 + $0x28] sm:$0xf]
        %v3777 = vld [vmem:[%s3765 + $0x2c] sm:$0xf]
        %v3778 = vld [vmem:[%s3765 + $0x30] sm:$0xf]
        %v3779 = vld [vmem:[%s3765 + $0x34] sm:$0xf]
        %v3780 = vld [vmem:[%s3765 + $0x38] sm:$0xf]
        %v3781 = vld [vmem:[%s3765 + $0x3c] sm:$0xf]
        %v3782 = vrot.slane %v3307, 2
        %v3783 = vrot.slane %v3308, 2
        %v3784 = vsel %vm1170, %v3782, %v3783
        %v3802 = vunpack.c.l.b16 %v3766
        %v3803 = vunpack.c.l.b16 %v3767
        %v3804 = vunpack.c.l.b16 %v3768
        %v3805 = vunpack.c.l.b16 %v3769
        %v3806 = vunpack.c.l.b16 %v3770
        %v3807 = vunpack.c.l.b16 %v3771
        %v3808 = vunpack.c.l.b16 %v3772
        %v3809 = vunpack.c.l.b16 %v3773
        %v3810 = vunpack.c.l.b16 %v3774
        %v3811 = vunpack.c.l.b16 %v3775
        %v3812 = vunpack.c.l.b16 %v3776
        %v3813 = vunpack.c.l.b16 %v3777
        %v3814 = vunpack.c.l.b16 %v3778
        %v3815 = vunpack.c.l.b16 %v3779
        %v3816 = vunpack.c.l.b16 %v3780
        %v3817 = vunpack.c.l.b16 %v3781
        %v3818 = vpack.c.b16 %v3803, %v3802
        %v3819 = vpack.c.b16 %v3805, %v3804
        %v3820 = vpack.c.b16 %v3807, %v3806
        %v3821 = vpack.c.b16 %v3809, %v3808
        %v3822 = vpack.c.b16 %v3811, %v3810
        %v3823 = vpack.c.b16 %v3813, %v3812
        %v3824 = vpack.c.b16 %v3815, %v3814
        %v3825 = vpack.c.b16 %v3817, %v3816
        %3834 = vmatprep.subr.bf16.mxu0 0
        %3835 = vmatpush1.bf16.msra.mxu0 %v3818
        %3836 = vmatprep.subr.bf16.mxu0 0
        %3837 = vmatpush1.bf16.msra.mxu0 %v3819
        %3838 = vmatprep.subr.bf16.mxu0 0
        %3839 = vmatpush1.bf16.msra.mxu0 %v3820
        %3840 = vmatprep.subr.bf16.mxu0 0
        %3841 = vmatpush1.bf16.msra.mxu0 %v3821
        %3842 = vmatprep.subr.bf16.mxu0 0
        %3843 = vmatpush1.bf16.msra.mxu0 %v3822
        %3844 = vmatprep.subr.bf16.mxu0 0
        %3845 = vmatpush1.bf16.msra.mxu0 %v3823
        %3846 = vmatprep.subr.bf16.mxu0 0
        %3847 = vmatpush1.bf16.msra.mxu0 %v3824
        %3848 = vmatprep.subr.bf16.mxu0 0
        %3849 = vmatpush1.bf16.msra.mxu0 %v3825
        %3850 = vmatprep.subr.bf16.mxu0 0
        %3851 = vmatpush1.bf16.msra.mxu0 0
        %3852 = vmatprep.subr.bf16.mxu0 0
        %3853 = vmatpush1.bf16.msra.mxu0 0
        %3854 = vmatprep.subr.bf16.mxu0 0
        %3855 = vmatpush1.bf16.msra.mxu0 0
        %3856 = vmatprep.subr.bf16.mxu0 0
        %3857 = vmatpush1.bf16.msra.mxu0 0
        %3858 = vmatprep.subr.bf16.mxu0 0
        %3859 = vmatpush1.bf16.msra.mxu0 0
        %3860 = vmatprep.subr.bf16.mxu0 0
        %3861 = vmatpush1.bf16.msra.mxu0 0
        %3862 = vmatprep.subr.bf16.mxu0 0
        %3863 = vmatpush1.bf16.msra.mxu0 0
        %3864 = vmatprep.subr.bf16.mxu0 0
        %3865 = vmatpush1.bf16.msra.mxu0 0
        %3866 = vmatprep.mubr.bf16.mxu0 0
        %3867 = vmatmul.mubr.bf16.gmra.mrb[0].mxu0 %v3784
        %v3868 = vpop.f32.mrb[0].mxu0
        %v3869 = vadd.f32 0.0, %v3868
        %v3870 = vpop.f32.mrb[0].mxu0
        %v3871 = vpop.f32.mrb[0].mxu0
        %v3872 = vadd.f32 0.0, %v3871
        %v3873 = vpop.f32.mrb[0].mxu0
        %3874 = vdwg.mxu0
        %v3875 = vadd.f32 %v3763, %v3869
        %v3876 = vadd.f32 %v3764, %v3872
        %v3877 = vld [vmem:[%s14] sm:$0x1]
        %v3879 = vlaneseq
        %v3880 = vshrl.u32 %v3879, 7
        %v3881 = vsub.s32 0, %v3880
        %v3882 = vrot.slane %v3877, %v3881
        %v3884 = vmul.f32 %v3875, %v3882
        %v3885 = vmul.f32 %v3876, %v3882
        %v3886 = vld [vmem:[%s15] sm:$0x1]
        %v3888 = vlaneseq
        %v3889 = vshrl.u32 %v3888, 7
        %v3890 = vsub.s32 0, %v3889
        %v3891 = vrot.slane %v3886, %v3890
        %v3893 = vadd.f32 %v3884, %v3891
        %v3894 = vadd.f32 %v3885, %v3891
        %3895 = vst [vmem:[%s611] sm:$0xff] %v3893
        %3896 = vst [vmem:[%s611 + $0x8] sm:$0xff] %v3894
        %s3897 = sand.u32 %s398, 1
        %s3898 = scalar_lea.sflag [#allocation4], %s3897
        %s3899 = sand.u32 %s398, 1
        %s3900 = smul.addr %s3899, 16
        %s3901 = scalar_lea.vmem [#allocation11], %s3900
        // Predicated region
        $region105: #{tpu_custom_call.1} parent=83 // pred_check
          %p3902 = pneg %p408
        $region106: #{tpu_custom_call.1} parent=83 // pred_check_branch
          %3904 = sbr.rel (%p3902) target = $region108
        $region107: #{tpu_custom_call.1} parent=83 // pred_region
          %s3906 = ssub.s32 256, 256
          %3907 = vsyncadd %s3898, %s3906
          %s3908 = smul.addr %s38, 2
          %s3909 = smul.addr %s37, 2
          %s3910 = sadd.s32 %s3908, %s3909
          %s3911 = smul.addr %s3910, 128
          %s3912 = scalar_lea.hbm %s16, %s3911
          %s3913 = sshll.u32 %s3901, 4
          %s3914 = int_to_ptr.vmem [resolvable:$true] %s3913
          %3919 = dma.vmem_to_hbm [thread:$0]  %s3914, 256, %s3912, %s3898, 128, 128, 8
        $region108: #{tpu_custom_call.1} parent=83 // pred_fallthru
          _
      $region84: #{tpu_custom_call.1} parent=5 // pred_fallthru
        _
      %p3920 = scmp.le.s32.totalorder 2, %s28
      // Predicated region
      $region109: #{tpu_custom_call.1} parent=5 // pred_check
        %p3921 = pneg %p3920
      $region110: #{tpu_custom_call.1} parent=5 // pred_check_branch
        %3923 = sbr.rel (%p3921) target = $region112
      $region111: #{tpu_custom_call.1} parent=5 // pred_region
        %s3924 = ssub.s32 %s28, 2
        // Predicated region
        $region113: #{tpu_custom_call.1} parent=111 // pred_check
          %p3925 = pneg %p414
        $region114: #{tpu_custom_call.1} parent=111 // pred_check_branch
          %3927 = sbr.rel (%p3925) target = $region116
        $region115: #{tpu_custom_call.1} parent=111 // pred_region
          %s3928 = sand.u32 %s399, 1
          %s3929 = scalar_lea.sflag [#allocation4], %s3928
          %s3930 = sand.u32 %s399, 1
          %s3931 = smul.addr %s3930, 16
          %s3932 = scalar_lea.vmem [#allocation11], %s3931
          %3933 = dma.done %s3929, 256
        $region116: #{tpu_custom_call.1} parent=111 // pred_fallthru
          _
      $region112: #{tpu_custom_call.1} parent=5 // pred_fallthru
        _
    $region6: #{tpu_custom_call.1} parent=1 // loop_footer
      %s32 = sadd.s32 1, %s28
    $region7: #{tpu_custom_call.1} parent=1 // loop_footer_branch
      %27 = sbr.rel target = $region3
    $region8: #{tpu_custom_call.1} parent=1 // loop_exit
      _
    %3934 = vsyncpa [#allocation3], 1
    %s3935 = scalar_lea.sflag [#allocation3], 1
    %3936 = vsyncpa %s3935, 1
    %3937 = vsyncpa [#allocation6], 1
    %3938 = vsyncpa [#allocation9], 1
    %3939 = vsyncpa [#allocation4], 1
    %s3940 = scalar_lea.sflag [#allocation4], 1
    %3941 = vsyncpa %s3940, 1

</llo_original>
